<compile_context>
chip_gen: v7x
topology: tpu7x:2x2x1
jax: 0.10.0
libtpu: 0.0.40
codegen_flags: <defaults>
</compile_context>

<pallas_src>
import jax
import jax.numpy as jnp
from jax.experimental import pallas as pl
from jax.experimental.pallas import tpu as pltpu


# ---------------------------------------------------------------------------
# Kernel
# ---------------------------------------------------------------------------
def _make_kernel(act_dtype):
    act_dtype = jnp.dtype(act_dtype)

    def kernel(img_ref, txt_ref,
               wtp, wip,                      # text / image projection   (C, P)
               wma1, wma2,                    # modal_alignment           (P, H), (H, P)
               wv, wo,                        # MHA V slice + out_proj    (P, P), (P, P)
               wds1a, wds1b,                  # dynamic_scalar L1, K-split (P, H) x2
               wf1a, wf1b, wf1c,              # fusion L1, K-split         (P, H) x3
               wf2,                           # fusion L2                  (H, C)
               bias_ref,                      # packed f32 bias slab       (1, total)
               out_ref):
        P = wtp.shape[1]
        H = wma1.shape[1]
        C = wf2.shape[1]

        # Static offsets into the packed bias slab (lane-aligned when P/H/C % 128 == 0).
        sizes = (("tp", P), ("ip", P), ("ma1", H), ("ma2", P), ("v", P),
                 ("o", P), ("ds1", H), ("f1", H), ("f2", C), ("ds2w", H), ("ds2b", 1))
        offs, off = {}, 0
        for name, n in sizes:
            offs[name] = (off, n)
            off += n

        def b(name):
            o, n = offs[name]
            return bias_ref[:, o:o + n]

        def dot(x, w_ref):
            w = w_ref[...]
            if x.dtype != w.dtype:            # v5e path: cast only at the MXU operand
                x = x.astype(w.dtype)
            return jnp.dot(x, w, preferred_element_type=jnp.float32)

        img = img_ref[...]                                    # [TB, C]
        txt = txt_ref[...]                                    # [TB, C]

        # text / image projection + ReLU (f32 accumulate, act_dtype intermediate).
        txt_p = jnp.maximum(dot(txt, wtp) + b("tp"), 0.0).astype(act_dtype)   # [TB, P]
        img_p = jnp.maximum(dot(img, wip) + b("ip"), 0.0).astype(act_dtype)   # [TB, P]

        # modal_alignment: Linear -> ReLU -> (Dropout = id) -> Linear.
        def align(x):
            h = jnp.maximum(dot(x, wma1) + b("ma1"), 0.0).astype(act_dtype)   # [TB, H]
            return dot(h, wma2) + b("ma2")                                    # [TB, P] f32

        a_txt = align(txt_p)
        a_img = align(img_p)

        # MultiheadAttention, q=aligned_image, k=v=aligned_text, seq_len == 1:
        # softmax over a single key == 1, so output = out_proj(in_proj_v(value)). Exact.
        v = (dot(a_txt, wv) + b("v")).astype(act_dtype)                       # [TB, P]
        common32 = dot(v, wo) + b("o")                                        # [TB, P] f32

        img_spec = (a_img - common32).astype(act_dtype)
        txt_spec = (a_txt - common32).astype(act_dtype)
        common = common32.astype(act_dtype)

        # dynamic_scalar(cat([img_spec, txt_spec])): concat folded into split weights.
        h_ds = jnp.maximum(
            dot(img_spec, wds1a) + dot(txt_spec, wds1b) + b("ds1"), 0.0)      # [TB, H] f32
        # N = 1 head on the VPU/XLU (multiply + lane reduce) instead of a 1-col matmul.
        dw = jax.nn.sigmoid(
            jnp.sum(h_ds * b("ds2w"), axis=-1, keepdims=True) + b("ds2b"))    # [TB, 1]

        # fusion_layer(cat([img_spec, txt_spec, common])): three accumulating matmuls.
        h_f = jnp.maximum(
            dot(img_spec, wf1a) + dot(txt_spec, wf1b) + dot(common, wf1c) + b("f1"),
            0.0).astype(act_dtype)                                            # [TB, H]
        out = dot(h_f, wf2) + b("f2")                                         # [TB, C] f32

        # residual mix + F.normalize(dim=-1) (L2, eps = 1e-12) via rsqrt (EUP).
        out = out + dw * txt.astype(jnp.float32) + (1.0 - dw) * img.astype(jnp.float32)
        sumsq = jnp.sum(out * out, axis=-1, keepdims=True)
        inv = jax.lax.rsqrt(jnp.maximum(sumsq, 1e-24))
        out_ref[...] = (out * inv).astype(out_ref.dtype)

    return kernel


# ---------------------------------------------------------------------------
# Parameters / one-time weight prep
# ---------------------------------------------------------------------------
def init_params(key, clip_dim, proj_dim, hidden_dim):
    """Deterministic synthetic params with the same shapes as the torch module."""
    ks = jax.random.split(key, 20)
    n = lambda k, shape: (jax.random.normal(k, shape, jnp.float32) * 0.05)
    return {
        "w_tp": n(ks[0], (proj_dim, clip_dim)), "b_tp": n(ks[1], (proj_dim,)),
        "w_ip": n(ks[2], (proj_dim, clip_dim)), "b_ip": n(ks[3], (proj_dim,)),
        "w_ma1": n(ks[4], (hidden_dim, proj_dim)), "b_ma1": n(ks[5], (hidden_dim,)),
        "w_ma2": n(ks[6], (proj_dim, hidden_dim)), "b_ma2": n(ks[7], (proj_dim,)),
        "in_proj_w": n(ks[8], (3 * proj_dim, proj_dim)),
        "in_proj_b": n(ks[9], (3 * proj_dim,)),
        "w_o": n(ks[10], (proj_dim, proj_dim)), "b_o": n(ks[11], (proj_dim,)),
        "w_ds1": n(ks[12], (hidden_dim, 2 * proj_dim)), "b_ds1": n(ks[13], (hidden_dim,)),
        "w_ds2": n(ks[14], (1, hidden_dim)), "b_ds2": n(ks[15], (1,)),
        "w_f1": n(ks[16], (hidden_dim, 3 * proj_dim)), "b_f1": n(ks[17], (hidden_dim,)),
        "w_f2": n(ks[18], (clip_dim, hidden_dim)), "b_f2": n(ks[19], (clip_dim,)),
    }


def prepare_weights(params, proj_dim, *, weight_dtype=jnp.bfloat16):
    """One-time weight prep (hoisted out of the per-call path).

    Transposes every matrix to [in, out], slices the V part of the MHA in_proj,
    splits the cat-consuming layers along their K dimension (so the kernel never
    materializes the concatenations), casts matrices to `weight_dtype`, and packs
    all bias / row vectors into a single lane-aligned f32 slab.
    Production dims (clip/proj/hidden) should be multiples of 128 for lane-dense
    slabs and full MXU tiles.
    """
    p = params
    P = proj_dim

    def t(w):
        return jnp.asarray(jnp.transpose(w), dtype=weight_dtype)

    w_v = jnp.asarray(jnp.transpose(p["in_proj_w"][2 * P:3 * P]), dtype=weight_dtype)
    b_v = p["in_proj_b"][2 * P:3 * P]

    w_ds1 = t(p["w_ds1"])          # (2P, H)
    w_f1 = t(p["w_f1"])            # (3P, H)

    mats = (
        t(p["w_tp"]), t(p["w_ip"]),
        t(p["w_ma1"]), t(p["w_ma2"]),
        w_v, t(p["w_o"]),
        w_ds1[:P], w_ds1[P:],                       # K-split of dynamic_scalar L1
        w_f1[:P], w_f1[P:2 * P], w_f1[2 * P:],      # K-split of fusion L1
        t(p["w_f2"]),
    )
    bias_slab = jnp.concatenate([
        p["b_tp"], p["b_ip"], p["b_ma1"], p["b_ma2"], b_v, p["b_o"],
        p["b_ds1"], p["b_f1"], p["b_f2"], p["w_ds2"][0], p["b_ds2"],
    ]).astype(jnp.float32).reshape(1, -1)
    return mats + (bias_slab,)


# ---------------------------------------------------------------------------
# Chip-aware defaults
# ---------------------------------------------------------------------------
def _device_kind():
    try:
        return jax.devices()[0].device_kind.lower()
    except Exception:
        return ""


def _is_v5e(kind):
    return ("v5e" in kind) or ("v5 lite" in kind) or ("v5lite" in kind)


def _num_tensorcores(kind):
    # v4 / v5p megacore and v7x drive 2 TensorCores behind one "parallel" grid axis.
    return 2 if any(s in kind for s in ("v4", "v5p", "v7")) else 1


def _vmem_capacity(kind):
    try:
        return int(pltpu.get_tpu_info().vmem_capacity_bytes)
    except Exception:
        return (64 << 20) if "v7" in kind else (128 << 20)


def _round_up(x, m):
    return ((x + m - 1) // m) * m


def _auto_tile(batch, kind):
    # Bigger tiles on the 128-MiB parts (v5e/v6e); smaller on v7x's 64 MiB.
    tb = 256 if "v7" in kind else 512
    cores = _num_tensorcores(kind)
    if cores > 1 and batch > 8:
        # Ensure >= `cores` grid blocks so no TensorCore sits idle.
        tb = min(tb, _round_up(-(-batch // cores), 8))
    return max(8, min(tb, _round_up(batch, 8)))


def _vmem_limit(weights, tb, C, P, H, act_dtype, out_dtype, in_dtype, kind):
    w_bytes = sum(int(w.size) * w.dtype.itemsize for w in weights)      # resident, 1 buffer
    in_bytes = 2 * 2 * tb * C * jnp.dtype(in_dtype).itemsize            # 2 inputs, double-buffered
    out_bytes = 2 * tb * C * jnp.dtype(out_dtype).itemsize
    wide = max(P, H, C)
    act_b = jnp.dtype(act_dtype).itemsize
    scratch = tb * wide * (10 * act_b + 6 * 4)                          # live intermediates (est.)
    req = int((w_bytes + in_bytes + out_bytes + scratch) * 1.4)         # ~40% headroom
    req = max(req, 32 << 20)
    return min(req, int(_vmem_capacity(kind) * 0.85))


# ---------------------------------------------------------------------------
# Forward wrapper
# ---------------------------------------------------------------------------
def combiner_forward(image_features, text_features, prepared, *, tb=None,
                     act_dtype=None, out_dtype=None, vmem_limit_bytes=None):
    B, C = image_features.shape
    weights = prepared
    P = weights[0].shape[1]
    H = weights[2].shape[1]
    kind = _device_kind()

    if tb is None:
        tb = _auto_tile(B, kind)
    tb = max(8, min(tb, _round_up(B, 8)))
    # Ragged last block (B % tb != 0) is handled by Pallas' masked writeback —
    # all math is per-row, so padded rows cannot contaminate valid rows.
    n_blocks = pl.cdiv(B, tb)

    weight_dtype = weights[0].dtype
    if act_dtype is None:
        # bf16 intermediates on v6e/v7x (native bf16 VALU); f32 intermediates on v5e.
        act_dtype = (jnp.bfloat16
                     if (weight_dtype == jnp.bfloat16 and not _is_v5e(kind))
                     else jnp.float32)
    if out_dtype is None:
        out_dtype = image_features.dtype

    batch_spec = pl.BlockSpec((tb, C), lambda i: (i, 0))
    out_spec = pl.BlockSpec((tb, C), lambda i: (i, 0))

    def resident_spec(a):
        # Grid-invariant weights: DMA'd once, single-buffered, resident across the grid.
        return pl.BlockSpec(a.shape, lambda i: (0, 0), pipeline_mode=pl.Buffered(1))

    in_specs = [batch_spec, batch_spec] + [resident_spec(w) for w in weights]

    if vmem_limit_bytes is None:
        vmem_limit_bytes = _vmem_limit(weights, tb, C, P, H, act_dtype, out_dtype,
                                       image_features.dtype, kind)

    return pl.pallas_call(
        _make_kernel(act_dtype),
        out_shape=jax.ShapeDtypeStruct((B, C), out_dtype),
        grid_spec=pltpu.PrefetchScalarGridSpec(
            num_scalar_prefetch=0,
            grid=(n_blocks,),
            in_specs=in_specs,
            out_specs=out_spec,
        ),
        compiler_params=pltpu.CompilerParams(
            dimension_semantics=("parallel",),
            vmem_limit_bytes=vmem_limit_bytes,
        ),
    )(image_features, text_features, *weights)


# ---------------------------------------------------------------------------
# Plain-JAX reference (mirrors the torch forward in eval mode)
# ---------------------------------------------------------------------------
def _reference(image_features, text_features, params, proj_dim):
    p = params
    P = proj_dim
    lin = lambda x, w, b: x @ w.T + b
    txt_p = jax.nn.relu(lin(text_features, p["w_tp"], p["b_tp"]))
    img_p = jax.nn.relu(lin(image_features, p["w_ip"], p["b_ip"]))
    align = lambda x: lin(jax.nn.relu(lin(x, p["w_ma1"], p["b_ma1"])), p["w_ma2"], p["b_ma2"])
    a_txt, a_img = align(txt_p), align(img_p)
    v = lin(a_txt, p["in_proj_w"][2 * P:3 * P], p["in_proj_b"][2 * P:3 * P])
    common = lin(v, p["w_o"], p["b_o"])
    img_s, txt_s = a_img - common, a_txt - common
    ds_in = jnp.concatenate([img_s, txt_s], -1)
    dw = jax.nn.sigmoid(lin(jax.nn.relu(lin(ds_in, p["w_ds1"], p["b_ds1"])), p["w_ds2"], p["b_ds2"]))
    fu_in = jnp.concatenate([img_s, txt_s, common], -1)
    out = lin(jax.nn.relu(lin(fu_in, p["w_f1"], p["b_f1"])), p["w_f2"], p["b_f2"])
    out = out + dw * text_features + (1 - dw) * image_features
    norm = jnp.sqrt(jnp.sum(out * out, -1, keepdims=True))
    return out / jnp.maximum(norm, 1e-12)


if __name__ == "__main__":
    # Lane-dense demo dims (multiples of 128); production CLIP dims should likewise
    # be multiples of 128 for full MXU/vreg utilization.
    CLIP_DIM, PROJ_DIM, HIDDEN_DIM = 128, 128, 256
    B = 256

    key = jax.random.PRNGKey(0)
    k_img, k_txt, k_par = jax.random.split(key, 3)
    image_features = jax.random.normal(k_img, (B, CLIP_DIM), jnp.float32)
    text_features = jax.random.normal(k_txt, (B, CLIP_DIM), jnp.float32)
    params = init_params(k_par, CLIP_DIM, PROJ_DIM, HIDDEN_DIM)

    ref = _reference(image_features, text_features, params, PROJ_DIM)

    # f32-weight / f32-activation path: tight correctness check (2 grid blocks).
    prep_f32 = prepare_weights(params, PROJ_DIM, weight_dtype=jnp.float32)
    out_f32 = jax.block_until_ready(
        combiner_forward(image_features, text_features, prep_f32, tb=128))
    assert out_f32.shape == (B, CLIP_DIM)
    err_f32 = float(jnp.max(jnp.abs(out_f32 - ref)))
    assert jnp.allclose(out_f32, ref, atol=5e-4, rtol=5e-4), err_f32

    # bf16-weight production path (bf16 intermediates on v6e/v7x, f32 on v5e);
    # tile size / VMEM limit auto-selected per chip.
    prep_bf16 = prepare_weights(params, PROJ_DIM, weight_dtype=jnp.bfloat16)
    out_bf16 = jax.block_until_ready(
        combiner_forward(image_features, text_features, prep_bf16))
    err_bf16 = float(jnp.max(jnp.abs(out_bf16 - ref)))
    assert jnp.allclose(out_bf16, ref, atol=3e-2, rtol=3e-2), err_bf16

    print("KERNEL_OK")
</pallas_src>

<mosaic_0001>
module attributes {stable_mosaic.version = 11 : i64} {
  func.func @kernel(%arg0: i32, %arg1: memref<128x128xf32, #tpu.memory_space<vmem>>, %arg2: memref<128x128xf32, #tpu.memory_space<vmem>>, %arg3: memref<128x128xf32, #tpu.memory_space<vmem>>, %arg4: memref<128x128xf32, #tpu.memory_space<vmem>>, %arg5: memref<128x256xf32, #tpu.memory_space<vmem>>, %arg6: memref<256x128xf32, #tpu.memory_space<vmem>>, %arg7: memref<128x128xf32, #tpu.memory_space<vmem>>, %arg8: memref<128x128xf32, #tpu.memory_space<vmem>>, %arg9: memref<128x256xf32, #tpu.memory_space<vmem>>, %arg10: memref<128x256xf32, #tpu.memory_space<vmem>>, %arg11: memref<128x256xf32, #tpu.memory_space<vmem>>, %arg12: memref<128x256xf32, #tpu.memory_space<vmem>>, %arg13: memref<128x256xf32, #tpu.memory_space<vmem>>, %arg14: memref<256x128xf32, #tpu.memory_space<vmem>>, %arg15: memref<1x1793xf32, #tpu.memory_space<vmem>>, %arg16: memref<128x128xf32, #tpu.memory_space<vmem>>) attributes {dimension_semantics = [#tpu.dimension_semantics<parallel>], iteration_bounds = array<i64: 2>, scalar_prefetch = 0 : i64, scratch_operands = 0 : i64, tpu.core_type = #tpu.core_type<tc>, window_params = [{transform_indices = @transform_0, window_bounds = array<i64: 128, 128>}, {transform_indices = @transform_1, window_bounds = array<i64: 128, 128>}, {pipeline_mode = #tpu.pipeline_mode<synchronous>, transform_indices = @transform_2, window_bounds = array<i64: 128, 128>}, {pipeline_mode = #tpu.pipeline_mode<synchronous>, transform_indices = @transform_3, window_bounds = array<i64: 128, 128>}, {pipeline_mode = #tpu.pipeline_mode<synchronous>, transform_indices = @transform_4, window_bounds = array<i64: 128, 256>}, {pipeline_mode = #tpu.pipeline_mode<synchronous>, transform_indices = @transform_5, window_bounds = array<i64: 256, 128>}, {pipeline_mode = #tpu.pipeline_mode<synchronous>, transform_indices = @transform_6, window_bounds = array<i64: 128, 128>}, {pipeline_mode = #tpu.pipeline_mode<synchronous>, transform_indices = @transform_7, window_bounds = array<i64: 128, 128>}, {pipeline_mode = #tpu.pipeline_mode<synchronous>, transform_indices = @transform_8, window_bounds = array<i64: 128, 256>}, {pipeline_mode = #tpu.pipeline_mode<synchronous>, transform_indices = @transform_9, window_bounds = array<i64: 128, 256>}, {pipeline_mode = #tpu.pipeline_mode<synchronous>, transform_indices = @transform_10, window_bounds = array<i64: 128, 256>}, {pipeline_mode = #tpu.pipeline_mode<synchronous>, transform_indices = @transform_11, window_bounds = array<i64: 128, 256>}, {pipeline_mode = #tpu.pipeline_mode<synchronous>, transform_indices = @transform_12, window_bounds = array<i64: 128, 256>}, {pipeline_mode = #tpu.pipeline_mode<synchronous>, transform_indices = @transform_13, window_bounds = array<i64: 256, 128>}, {pipeline_mode = #tpu.pipeline_mode<synchronous>, transform_indices = @transform_14, window_bounds = array<i64: 1, 1793>}, {transform_indices = @transform_15, window_bounds = array<i64: 128, 128>}]} {
    %c0 = arith.constant 0 : index
    %c0_0 = arith.constant 0 : index
    %0 = vector.load %arg1[%c0, %c0_0] : memref<128x128xf32, #tpu.memory_space<vmem>>, vector<128x128xf32>
    %c0_1 = arith.constant 0 : index
    %c0_2 = arith.constant 0 : index
    %1 = vector.load %arg2[%c0_1, %c0_2] : memref<128x128xf32, #tpu.memory_space<vmem>>, vector<128x128xf32>
    %c0_3 = arith.constant 0 : index
    %c0_4 = arith.constant 0 : index
    %2 = vector.load %arg3[%c0_3, %c0_4] : memref<128x128xf32, #tpu.memory_space<vmem>>, vector<128x128xf32>
    %cst = arith.constant dense<0.000000e+00> : vector<128x128xf32>
    %3 = tpu.matmul %1, %2, %cst {dimension_numbers = #tpu.dot_dimension_numbers<[1], [0], [0], [1], [0, 0, 1, 1], [], []>} : vector<128x128xf32>, vector<128x128xf32>, vector<128x128xf32> -> vector<128x128xf32>
    %c0_5 = arith.constant 0 : index
    %c0_6 = arith.constant 0 : index
    %4 = vector.load %arg15[%c0_5, %c0_6] : memref<1x1793xf32, #tpu.memory_space<vmem>>, vector<1x128xf32>
    %5 = vector.broadcast %4 : vector<1x128xf32> to vector<128x128xf32>
    %6 = arith.addf %3, %5 : vector<128x128xf32>
    %cst_7 = arith.constant 0.000000e+00 : f32
    %7 = vector.broadcast %cst_7 : f32 to vector<128x128xf32>
    %8 = arith.maximumf %6, %7 : vector<128x128xf32>
    %c0_8 = arith.constant 0 : index
    %c0_9 = arith.constant 0 : index
    %9 = vector.load %arg4[%c0_8, %c0_9] : memref<128x128xf32, #tpu.memory_space<vmem>>, vector<128x128xf32>
    %cst_10 = arith.constant dense<0.000000e+00> : vector<128x128xf32>
    %10 = tpu.matmul %0, %9, %cst_10 {dimension_numbers = #tpu.dot_dimension_numbers<[1], [0], [0], [1], [0, 0, 1, 1], [], []>} : vector<128x128xf32>, vector<128x128xf32>, vector<128x128xf32> -> vector<128x128xf32>
    %c0_11 = arith.constant 0 : index
    %c128 = arith.constant 128 : index
    %11 = vector.load %arg15[%c0_11, %c128] : memref<1x1793xf32, #tpu.memory_space<vmem>>, vector<1x128xf32>
    %12 = vector.broadcast %11 : vector<1x128xf32> to vector<128x128xf32>
    %13 = arith.addf %10, %12 : vector<128x128xf32>
    %cst_12 = arith.constant 0.000000e+00 : f32
    %14 = vector.broadcast %cst_12 : f32 to vector<128x128xf32>
    %15 = arith.maximumf %13, %14 : vector<128x128xf32>
    %c0_13 = arith.constant 0 : index
    %c0_14 = arith.constant 0 : index
    %16 = vector.load %arg5[%c0_13, %c0_14] : memref<128x256xf32, #tpu.memory_space<vmem>>, vector<128x256xf32>
    %cst_15 = arith.constant dense<0.000000e+00> : vector<128x256xf32>
    %17 = tpu.matmul %8, %16, %cst_15 {dimension_numbers = #tpu.dot_dimension_numbers<[1], [0], [0], [1], [0, 0, 1, 1], [], []>} : vector<128x128xf32>, vector<128x256xf32>, vector<128x256xf32> -> vector<128x256xf32>
    %c0_16 = arith.constant 0 : index
    %c256 = arith.constant 256 : index
    %18 = vector.load %arg15[%c0_16, %c256] : memref<1x1793xf32, #tpu.memory_space<vmem>>, vector<1x256xf32>
    %19 = vector.broadcast %18 : vector<1x256xf32> to vector<128x256xf32>
    %20 = arith.addf %17, %19 : vector<128x256xf32>
    %cst_17 = arith.constant 0.000000e+00 : f32
    %21 = vector.broadcast %cst_17 : f32 to vector<128x256xf32>
    %22 = arith.maximumf %20, %21 : vector<128x256xf32>
    %c0_18 = arith.constant 0 : index
    %c0_19 = arith.constant 0 : index
    %23 = vector.load %arg6[%c0_18, %c0_19] : memref<256x128xf32, #tpu.memory_space<vmem>>, vector<256x128xf32>
    %cst_20 = arith.constant dense<0.000000e+00> : vector<128x128xf32>
    %24 = tpu.matmul %22, %23, %cst_20 {dimension_numbers = #tpu.dot_dimension_numbers<[1], [0], [0], [1], [0, 0, 1, 1], [], []>} : vector<128x256xf32>, vector<256x128xf32>, vector<128x128xf32> -> vector<128x128xf32>
    %c0_21 = arith.constant 0 : index
    %c512 = arith.constant 512 : index
    %25 = vector.load %arg15[%c0_21, %c512] : memref<1x1793xf32, #tpu.memory_space<vmem>>, vector<1x128xf32>
    %26 = vector.broadcast %25 : vector<1x128xf32> to vector<128x128xf32>
    %27 = arith.addf %24, %26 : vector<128x128xf32>
    %c0_22 = arith.constant 0 : index
    %c0_23 = arith.constant 0 : index
    %28 = vector.load %arg5[%c0_22, %c0_23] : memref<128x256xf32, #tpu.memory_space<vmem>>, vector<128x256xf32>
    %cst_24 = arith.constant dense<0.000000e+00> : vector<128x256xf32>
    %29 = tpu.matmul %15, %28, %cst_24 {dimension_numbers = #tpu.dot_dimension_numbers<[1], [0], [0], [1], [0, 0, 1, 1], [], []>} : vector<128x128xf32>, vector<128x256xf32>, vector<128x256xf32> -> vector<128x256xf32>
    %c0_25 = arith.constant 0 : index
    %c256_26 = arith.constant 256 : index
    %30 = vector.load %arg15[%c0_25, %c256_26] : memref<1x1793xf32, #tpu.memory_space<vmem>>, vector<1x256xf32>
    %31 = vector.broadcast %30 : vector<1x256xf32> to vector<128x256xf32>
    %32 = arith.addf %29, %31 : vector<128x256xf32>
    %cst_27 = arith.constant 0.000000e+00 : f32
    %33 = vector.broadcast %cst_27 : f32 to vector<128x256xf32>
    %34 = arith.maximumf %32, %33 : vector<128x256xf32>
    %c0_28 = arith.constant 0 : index
    %c0_29 = arith.constant 0 : index
    %35 = vector.load %arg6[%c0_28, %c0_29] : memref<256x128xf32, #tpu.memory_space<vmem>>, vector<256x128xf32>
    %cst_30 = arith.constant dense<0.000000e+00> : vector<128x128xf32>
    %36 = tpu.matmul %34, %35, %cst_30 {dimension_numbers = #tpu.dot_dimension_numbers<[1], [0], [0], [1], [0, 0, 1, 1], [], []>} : vector<128x256xf32>, vector<256x128xf32>, vector<128x128xf32> -> vector<128x128xf32>
    %c0_31 = arith.constant 0 : index
    %c512_32 = arith.constant 512 : index
    %37 = vector.load %arg15[%c0_31, %c512_32] : memref<1x1793xf32, #tpu.memory_space<vmem>>, vector<1x128xf32>
    %38 = vector.broadcast %37 : vector<1x128xf32> to vector<128x128xf32>
    %39 = arith.addf %36, %38 : vector<128x128xf32>
    %c0_33 = arith.constant 0 : index
    %c0_34 = arith.constant 0 : index
    %40 = vector.load %arg7[%c0_33, %c0_34] : memref<128x128xf32, #tpu.memory_space<vmem>>, vector<128x128xf32>
    %cst_35 = arith.constant dense<0.000000e+00> : vector<128x128xf32>
    %41 = tpu.matmul %27, %40, %cst_35 {dimension_numbers = #tpu.dot_dimension_numbers<[1], [0], [0], [1], [0, 0, 1, 1], [], []>} : vector<128x128xf32>, vector<128x128xf32>, vector<128x128xf32> -> vector<128x128xf32>
    %c0_36 = arith.constant 0 : index
    %c640 = arith.constant 640 : index
    %42 = vector.load %arg15[%c0_36, %c640] : memref<1x1793xf32, #tpu.memory_space<vmem>>, vector<1x128xf32>
    %43 = vector.broadcast %42 : vector<1x128xf32> to vector<128x128xf32>
    %44 = arith.addf %41, %43 : vector<128x128xf32>
    %c0_37 = arith.constant 0 : index
    %c0_38 = arith.constant 0 : index
    %45 = vector.load %arg8[%c0_37, %c0_38] : memref<128x128xf32, #tpu.memory_space<vmem>>, vector<128x128xf32>
    %cst_39 = arith.constant dense<0.000000e+00> : vector<128x128xf32>
    %46 = tpu.matmul %44, %45, %cst_39 {dimension_numbers = #tpu.dot_dimension_numbers<[1], [0], [0], [1], [0, 0, 1, 1], [], []>} : vector<128x128xf32>, vector<128x128xf32>, vector<128x128xf32> -> vector<128x128xf32>
    %c0_40 = arith.constant 0 : index
    %c768 = arith.constant 768 : index
    %47 = vector.load %arg15[%c0_40, %c768] : memref<1x1793xf32, #tpu.memory_space<vmem>>, vector<1x128xf32>
    %48 = vector.broadcast %47 : vector<1x128xf32> to vector<128x128xf32>
    %49 = arith.addf %46, %48 : vector<128x128xf32>
    %50 = arith.subf %39, %49 : vector<128x128xf32>
    %51 = arith.subf %27, %49 : vector<128x128xf32>
    %c0_41 = arith.constant 0 : index
    %c0_42 = arith.constant 0 : index
    %52 = vector.load %arg9[%c0_41, %c0_42] : memref<128x256xf32, #tpu.memory_space<vmem>>, vector<128x256xf32>
    %cst_43 = arith.constant dense<0.000000e+00> : vector<128x256xf32>
    %53 = tpu.matmul %50, %52, %cst_43 {dimension_numbers = #tpu.dot_dimension_numbers<[1], [0], [0], [1], [0, 0, 1, 1], [], []>} : vector<128x128xf32>, vector<128x256xf32>, vector<128x256xf32> -> vector<128x256xf32>
    %c0_44 = arith.constant 0 : index
    %c0_45 = arith.constant 0 : index
    %54 = vector.load %arg10[%c0_44, %c0_45] : memref<128x256xf32, #tpu.memory_space<vmem>>, vector<128x256xf32>
    %cst_46 = arith.constant dense<0.000000e+00> : vector<128x256xf32>
    %55 = tpu.matmul %51, %54, %cst_46 {dimension_numbers = #tpu.dot_dimension_numbers<[1], [0], [0], [1], [0, 0, 1, 1], [], []>} : vector<128x128xf32>, vector<128x256xf32>, vector<128x256xf32> -> vector<128x256xf32>
    %56 = arith.addf %53, %55 : vector<128x256xf32>
    %c0_47 = arith.constant 0 : index
    %c896 = arith.constant 896 : index
    %57 = vector.load %arg15[%c0_47, %c896] : memref<1x1793xf32, #tpu.memory_space<vmem>>, vector<1x256xf32>
    %58 = vector.broadcast %57 : vector<1x256xf32> to vector<128x256xf32>
    %59 = arith.addf %56, %58 : vector<128x256xf32>
    %cst_48 = arith.constant 0.000000e+00 : f32
    %60 = vector.broadcast %cst_48 : f32 to vector<128x256xf32>
    %61 = arith.maximumf %59, %60 : vector<128x256xf32>
    %c0_49 = arith.constant 0 : index
    %c1536 = arith.constant 1536 : index
    %62 = vector.load %arg15[%c0_49, %c1536] : memref<1x1793xf32, #tpu.memory_space<vmem>>, vector<1x256xf32>
    %63 = vector.broadcast %62 : vector<1x256xf32> to vector<128x256xf32>
    %64 = arith.mulf %61, %63 : vector<128x256xf32>
    %cst_50 = arith.constant dense<0.000000e+00> : vector<128xf32>
    %65 = vector.multi_reduction <add>, %64, %cst_50 [1] : vector<128x256xf32> to vector<128xf32>
    %66 = vector.shape_cast %65 : vector<128xf32> to vector<128x1xf32>
    %c0_51 = arith.constant 0 : index
    %c1792 = arith.constant 1792 : index
    %67 = vector.load %arg15[%c0_51, %c1792] : memref<1x1793xf32, #tpu.memory_space<vmem>>, vector<1x1xf32>
    %68 = vector.broadcast %67 : vector<1x1xf32> to vector<128x1xf32>
    %69 = arith.addf %66, %68 : vector<128x1xf32>
    %70 = arith.negf %69 : vector<128x1xf32>
    %71 = math.exp %70 : vector<128x1xf32>
    %cst_52 = arith.constant 1.000000e+00 : f32
    %72 = vector.broadcast %cst_52 : f32 to vector<128x1xf32>
    %73 = arith.addf %72, %71 : vector<128x1xf32>
    %74 = arith.divf %72, %73 : vector<128x1xf32>
    %c0_53 = arith.constant 0 : index
    %c0_54 = arith.constant 0 : index
    %75 = vector.load %arg11[%c0_53, %c0_54] : memref<128x256xf32, #tpu.memory_space<vmem>>, vector<128x256xf32>
    %cst_55 = arith.constant dense<0.000000e+00> : vector<128x256xf32>
    %76 = tpu.matmul %50, %75, %cst_55 {dimension_numbers = #tpu.dot_dimension_numbers<[1], [0], [0], [1], [0, 0, 1, 1], [], []>} : vector<128x128xf32>, vector<128x256xf32>, vector<128x256xf32> -> vector<128x256xf32>
    %c0_56 = arith.constant 0 : index
    %c0_57 = arith.constant 0 : index
    %77 = vector.load %arg12[%c0_56, %c0_57] : memref<128x256xf32, #tpu.memory_space<vmem>>, vector<128x256xf32>
    %cst_58 = arith.constant dense<0.000000e+00> : vector<128x256xf32>
    %78 = tpu.matmul %51, %77, %cst_58 {dimension_numbers = #tpu.dot_dimension_numbers<[1], [0], [0], [1], [0, 0, 1, 1], [], []>} : vector<128x128xf32>, vector<128x256xf32>, vector<128x256xf32> -> vector<128x256xf32>
    %79 = arith.addf %76, %78 : vector<128x256xf32>
    %c0_59 = arith.constant 0 : index
    %c0_60 = arith.constant 0 : index
    %80 = vector.load %arg13[%c0_59, %c0_60] : memref<128x256xf32, #tpu.memory_space<vmem>>, vector<128x256xf32>
    %cst_61 = arith.constant dense<0.000000e+00> : vector<128x256xf32>
    %81 = tpu.matmul %49, %80, %cst_61 {dimension_numbers = #tpu.dot_dimension_numbers<[1], [0], [0], [1], [0, 0, 1, 1], [], []>} : vector<128x128xf32>, vector<128x256xf32>, vector<128x256xf32> -> vector<128x256xf32>
    %82 = arith.addf %79, %81 : vector<128x256xf32>
    %c0_62 = arith.constant 0 : index
    %c1152 = arith.constant 1152 : index
    %83 = vector.load %arg15[%c0_62, %c1152] : memref<1x1793xf32, #tpu.memory_space<vmem>>, vector<1x256xf32>
    %84 = vector.broadcast %83 : vector<1x256xf32> to vector<128x256xf32>
    %85 = arith.addf %82, %84 : vector<128x256xf32>
    %cst_63 = arith.constant 0.000000e+00 : f32
    %86 = vector.broadcast %cst_63 : f32 to vector<128x256xf32>
    %87 = arith.maximumf %85, %86 : vector<128x256xf32>
    %c0_64 = arith.constant 0 : index
    %c0_65 = arith.constant 0 : index
    %88 = vector.load %arg14[%c0_64, %c0_65] : memref<256x128xf32, #tpu.memory_space<vmem>>, vector<256x128xf32>
    %cst_66 = arith.constant dense<0.000000e+00> : vector<128x128xf32>
    %89 = tpu.matmul %87, %88, %cst_66 {dimension_numbers = #tpu.dot_dimension_numbers<[1], [0], [0], [1], [0, 0, 1, 1], [], []>} : vector<128x256xf32>, vector<256x128xf32>, vector<128x128xf32> -> vector<128x128xf32>
    %c0_67 = arith.constant 0 : index
    %c1408 = arith.constant 1408 : index
    %90 = vector.load %arg15[%c0_67, %c1408] : memref<1x1793xf32, #tpu.memory_space<vmem>>, vector<1x128xf32>
    %91 = vector.broadcast %90 : vector<1x128xf32> to vector<128x128xf32>
    %92 = arith.addf %89, %91 : vector<128x128xf32>
    %93 = vector.broadcast %74 : vector<128x1xf32> to vector<128x128xf32>
    %94 = arith.mulf %93, %1 : vector<128x128xf32>
    %95 = arith.addf %92, %94 : vector<128x128xf32>
    %cst_68 = arith.constant 1.000000e+00 : f32
    %96 = vector.broadcast %cst_68 : f32 to vector<128x1xf32>
    %97 = arith.subf %96, %74 : vector<128x1xf32>
    %98 = vector.broadcast %97 : vector<128x1xf32> to vector<128x128xf32>
    %99 = arith.mulf %98, %0 : vector<128x128xf32>
    %100 = arith.addf %95, %99 : vector<128x128xf32>
    %101 = arith.mulf %100, %100 : vector<128x128xf32>
    %cst_69 = arith.constant dense<0.000000e+00> : vector<128xf32>
    %102 = vector.multi_reduction <add>, %101, %cst_69 [1] : vector<128x128xf32> to vector<128xf32>
    %103 = vector.shape_cast %102 : vector<128xf32> to vector<128x1xf32>
    %cst_70 = arith.constant 1.000000e-24 : f32
    %104 = vector.broadcast %cst_70 : f32 to vector<128x1xf32>
    %105 = arith.maximumf %103, %104 : vector<128x1xf32>
    %106 = math.rsqrt %105 : vector<128x1xf32>
    %107 = vector.broadcast %106 : vector<128x1xf32> to vector<128x128xf32>
    %108 = arith.mulf %100, %107 : vector<128x128xf32>
    %c0_71 = arith.constant 0 : index
    %c0_72 = arith.constant 0 : index
    %109 = vector.load %arg16[%c0_71, %c0_72] : memref<128x128xf32, #tpu.memory_space<vmem>>, vector<128x128xf32>
    tpu.vector_store %arg16[%c0_71, %c0_72], %108 {strides = array<i32>} : memref<128x128xf32, #tpu.memory_space<vmem>>, vector<128x128xf32>,
    return
  }
  func.func @transform_0(%arg0: i32) -> (i32, i32) {
    %c0_i32 = arith.constant 0 : i32
    %c0_i32_0 = arith.constant 0 : i32
    return %arg0, %c0_i32 : i32, i32
  }
  func.func @transform_1(%arg0: i32) -> (i32, i32) {
    %c0_i32 = arith.constant 0 : i32
    %c0_i32_0 = arith.constant 0 : i32
    return %arg0, %c0_i32 : i32, i32
  }
  func.func @transform_2(%arg0: i32) -> (i32, i32) {
    %c0_i32 = arith.constant 0 : i32
    %c0_i32_0 = arith.constant 0 : i32
    %c0_i32_1 = arith.constant 0 : i32
    return %c0_i32, %c0_i32_0 : i32, i32
  }
  func.func @transform_3(%arg0: i32) -> (i32, i32) {
    %c0_i32 = arith.constant 0 : i32
    %c0_i32_0 = arith.constant 0 : i32
    %c0_i32_1 = arith.constant 0 : i32
    return %c0_i32, %c0_i32_0 : i32, i32
  }
  func.func @transform_4(%arg0: i32) -> (i32, i32) {
    %c0_i32 = arith.constant 0 : i32
    %c0_i32_0 = arith.constant 0 : i32
    %c0_i32_1 = arith.constant 0 : i32
    return %c0_i32, %c0_i32_0 : i32, i32
  }
  func.func @transform_5(%arg0: i32) -> (i32, i32) {
    %c0_i32 = arith.constant 0 : i32
    %c0_i32_0 = arith.constant 0 : i32
    %c0_i32_1 = arith.constant 0 : i32
    return %c0_i32, %c0_i32_0 : i32, i32
  }
  func.func @transform_6(%arg0: i32) -> (i32, i32) {
    %c0_i32 = arith.constant 0 : i32
    %c0_i32_0 = arith.constant 0 : i32
    %c0_i32_1 = arith.constant 0 : i32
    return %c0_i32, %c0_i32_0 : i32, i32
  }
  func.func @transform_7(%arg0: i32) -> (i32, i32) {
    %c0_i32 = arith.constant 0 : i32
    %c0_i32_0 = arith.constant 0 : i32
    %c0_i32_1 = arith.constant 0 : i32
    return %c0_i32, %c0_i32_0 : i32, i32
  }
  func.func @transform_8(%arg0: i32) -> (i32, i32) {
    %c0_i32 = arith.constant 0 : i32
    %c0_i32_0 = arith.constant 0 : i32
    %c0_i32_1 = arith.constant 0 : i32
    return %c0_i32, %c0_i32_0 : i32, i32
  }
  func.func @transform_9(%arg0: i32) -> (i32, i32) {
    %c0_i32 = arith.constant 0 : i32
    %c0_i32_0 = arith.constant 0 : i32
    %c0_i32_1 = arith.constant 0 : i32
    return %c0_i32, %c0_i32_0 : i32, i32
  }
  func.func @transform_10(%arg0: i32) -> (i32, i32) {
    %c0_i32 = arith.constant 0 : i32
    %c0_i32_0 = arith.constant 0 : i32
    %c0_i32_1 = arith.constant 0 : i32
    return %c0_i32, %c0_i32_0 : i32, i32
  }
  func.func @transform_11(%arg0: i32) -> (i32, i32) {
    %c0_i32 = arith.constant 0 : i32
    %c0_i32_0 = arith.constant 0 : i32
    %c0_i32_1 = arith.constant 0 : i32
    return %c0_i32, %c0_i32_0 : i32, i32
  }
  func.func @transform_12(%arg0: i32) -> (i32, i32) {
    %c0_i32 = arith.constant 0 : i32
    %c0_i32_0 = arith.constant 0 : i32
    %c0_i32_1 = arith.constant 0 : i32
    return %c0_i32, %c0_i32_0 : i32, i32
  }
  func.func @transform_13(%arg0: i32) -> (i32, i32) {
    %c0_i32 = arith.constant 0 : i32
    %c0_i32_0 = arith.constant 0 : i32
    %c0_i32_1 = arith.constant 0 : i32
    return %c0_i32, %c0_i32_0 : i32, i32
  }
  func.func @transform_14(%arg0: i32) -> (i32, i32) {
    %c0_i32 = arith.constant 0 : i32
    %c0_i32_0 = arith.constant 0 : i32
    %c0_i32_1 = arith.constant 0 : i32
    return %c0_i32, %c0_i32_0 : i32, i32
  }
  func.func @transform_15(%arg0: i32) -> (i32, i32) {
    %c0_i32 = arith.constant 0 : i32
    %c0_i32_0 = arith.constant 0 : i32
    return %arg0, %c0_i32 : i32, i32
  }
}

</mosaic_0001>

<llo_original>
// kernel: tpu_custom_call.1
$region0: #{tpu_custom_call.1}
  #allocation0 [shape = 'u32[]', space=smem, size = 0x4, offset = 0x4, fixed_abs, tag = 'smem constant byte address 0x4 - core index']
  #allocation1 [shape = 'u32[144,128]{1,0:T(1,128)}', space=vmem, size = 0x12000, scoped, tag = 'internal scratch']
  %s0 = inlined_call_operand.hbm [shape: f32[256,128], index: 0, kind: input, shape index: {}]
  %s1 = inlined_call_operand.hbm [shape: f32[256,128], index: 1, kind: input, shape index: {}]
  %s2 = inlined_call_operand.hbm [shape: f32[128,128], index: 2, kind: input, shape index: {}]
  %s3 = inlined_call_operand.hbm [shape: f32[128,128], index: 3, kind: input, shape index: {}]
  %s4 = inlined_call_operand.hbm [shape: f32[128,256], index: 4, kind: input, shape index: {}]
  %s5 = inlined_call_operand.hbm [shape: f32[256,128], index: 5, kind: input, shape index: {}]
  %s6 = inlined_call_operand.hbm [shape: f32[128,128], index: 6, kind: input, shape index: {}]
  %s7 = inlined_call_operand.hbm [shape: f32[128,128], index: 7, kind: input, shape index: {}]
  %s8 = inlined_call_operand.hbm [shape: f32[128,256], index: 8, kind: input, shape index: {}]
  %s9 = inlined_call_operand.hbm [shape: f32[128,256], index: 9, kind: input, shape index: {}]
  %s10 = inlined_call_operand.hbm [shape: f32[128,256], index: 10, kind: input, shape index: {}]
  %s11 = inlined_call_operand.hbm [shape: f32[128,256], index: 11, kind: input, shape index: {}]
  %s12 = inlined_call_operand.hbm [shape: f32[128,256], index: 12, kind: input, shape index: {}]
  %s13 = inlined_call_operand.hbm [shape: f32[256,128], index: 13, kind: input, shape index: {}]
  %s14 = inlined_call_operand.vmem [shape: f32[1,1793], index: 14, kind: input, shape index: {}]
  %s15 = inlined_call_operand.hbm [shape: f32[256,128], index: 15, kind: output, shape index: {}]
  %s16 = sld [smem:[#allocation0]]
  $region149: #{tpu_custom_call.1} parent=0
    _
  %s18 = ssub.s32 1, %s16
  %s19 = scalar_select 0, %s18, %s16
  $region1: #{tpu_custom_call.1} parent=0
    #allocation2 [shape = 'u8[131072]{0}', space=vmem, size = 0x20000, scoped, tag = 'input window, operand 0']
    #allocation3 [shape = 's32[2]{0}', space=sflag, size = 0x8, scoped, tag = 'scoped memory for tpu_custom_call.1']
    #allocation4 [shape = 's32[2]{0}', space=sflag, size = 0x8, scoped, tag = 'scoped memory for tpu_custom_call.1']
    #allocation5 [shape = 'u8[131072]{0}', space=vmem, size = 0x20000, scoped, tag = 'input window, operand 1']
    #allocation6 [shape = 's32[2]{0}', space=sflag, size = 0x8, scoped, tag = 'scoped memory for tpu_custom_call.1']
    #allocation7 [shape = 'u8[65536]{0}', space=vmem, size = 0x10000, scoped, tag = 'input window, operand 2, single buffered']
    #allocation8 [shape = 'u8[65536]{0}', space=vmem, size = 0x10000, scoped, tag = 'input window, operand 3, single buffered']
    #allocation9 [shape = 's32[1]{0}', space=sflag, size = 0x4, scoped, tag = 'scoped memory for tpu_custom_call.1']
    #allocation10 [shape = 'u8[131072]{0}', space=vmem, size = 0x20000, scoped, tag = 'input window, operand 4, single buffered']
    #allocation11 [shape = 'u8[131072]{0}', space=vmem, size = 0x20000, scoped, tag = 'input window, operand 5, single buffered']
    #allocation12 [shape = 's32[1]{0}', space=sflag, size = 0x4, scoped, tag = 'scoped memory for tpu_custom_call.1']
    #allocation13 [shape = 'u8[65536]{0}', space=vmem, size = 0x10000, scoped, tag = 'input window, operand 6, single buffered']
    #allocation14 [shape = 'u8[65536]{0}', space=vmem, size = 0x10000, scoped, tag = 'input window, operand 7, single buffered']
    #allocation15 [shape = 's32[1]{0}', space=sflag, size = 0x4, scoped, tag = 'scoped memory for tpu_custom_call.1']
    #allocation16 [shape = 'u8[131072]{0}', space=vmem, size = 0x20000, scoped, tag = 'input window, operand 8, single buffered']
    #allocation17 [shape = 'u8[131072]{0}', space=vmem, size = 0x20000, scoped, tag = 'input window, operand 9, single buffered']
    #allocation18 [shape = 's32[1]{0}', space=sflag, size = 0x4, scoped, tag = 'scoped memory for tpu_custom_call.1']
    #allocation19 [shape = 'u8[131072]{0}', space=vmem, size = 0x20000, scoped, tag = 'input window, operand 10, single buffered']
    #allocation20 [shape = 'u8[131072]{0}', space=vmem, size = 0x20000, scoped, tag = 'input window, operand 11, single buffered']
    #allocation21 [shape = 's32[1]{0}', space=sflag, size = 0x4, scoped, tag = 'scoped memory for tpu_custom_call.1']
    #allocation22 [shape = 'u8[131072]{0}', space=vmem, size = 0x20000, scoped, tag = 'input window, operand 12, single buffered']
    #allocation23 [shape = 'u8[131072]{0}', space=vmem, size = 0x20000, scoped, tag = 'input window, operand 13, single buffered']
    #allocation24 [shape = 's32[1]{0}', space=sflag, size = 0x4, scoped, tag = 'scoped memory for tpu_custom_call.1']
    #allocation25 [shape = 'u8[131072]{0}', space=vmem, size = 0x20000, scoped, tag = 'output window, operand 0']
    %20 = vsyncpa [#allocation3], 0
    %s21 = scalar_lea.sflag [#allocation3], 1
    %22 = vsyncpa %s21, 0
    %23 = vsyncpa [#allocation6], 0
    %s24 = scalar_lea.sflag [#allocation6], 1
    %25 = vsyncpa %s24, 0
    %26 = vsyncpa [#allocation9], 0
    %27 = vsyncpa [#allocation12], 0
    %28 = vsyncpa [#allocation15], 0
    %29 = vsyncpa [#allocation18], 0
    %30 = vsyncpa [#allocation21], 0
    %31 = vsyncpa [#allocation24], 0
    %32 = vsyncpa [#allocation4], 0
    %s33 = scalar_lea.sflag [#allocation4], 1
    %34 = vsyncpa %s33, 0
    loop: start=0, step=1, limit=4
    $region2: #{tpu_custom_call.1} parent=1 // loop_pre_header
      _
    $region3: #{tpu_custom_call.1} parent=1 // loop_header
      %s36 = sphi 0, %s40
      %p37 = scmp.ge.s32.totalorder %s36, 4
      %s46 = sphi 0, %s48
      %s49 = sphi 0, %s46
      %s50 = sphi 0, %s49
      %s66 = sphi 0, %s50
      %s72 = sphi 0, %s74
      %s75 = sphi 0, %s72
      %s76 = sphi 0, %s75
      %s92 = sphi 0, %s76
      %s96 = sphi 0, %s96
      %s98 = sphi 0, %s96
      %s99 = sphi 0, %s98
      %s113 = sphi 0, %s99
      %s117 = sphi 0, %s117
      %s119 = sphi 0, %s117
      %s120 = sphi 0, %s119
      %s134 = sphi 0, %s120
      %s138 = sphi 0, %s138
      %s140 = sphi 0, %s138
      %s141 = sphi 0, %s140
      %s155 = sphi 0, %s141
      %s159 = sphi 0, %s159
      %s161 = sphi 0, %s159
      %s162 = sphi 0, %s161
      %s176 = sphi 0, %s162
      %s180 = sphi 0, %s180
      %s182 = sphi 0, %s180
      %s183 = sphi 0, %s182
      %s197 = sphi 0, %s183
      %s201 = sphi 0, %s201
      %s203 = sphi 0, %s201
      %s204 = sphi 0, %s203
      %s218 = sphi 0, %s204
      %s222 = sphi 0, %s222
      %s224 = sphi 0, %s222
      %s225 = sphi 0, %s224
      %s239 = sphi 0, %s225
      %s243 = sphi 0, %s243
      %s245 = sphi 0, %s243
      %s246 = sphi 0, %s245
      %s260 = sphi 0, %s246
      %s264 = sphi 0, %s264
      %s266 = sphi 0, %s264
      %s267 = sphi 0, %s266
      %s281 = sphi 0, %s267
      %s285 = sphi 0, %s285
      %s287 = sphi 0, %s285
      %s288 = sphi 0, %s287
      %s302 = sphi 0, %s288
      %s306 = sphi 0, %s306
      %s308 = sphi 0, %s306
      %s309 = sphi 0, %s308
      %s323 = sphi 0, %s309
      %s327 = sphi 0, %s327
      %s329 = sphi 0, %s327
      %s330 = sphi 0, %s329
      %s344 = sphi 0, %s330
      %s348 = sphi 0, %s348
      %s350 = sphi 0, %s348
      %s351 = sphi 0, %s350
      %s365 = sphi 0, %s351
      %s371 = sphi 0, %s373
      %s374 = sphi 0, %s371
      %s375 = sphi 0, %s374
      %s391 = sphi 0, %s375
    $region4: #{tpu_custom_call.1} parent=1 // loop_header_branch
      %39 = sbr.rel (%p37) target = $region8
    $region5: #{tpu_custom_call.1} parent=1 // loop_body
      %s41 = ssub.s32 %s36, 1
      %s42 = ssub.s32 %s36, 2
      %s43 = sadd.s32 %s36, 1
      %s44 = ssub.s32 %s36, %s43
      %p45 = scmp.eq.s32.totalorder %s44, 0
      %s47 = sadd.s32 %s46, 1
      %s48 = scalar_select %p45, %s46, %s47
      %p51 = pneg %p45
      %p52 = scmp.eq.s32.totalorder %s36, 1
      %p53 = por %p51, %p52
      %p54 = scmp.ne.s32.totalorder %s46, %s49
      %p55 = scmp.eq.s32.totalorder %s36, 0
      %p56 = por %p54, %p55
      %p57 = scmp.ne.s32.totalorder %s46, %s49
      %p58 = scmp.eq.s32.totalorder %s41, 1
      %p59 = por %p57, %p58
      %p60 = scmp.ne.s32.totalorder %s49, %s50
      %p61 = scmp.eq.s32.totalorder %s41, 0
      %p62 = por %p60, %p61
      %p63 = scmp.ne.s32.totalorder %s49, %s50
      %p64 = scmp.eq.s32.totalorder %s42, 1
      %p65 = por %p63, %p64
      %p67 = scmp.ne.s32.totalorder %s50, %s66
      %p68 = scmp.eq.s32.totalorder %s42, 0
      %p69 = por %p67, %p68
      %s70 = ssub.s32 %s36, %s43
      %p71 = scmp.eq.s32.totalorder %s70, 0
      %s73 = sadd.s32 %s72, 1
      %s74 = scalar_select %p71, %s72, %s73
      %p77 = pneg %p71
      %p78 = scmp.eq.s32.totalorder %s36, 1
      %p79 = por %p77, %p78
      %p80 = scmp.ne.s32.totalorder %s72, %s75
      %p81 = scmp.eq.s32.totalorder %s36, 0
      %p82 = por %p80, %p81
      %p83 = scmp.ne.s32.totalorder %s72, %s75
      %p84 = scmp.eq.s32.totalorder %s41, 1
      %p85 = por %p83, %p84
      %p86 = scmp.ne.s32.totalorder %s75, %s76
      %p87 = scmp.eq.s32.totalorder %s41, 0
      %p88 = por %p86, %p87
      %p89 = scmp.ne.s32.totalorder %s75, %s76
      %p90 = scmp.eq.s32.totalorder %s42, 1
      %p91 = por %p89, %p90
      %p93 = scmp.ne.s32.totalorder %s76, %s92
      %p94 = scmp.eq.s32.totalorder %s42, 0
      %p95 = por %p93, %p94
      %s97 = sadd.s32 %s96, 1
      %p100 = scmp.eq.s32.totalorder %s36, 1
      %p101 = scmp.ne.s32.totalorder %s96, %s98
      %p102 = scmp.eq.s32.totalorder %s36, 0
      %p103 = por %p101, %p102
      %p104 = scmp.ne.s32.totalorder %s96, %s98
      %p105 = scmp.eq.s32.totalorder %s41, 1
      %p106 = por %p104, %p105
      %p107 = scmp.ne.s32.totalorder %s98, %s99
      %p108 = scmp.eq.s32.totalorder %s41, 0
      %p109 = por %p107, %p108
      %p110 = scmp.ne.s32.totalorder %s98, %s99
      %p111 = scmp.eq.s32.totalorder %s42, 1
      %p112 = por %p110, %p111
      %p114 = scmp.ne.s32.totalorder %s99, %s113
      %p115 = scmp.eq.s32.totalorder %s42, 0
      %p116 = por %p114, %p115
      %s118 = sadd.s32 %s117, 1
      %p121 = scmp.eq.s32.totalorder %s36, 1
      %p122 = scmp.ne.s32.totalorder %s117, %s119
      %p123 = scmp.eq.s32.totalorder %s36, 0
      %p124 = por %p122, %p123
      %p125 = scmp.ne.s32.totalorder %s117, %s119
      %p126 = scmp.eq.s32.totalorder %s41, 1
      %p127 = por %p125, %p126
      %p128 = scmp.ne.s32.totalorder %s119, %s120
      %p129 = scmp.eq.s32.totalorder %s41, 0
      %p130 = por %p128, %p129
      %p131 = scmp.ne.s32.totalorder %s119, %s120
      %p132 = scmp.eq.s32.totalorder %s42, 1
      %p133 = por %p131, %p132
      %p135 = scmp.ne.s32.totalorder %s120, %s134
      %p136 = scmp.eq.s32.totalorder %s42, 0
      %p137 = por %p135, %p136
      %s139 = sadd.s32 %s138, 1
      %p142 = scmp.eq.s32.totalorder %s36, 1
      %p143 = scmp.ne.s32.totalorder %s138, %s140
      %p144 = scmp.eq.s32.totalorder %s36, 0
      %p145 = por %p143, %p144
      %p146 = scmp.ne.s32.totalorder %s138, %s140
      %p147 = scmp.eq.s32.totalorder %s41, 1
      %p148 = por %p146, %p147
      %p149 = scmp.ne.s32.totalorder %s140, %s141
      %p150 = scmp.eq.s32.totalorder %s41, 0
      %p151 = por %p149, %p150
      %p152 = scmp.ne.s32.totalorder %s140, %s141
      %p153 = scmp.eq.s32.totalorder %s42, 1
      %p154 = por %p152, %p153
      %p156 = scmp.ne.s32.totalorder %s141, %s155
      %p157 = scmp.eq.s32.totalorder %s42, 0
      %p158 = por %p156, %p157
      %s160 = sadd.s32 %s159, 1
      %p163 = scmp.eq.s32.totalorder %s36, 1
      %p164 = scmp.ne.s32.totalorder %s159, %s161
      %p165 = scmp.eq.s32.totalorder %s36, 0
      %p166 = por %p164, %p165
      %p167 = scmp.ne.s32.totalorder %s159, %s161
      %p168 = scmp.eq.s32.totalorder %s41, 1
      %p169 = por %p167, %p168
      %p170 = scmp.ne.s32.totalorder %s161, %s162
      %p171 = scmp.eq.s32.totalorder %s41, 0
      %p172 = por %p170, %p171
      %p173 = scmp.ne.s32.totalorder %s161, %s162
      %p174 = scmp.eq.s32.totalorder %s42, 1
      %p175 = por %p173, %p174
      %p177 = scmp.ne.s32.totalorder %s162, %s176
      %p178 = scmp.eq.s32.totalorder %s42, 0
      %p179 = por %p177, %p178
      %s181 = sadd.s32 %s180, 1
      %p184 = scmp.eq.s32.totalorder %s36, 1
      %p185 = scmp.ne.s32.totalorder %s180, %s182
      %p186 = scmp.eq.s32.totalorder %s36, 0
      %p187 = por %p185, %p186
      %p188 = scmp.ne.s32.totalorder %s180, %s182
      %p189 = scmp.eq.s32.totalorder %s41, 1
      %p190 = por %p188, %p189
      %p191 = scmp.ne.s32.totalorder %s182, %s183
      %p192 = scmp.eq.s32.totalorder %s41, 0
      %p193 = por %p191, %p192
      %p194 = scmp.ne.s32.totalorder %s182, %s183
      %p195 = scmp.eq.s32.totalorder %s42, 1
      %p196 = por %p194, %p195
      %p198 = scmp.ne.s32.totalorder %s183, %s197
      %p199 = scmp.eq.s32.totalorder %s42, 0
      %p200 = por %p198, %p199
      %s202 = sadd.s32 %s201, 1
      %p205 = scmp.eq.s32.totalorder %s36, 1
      %p206 = scmp.ne.s32.totalorder %s201, %s203
      %p207 = scmp.eq.s32.totalorder %s36, 0
      %p208 = por %p206, %p207
      %p209 = scmp.ne.s32.totalorder %s201, %s203
      %p210 = scmp.eq.s32.totalorder %s41, 1
      %p211 = por %p209, %p210
      %p212 = scmp.ne.s32.totalorder %s203, %s204
      %p213 = scmp.eq.s32.totalorder %s41, 0
      %p214 = por %p212, %p213
      %p215 = scmp.ne.s32.totalorder %s203, %s204
      %p216 = scmp.eq.s32.totalorder %s42, 1
      %p217 = por %p215, %p216
      %p219 = scmp.ne.s32.totalorder %s204, %s218
      %p220 = scmp.eq.s32.totalorder %s42, 0
      %p221 = por %p219, %p220
      %s223 = sadd.s32 %s222, 1
      %p226 = scmp.eq.s32.totalorder %s36, 1
      %p227 = scmp.ne.s32.totalorder %s222, %s224
      %p228 = scmp.eq.s32.totalorder %s36, 0
      %p229 = por %p227, %p228
      %p230 = scmp.ne.s32.totalorder %s222, %s224
      %p231 = scmp.eq.s32.totalorder %s41, 1
      %p232 = por %p230, %p231
      %p233 = scmp.ne.s32.totalorder %s224, %s225
      %p234 = scmp.eq.s32.totalorder %s41, 0
      %p235 = por %p233, %p234
      %p236 = scmp.ne.s32.totalorder %s224, %s225
      %p237 = scmp.eq.s32.totalorder %s42, 1
      %p238 = por %p236, %p237
      %p240 = scmp.ne.s32.totalorder %s225, %s239
      %p241 = scmp.eq.s32.totalorder %s42, 0
      %p242 = por %p240, %p241
      %s244 = sadd.s32 %s243, 1
      %p247 = scmp.eq.s32.totalorder %s36, 1
      %p248 = scmp.ne.s32.totalorder %s243, %s245
      %p249 = scmp.eq.s32.totalorder %s36, 0
      %p250 = por %p248, %p249
      %p251 = scmp.ne.s32.totalorder %s243, %s245
      %p252 = scmp.eq.s32.totalorder %s41, 1
      %p253 = por %p251, %p252
      %p254 = scmp.ne.s32.totalorder %s245, %s246
      %p255 = scmp.eq.s32.totalorder %s41, 0
      %p256 = por %p254, %p255
      %p257 = scmp.ne.s32.totalorder %s245, %s246
      %p258 = scmp.eq.s32.totalorder %s42, 1
      %p259 = por %p257, %p258
      %p261 = scmp.ne.s32.totalorder %s246, %s260
      %p262 = scmp.eq.s32.totalorder %s42, 0
      %p263 = por %p261, %p262
      %s265 = sadd.s32 %s264, 1
      %p268 = scmp.eq.s32.totalorder %s36, 1
      %p269 = scmp.ne.s32.totalorder %s264, %s266
      %p270 = scmp.eq.s32.totalorder %s36, 0
      %p271 = por %p269, %p270
      %p272 = scmp.ne.s32.totalorder %s264, %s266
      %p273 = scmp.eq.s32.totalorder %s41, 1
      %p274 = por %p272, %p273
      %p275 = scmp.ne.s32.totalorder %s266, %s267
      %p276 = scmp.eq.s32.totalorder %s41, 0
      %p277 = por %p275, %p276
      %p278 = scmp.ne.s32.totalorder %s266, %s267
      %p279 = scmp.eq.s32.totalorder %s42, 1
      %p280 = por %p278, %p279
      %p282 = scmp.ne.s32.totalorder %s267, %s281
      %p283 = scmp.eq.s32.totalorder %s42, 0
      %p284 = por %p282, %p283
      %s286 = sadd.s32 %s285, 1
      %p289 = scmp.eq.s32.totalorder %s36, 1
      %p290 = scmp.ne.s32.totalorder %s285, %s287
      %p291 = scmp.eq.s32.totalorder %s36, 0
      %p292 = por %p290, %p291
      %p293 = scmp.ne.s32.totalorder %s285, %s287
      %p294 = scmp.eq.s32.totalorder %s41, 1
      %p295 = por %p293, %p294
      %p296 = scmp.ne.s32.totalorder %s287, %s288
      %p297 = scmp.eq.s32.totalorder %s41, 0
      %p298 = por %p296, %p297
      %p299 = scmp.ne.s32.totalorder %s287, %s288
      %p300 = scmp.eq.s32.totalorder %s42, 1
      %p301 = por %p299, %p300
      %p303 = scmp.ne.s32.totalorder %s288, %s302
      %p304 = scmp.eq.s32.totalorder %s42, 0
      %p305 = por %p303, %p304
      %s307 = sadd.s32 %s306, 1
      %p310 = scmp.eq.s32.totalorder %s36, 1
      %p311 = scmp.ne.s32.totalorder %s306, %s308
      %p312 = scmp.eq.s32.totalorder %s36, 0
      %p313 = por %p311, %p312
      %p314 = scmp.ne.s32.totalorder %s306, %s308
      %p315 = scmp.eq.s32.totalorder %s41, 1
      %p316 = por %p314, %p315
      %p317 = scmp.ne.s32.totalorder %s308, %s309
      %p318 = scmp.eq.s32.totalorder %s41, 0
      %p319 = por %p317, %p318
      %p320 = scmp.ne.s32.totalorder %s308, %s309
      %p321 = scmp.eq.s32.totalorder %s42, 1
      %p322 = por %p320, %p321
      %p324 = scmp.ne.s32.totalorder %s309, %s323
      %p325 = scmp.eq.s32.totalorder %s42, 0
      %p326 = por %p324, %p325
      %s328 = sadd.s32 %s327, 1
      %p331 = scmp.eq.s32.totalorder %s36, 1
      %p332 = scmp.ne.s32.totalorder %s327, %s329
      %p333 = scmp.eq.s32.totalorder %s36, 0
      %p334 = por %p332, %p333
      %p335 = scmp.ne.s32.totalorder %s327, %s329
      %p336 = scmp.eq.s32.totalorder %s41, 1
      %p337 = por %p335, %p336
      %p338 = scmp.ne.s32.totalorder %s329, %s330
      %p339 = scmp.eq.s32.totalorder %s41, 0
      %p340 = por %p338, %p339
      %p341 = scmp.ne.s32.totalorder %s329, %s330
      %p342 = scmp.eq.s32.totalorder %s42, 1
      %p343 = por %p341, %p342
      %p345 = scmp.ne.s32.totalorder %s330, %s344
      %p346 = scmp.eq.s32.totalorder %s42, 0
      %p347 = por %p345, %p346
      %s349 = sadd.s32 %s348, 1
      %p352 = scmp.eq.s32.totalorder %s36, 1
      %p353 = scmp.ne.s32.totalorder %s348, %s350
      %p354 = scmp.eq.s32.totalorder %s36, 0
      %p355 = por %p353, %p354
      %p356 = scmp.ne.s32.totalorder %s348, %s350
      %p357 = scmp.eq.s32.totalorder %s41, 1
      %p358 = por %p356, %p357
      %p359 = scmp.ne.s32.totalorder %s350, %s351
      %p360 = scmp.eq.s32.totalorder %s41, 0
      %p361 = por %p359, %p360
      %p362 = scmp.ne.s32.totalorder %s350, %s351
      %p363 = scmp.eq.s32.totalorder %s42, 1
      %p364 = por %p362, %p363
      %p366 = scmp.ne.s32.totalorder %s351, %s365
      %p367 = scmp.eq.s32.totalorder %s42, 0
      %p368 = por %p366, %p367
      %s369 = ssub.s32 %s36, %s43
      %p370 = scmp.eq.s32.totalorder %s369, 0
      %s372 = sadd.s32 %s371, 1
      %s373 = scalar_select %p370, %s371, %s372
      %p376 = pneg %p370
      %p377 = scmp.eq.s32.totalorder %s36, 1
      %p378 = por %p376, %p377
      %p379 = scmp.ne.s32.totalorder %s371, %s374
      %p380 = scmp.eq.s32.totalorder %s36, 0
      %p381 = por %p379, %p380
      %p382 = scmp.ne.s32.totalorder %s371, %s374
      %p383 = scmp.eq.s32.totalorder %s41, 1
      %p384 = por %p382, %p383
      %p385 = scmp.ne.s32.totalorder %s374, %s375
      %p386 = scmp.eq.s32.totalorder %s41, 0
      %p387 = por %p385, %p386
      %p388 = scmp.ne.s32.totalorder %s374, %s375
      %p389 = scmp.eq.s32.totalorder %s42, 1
      %p390 = por %p388, %p389
      %p392 = scmp.ne.s32.totalorder %s375, %s391
      %p393 = scmp.eq.s32.totalorder %s42, 0
      %p394 = por %p392, %p393
      %p395 = scmp.le.s32.totalorder 1, %s36
      %p396 = scmp.lt.s32.totalorder %s36, 3
      %p397 = pnand %p395, %p396
      %p398 = pneg %p397
      // Predicated region
      $region9: #{tpu_custom_call.1} parent=5 // pred_check
        _
      $region10: #{tpu_custom_call.1} parent=5 // pred_check_branch
        %400 = sbr.rel (%p397) target = $region12
      $region11: #{tpu_custom_call.1} parent=5 // pred_region
        %s401 = ssub.s32 %s36, 1
        // Predicated region
        $region13: #{tpu_custom_call.1} parent=11 // pred_check
          %p402 = pneg %p109
        $region14: #{tpu_custom_call.1} parent=11 // pred_check_branch
          %404 = sbr.rel (%p402) target = $region16
        $region15: #{tpu_custom_call.1} parent=11 // pred_region
          %s406 = ssub.s32 2048, 2048
          %407 = vsyncadd [#allocation6], %s406
          %s408 = sshll.u32 [#allocation7], 4
          %s409 = int_to_ptr.vmem [resolvable:$true] %s408
          %414 = dma.hbm_to_vmem [thread:$0]  %s2, 2048, %s409, [#allocation6], 128, 128, 8
        $region16: #{tpu_custom_call.1} parent=11 // pred_fallthru
          _
        // Predicated region
        $region17: #{tpu_custom_call.1} parent=11 // pred_check
          %p415 = pneg %p130
        $region18: #{tpu_custom_call.1} parent=11 // pred_check_branch
          %417 = sbr.rel (%p415) target = $region20
        $region19: #{tpu_custom_call.1} parent=11 // pred_region
          %s419 = ssub.s32 2048, 2048
          %420 = vsyncadd [#allocation9], %s419
          %s421 = sshll.u32 [#allocation8], 4
          %s422 = int_to_ptr.vmem [resolvable:$true] %s421
          %427 = dma.hbm_to_vmem [thread:$0]  %s3, 2048, %s422, [#allocation9], 128, 128, 8
        $region20: #{tpu_custom_call.1} parent=11 // pred_fallthru
          _
        // Predicated region
        $region21: #{tpu_custom_call.1} parent=11 // pred_check
          %p428 = pneg %p151
        $region22: #{tpu_custom_call.1} parent=11 // pred_check_branch
          %430 = sbr.rel (%p428) target = $region24
        $region23: #{tpu_custom_call.1} parent=11 // pred_region
          %s432 = ssub.s32 4096, 4096
          %433 = vsyncadd [#allocation9], %s432
          %s434 = sshll.u32 [#allocation10], 4
          %s435 = int_to_ptr.vmem [resolvable:$true] %s434
          %440 = dma.hbm_to_vmem [thread:$0]  %s4, 4096, %s435, [#allocation9], 256, 256, 16
        $region24: #{tpu_custom_call.1} parent=11 // pred_fallthru
          _
        // Predicated region
        $region25: #{tpu_custom_call.1} parent=11 // pred_check
          %p441 = pneg %p172
        $region26: #{tpu_custom_call.1} parent=11 // pred_check_branch
          %443 = sbr.rel (%p441) target = $region28
        $region27: #{tpu_custom_call.1} parent=11 // pred_region
          %s445 = ssub.s32 4096, 4096
          %446 = vsyncadd [#allocation12], %s445
          %s447 = sshll.u32 [#allocation11], 4
          %s448 = int_to_ptr.vmem [resolvable:$true] %s447
          %453 = dma.hbm_to_vmem [thread:$0]  %s5, 4096, %s448, [#allocation12], 128, 128, 8
        $region28: #{tpu_custom_call.1} parent=11 // pred_fallthru
          _
        // Predicated region
        $region29: #{tpu_custom_call.1} parent=11 // pred_check
          %p454 = pneg %p193
        $region30: #{tpu_custom_call.1} parent=11 // pred_check_branch
          %456 = sbr.rel (%p454) target = $region32
        $region31: #{tpu_custom_call.1} parent=11 // pred_region
          %s458 = ssub.s32 2048, 2048
          %459 = vsyncadd [#allocation12], %s458
          %s460 = sshll.u32 [#allocation13], 4
          %s461 = int_to_ptr.vmem [resolvable:$true] %s460
          %466 = dma.hbm_to_vmem [thread:$0]  %s6, 2048, %s461, [#allocation12], 128, 128, 8
        $region32: #{tpu_custom_call.1} parent=11 // pred_fallthru
          _
        // Predicated region
        $region33: #{tpu_custom_call.1} parent=11 // pred_check
          %p467 = pneg %p214
        $region34: #{tpu_custom_call.1} parent=11 // pred_check_branch
          %469 = sbr.rel (%p467) target = $region36
        $region35: #{tpu_custom_call.1} parent=11 // pred_region
          %s471 = ssub.s32 2048, 2048
          %472 = vsyncadd [#allocation15], %s471
          %s473 = sshll.u32 [#allocation14], 4
          %s474 = int_to_ptr.vmem [resolvable:$true] %s473
          %479 = dma.hbm_to_vmem [thread:$0]  %s7, 2048, %s474, [#allocation15], 128, 128, 8
        $region36: #{tpu_custom_call.1} parent=11 // pred_fallthru
          _
        // Predicated region
        $region37: #{tpu_custom_call.1} parent=11 // pred_check
          %p480 = pneg %p235
        $region38: #{tpu_custom_call.1} parent=11 // pred_check_branch
          %482 = sbr.rel (%p480) target = $region40
        $region39: #{tpu_custom_call.1} parent=11 // pred_region
          %s484 = ssub.s32 4096, 4096
          %485 = vsyncadd [#allocation15], %s484
          %s486 = sshll.u32 [#allocation16], 4
          %s487 = int_to_ptr.vmem [resolvable:$true] %s486
          %492 = dma.hbm_to_vmem [thread:$0]  %s8, 4096, %s487, [#allocation15], 256, 256, 16
        $region40: #{tpu_custom_call.1} parent=11 // pred_fallthru
          _
        // Predicated region
        $region41: #{tpu_custom_call.1} parent=11 // pred_check
          %p493 = pneg %p256
        $region42: #{tpu_custom_call.1} parent=11 // pred_check_branch
          %495 = sbr.rel (%p493) target = $region44
        $region43: #{tpu_custom_call.1} parent=11 // pred_region
          %s497 = ssub.s32 4096, 4096
          %498 = vsyncadd [#allocation18], %s497
          %s499 = sshll.u32 [#allocation17], 4
          %s500 = int_to_ptr.vmem [resolvable:$true] %s499
          %505 = dma.hbm_to_vmem [thread:$0]  %s9, 4096, %s500, [#allocation18], 256, 256, 16
        $region44: #{tpu_custom_call.1} parent=11 // pred_fallthru
          _
        // Predicated region
        $region45: #{tpu_custom_call.1} parent=11 // pred_check
          %p506 = pneg %p277
        $region46: #{tpu_custom_call.1} parent=11 // pred_check_branch
          %508 = sbr.rel (%p506) target = $region48
        $region47: #{tpu_custom_call.1} parent=11 // pred_region
          %s510 = ssub.s32 4096, 4096
          %511 = vsyncadd [#allocation18], %s510
          %s512 = sshll.u32 [#allocation19], 4
          %s513 = int_to_ptr.vmem [resolvable:$true] %s512
          %518 = dma.hbm_to_vmem [thread:$0]  %s10, 4096, %s513, [#allocation18], 256, 256, 16
        $region48: #{tpu_custom_call.1} parent=11 // pred_fallthru
          _
        // Predicated region
        $region49: #{tpu_custom_call.1} parent=11 // pred_check
          %p519 = pneg %p298
        $region50: #{tpu_custom_call.1} parent=11 // pred_check_branch
          %521 = sbr.rel (%p519) target = $region52
        $region51: #{tpu_custom_call.1} parent=11 // pred_region
          %s523 = ssub.s32 4096, 4096
          %524 = vsyncadd [#allocation21], %s523
          %s525 = sshll.u32 [#allocation20], 4
          %s526 = int_to_ptr.vmem [resolvable:$true] %s525
          %531 = dma.hbm_to_vmem [thread:$0]  %s11, 4096, %s526, [#allocation21], 256, 256, 16
        $region52: #{tpu_custom_call.1} parent=11 // pred_fallthru
          _
        // Predicated region
        $region53: #{tpu_custom_call.1} parent=11 // pred_check
          %p532 = pneg %p319
        $region54: #{tpu_custom_call.1} parent=11 // pred_check_branch
          %534 = sbr.rel (%p532) target = $region56
        $region55: #{tpu_custom_call.1} parent=11 // pred_region
          %s536 = ssub.s32 4096, 4096
          %537 = vsyncadd [#allocation21], %s536
          %s538 = sshll.u32 [#allocation22], 4
          %s539 = int_to_ptr.vmem [resolvable:$true] %s538
          %544 = dma.hbm_to_vmem [thread:$0]  %s12, 4096, %s539, [#allocation21], 256, 256, 16
        $region56: #{tpu_custom_call.1} parent=11 // pred_fallthru
          _
        // Predicated region
        $region57: #{tpu_custom_call.1} parent=11 // pred_check
          %p545 = pneg %p340
        $region58: #{tpu_custom_call.1} parent=11 // pred_check_branch
          %547 = sbr.rel (%p545) target = $region60
        $region59: #{tpu_custom_call.1} parent=11 // pred_region
          %s549 = ssub.s32 4096, 4096
          %550 = vsyncadd [#allocation24], %s549
          %s551 = sshll.u32 [#allocation23], 4
          %s552 = int_to_ptr.vmem [resolvable:$true] %s551
          %557 = dma.hbm_to_vmem [thread:$0]  %s13, 4096, %s552, [#allocation24], 128, 128, 8
        $region60: #{tpu_custom_call.1} parent=11 // pred_fallthru
          _
        // Predicated region
        $region61: #{tpu_custom_call.1} parent=11 // pred_check
          %p558 = pneg %p361
        $region62: #{tpu_custom_call.1} parent=11 // pred_check_branch
          %560 = sbr.rel (%p558) target = $region64
        $region63: #{tpu_custom_call.1} parent=11 // pred_region
          _
        $region64: #{tpu_custom_call.1} parent=11 // pred_fallthru
          _
      $region12: #{tpu_custom_call.1} parent=5 // pred_fallthru
        _
      %p561 = scmp.lt.s32.totalorder %s36, 2
      // Predicated region
      $region65: #{tpu_custom_call.1} parent=5 // pred_check
        %p562 = pneg %p561
      $region66: #{tpu_custom_call.1} parent=5 // pred_check_branch
        %564 = sbr.rel (%p562) target = $region68
      $region67: #{tpu_custom_call.1} parent=5 // pred_region
        // Predicated region
        $region69: #{tpu_custom_call.1} parent=67 // pred_check
          %p565 = pneg %p56
        $region70: #{tpu_custom_call.1} parent=67 // pred_check_branch
          %567 = sbr.rel (%p565) target = $region72
        $region71: #{tpu_custom_call.1} parent=67 // pred_region
          %s568 = sand.u32 %s46, 1
          %s569 = scalar_lea.sflag [#allocation3], %s568
          %s570 = sand.u32 %s46, 1
          %s571 = smul.addr %s570, 128
          %s572 = scalar_lea.vmem [#allocation2], %s571
          %s573 = smul.u32 16, %s36
          %s575 = ssub.s32 2048, 2048
          %576 = vsyncadd %s569, %s575
          %s577 = smul.addr %s573, 128
          %s578 = scalar_lea.hbm %s0, %s577
          %s579 = sshll.u32 %s572, 4
          %s580 = int_to_ptr.vmem [resolvable:$true] %s579
          %585 = dma.hbm_to_vmem [thread:$0]  %s578, 2048, %s580, %s569, 128, 128, 8
        $region72: #{tpu_custom_call.1} parent=67 // pred_fallthru
          _
        // Predicated region
        $region73: #{tpu_custom_call.1} parent=67 // pred_check
          %p586 = pneg %p82
        $region74: #{tpu_custom_call.1} parent=67 // pred_check_branch
          %588 = sbr.rel (%p586) target = $region76
        $region75: #{tpu_custom_call.1} parent=67 // pred_region
          %s589 = sand.u32 %s36, 1
          %s590 = scalar_lea.sflag [#allocation6], %s589
          %s591 = sand.u32 %s72, 1
          %s592 = smul.addr %s591, 128
          %s593 = scalar_lea.vmem [#allocation5], %s592
          %s594 = smul.u32 16, %s36
          %s596 = ssub.s32 2048, 2048
          %597 = vsyncadd %s590, %s596
          %s598 = smul.addr %s594, 128
          %s599 = scalar_lea.hbm %s1, %s598
          %s600 = sshll.u32 %s593, 4
          %s601 = int_to_ptr.vmem [resolvable:$true] %s600
          %606 = dma.hbm_to_vmem [thread:$0]  %s599, 2048, %s601, %s590, 128, 128, 8
        $region76: #{tpu_custom_call.1} parent=67 // pred_fallthru
          _
      $region68: #{tpu_custom_call.1} parent=5 // pred_fallthru
        _
      %p607 = scmp.le.s32.totalorder 1, %s36
      %p608 = scmp.lt.s32.totalorder %s36, 3
      %p609 = pnand %p607, %p608
      %p610 = pneg %p609
      // Predicated region
      $region77: #{tpu_custom_call.1} parent=5 // pred_check
        _
      $region78: #{tpu_custom_call.1} parent=5 // pred_check_branch
        %612 = sbr.rel (%p609) target = $region80
      $region79: #{tpu_custom_call.1} parent=5 // pred_region
        %s613 = ssub.s32 %s36, 1
        %s614 = sand.u32 %s49, 1
        %s615 = scalar_lea.sflag [#allocation3], %s614
        %s616 = sand.u32 %s49, 1
        %s617 = smul.addr %s616, 128
        %s618 = scalar_lea.vmem [#allocation2], %s617
        // Predicated region
        $region81: #{tpu_custom_call.1} parent=79 // pred_check
          %p619 = pneg %p62
        $region82: #{tpu_custom_call.1} parent=79 // pred_check_branch
          %621 = sbr.rel (%p619) target = $region84
        $region83: #{tpu_custom_call.1} parent=79 // pred_region
          %622 = dma.done %s615, 2048
        $region84: #{tpu_custom_call.1} parent=79 // pred_fallthru
          _
        %s623 = sand.u32 %s41, 1
        %s624 = scalar_lea.sflag [#allocation6], %s623
        %s625 = sand.u32 %s75, 1
        %s626 = smul.addr %s625, 128
        %s627 = scalar_lea.vmem [#allocation5], %s626
        // Predicated region
        $region85: #{tpu_custom_call.1} parent=79 // pred_check
          %p628 = pneg %p88
        $region86: #{tpu_custom_call.1} parent=79 // pred_check_branch
          %630 = sbr.rel (%p628) target = $region88
        $region87: #{tpu_custom_call.1} parent=79 // pred_region
          %631 = dma.done %s624, 2048
        $region88: #{tpu_custom_call.1} parent=79 // pred_fallthru
          _
        // Predicated region
        $region89: #{tpu_custom_call.1} parent=79 // pred_check
          %p632 = pneg %p109
        $region90: #{tpu_custom_call.1} parent=79 // pred_check_branch
          %634 = sbr.rel (%p632) target = $region92
        $region91: #{tpu_custom_call.1} parent=79 // pred_region
          %635 = dma.done [#allocation6], 2048
        $region92: #{tpu_custom_call.1} parent=79 // pred_fallthru
          _
        // Predicated region
        $region93: #{tpu_custom_call.1} parent=79 // pred_check
          %p636 = pneg %p130
        $region94: #{tpu_custom_call.1} parent=79 // pred_check_branch
          %638 = sbr.rel (%p636) target = $region96
        $region95: #{tpu_custom_call.1} parent=79 // pred_region
          %639 = dma.done [#allocation9], 2048
        $region96: #{tpu_custom_call.1} parent=79 // pred_fallthru
          _
        // Predicated region
        $region97: #{tpu_custom_call.1} parent=79 // pred_check
          %p640 = pneg %p151
        $region98: #{tpu_custom_call.1} parent=79 // pred_check_branch
          %642 = sbr.rel (%p640) target = $region100
        $region99: #{tpu_custom_call.1} parent=79 // pred_region
          %643 = dma.done [#allocation9], 4096
        $region100: #{tpu_custom_call.1} parent=79 // pred_fallthru
          _
        // Predicated region
        $region101: #{tpu_custom_call.1} parent=79 // pred_check
          %p644 = pneg %p172
        $region102: #{tpu_custom_call.1} parent=79 // pred_check_branch
          %646 = sbr.rel (%p644) target = $region104
        $region103: #{tpu_custom_call.1} parent=79 // pred_region
          %647 = dma.done [#allocation12], 4096
        $region104: #{tpu_custom_call.1} parent=79 // pred_fallthru
          _
        // Predicated region
        $region105: #{tpu_custom_call.1} parent=79 // pred_check
          %p648 = pneg %p193
        $region106: #{tpu_custom_call.1} parent=79 // pred_check_branch
          %650 = sbr.rel (%p648) target = $region108
        $region107: #{tpu_custom_call.1} parent=79 // pred_region
          %651 = dma.done [#allocation12], 2048
        $region108: #{tpu_custom_call.1} parent=79 // pred_fallthru
          _
        // Predicated region
        $region109: #{tpu_custom_call.1} parent=79 // pred_check
          %p652 = pneg %p214
        $region110: #{tpu_custom_call.1} parent=79 // pred_check_branch
          %654 = sbr.rel (%p652) target = $region112
        $region111: #{tpu_custom_call.1} parent=79 // pred_region
          %655 = dma.done [#allocation15], 2048
        $region112: #{tpu_custom_call.1} parent=79 // pred_fallthru
          _
        // Predicated region
        $region113: #{tpu_custom_call.1} parent=79 // pred_check
          %p656 = pneg %p235
        $region114: #{tpu_custom_call.1} parent=79 // pred_check_branch
          %658 = sbr.rel (%p656) target = $region116
        $region115: #{tpu_custom_call.1} parent=79 // pred_region
          %659 = dma.done [#allocation15], 4096
        $region116: #{tpu_custom_call.1} parent=79 // pred_fallthru
          _
        // Predicated region
        $region117: #{tpu_custom_call.1} parent=79 // pred_check
          %p660 = pneg %p256
        $region118: #{tpu_custom_call.1} parent=79 // pred_check_branch
          %662 = sbr.rel (%p660) target = $region120
        $region119: #{tpu_custom_call.1} parent=79 // pred_region
          %663 = dma.done [#allocation18], 4096
        $region120: #{tpu_custom_call.1} parent=79 // pred_fallthru
          _
        // Predicated region
        $region121: #{tpu_custom_call.1} parent=79 // pred_check
          %p664 = pneg %p277
        $region122: #{tpu_custom_call.1} parent=79 // pred_check_branch
          %666 = sbr.rel (%p664) target = $region124
        $region123: #{tpu_custom_call.1} parent=79 // pred_region
          %667 = dma.done [#allocation18], 4096
        $region124: #{tpu_custom_call.1} parent=79 // pred_fallthru
          _
        // Predicated region
        $region125: #{tpu_custom_call.1} parent=79 // pred_check
          %p668 = pneg %p298
        $region126: #{tpu_custom_call.1} parent=79 // pred_check_branch
          %670 = sbr.rel (%p668) target = $region128
        $region127: #{tpu_custom_call.1} parent=79 // pred_region
          %671 = dma.done [#allocation21], 4096
        $region128: #{tpu_custom_call.1} parent=79 // pred_fallthru
          _
        // Predicated region
        $region129: #{tpu_custom_call.1} parent=79 // pred_check
          %p672 = pneg %p319
        $region130: #{tpu_custom_call.1} parent=79 // pred_check_branch
          %674 = sbr.rel (%p672) target = $region132
        $region131: #{tpu_custom_call.1} parent=79 // pred_region
          %675 = dma.done [#allocation21], 4096
        $region132: #{tpu_custom_call.1} parent=79 // pred_fallthru
          _
        // Predicated region
        $region133: #{tpu_custom_call.1} parent=79 // pred_check
          %p676 = pneg %p340
        $region134: #{tpu_custom_call.1} parent=79 // pred_check_branch
          %678 = sbr.rel (%p676) target = $region136
        $region135: #{tpu_custom_call.1} parent=79 // pred_region
          %679 = dma.done [#allocation24], 4096
        $region136: #{tpu_custom_call.1} parent=79 // pred_fallthru
          _
        %s680 = sand.u32 %s49, 1
        %s681 = scalar_lea.sflag [#allocation3], %s680
        %s682 = sand.u32 %s49, 1
        %s683 = smul.addr %s682, 128
        %s684 = scalar_lea.vmem [#allocation2], %s683
        %p685 = pneg %p62
        %p686 = pneg %p59
        %s687 = sand.u32 %s41, 1
        %s688 = scalar_lea.sflag [#allocation6], %s687
        %s689 = sand.u32 %s75, 1
        %s690 = smul.addr %s689, 128
        %s691 = scalar_lea.vmem [#allocation5], %s690
        %p692 = pneg %p88
        %p693 = pneg %p85
        %p694 = pneg %p109
        %p695 = pneg %p106
        %p696 = pneg %p130
        %p697 = pneg %p127
        %p698 = pneg %p151
        %p699 = pneg %p148
        %p700 = pneg %p172
        %p701 = pneg %p169
        %p702 = pneg %p193
        %p703 = pneg %p190
        %p704 = pneg %p214
        %p705 = pneg %p211
        %p706 = pneg %p235
        %p707 = pneg %p232
        %p708 = pneg %p256
        %p709 = pneg %p253
        %p710 = pneg %p277
        %p711 = pneg %p274
        %p712 = pneg %p298
        %p713 = pneg %p295
        %p714 = pneg %p319
        %p715 = pneg %p316
        %p716 = pneg %p340
        %p717 = pneg %p337
        %p718 = pneg %p361
        %p719 = pneg %p358
        %p720 = pneg %p387
        %p721 = pneg %p384
        %s722 = sand.u32 %s374, 1
        %s723 = scalar_lea.sflag [#allocation4], %s722
        %s724 = sand.u32 %s374, 1
        %s725 = smul.addr %s724, 128
        %s726 = scalar_lea.vmem [#allocation25], %s725
        %s727 = smul.u32 16, %s41
        %s728 = smul.u32 16, %s41
        %s729 = smul.u32 16, %s41
        %v730 = vld [vmem:[%s618] sm:$0xff]
        %v731 = vld [vmem:[%s618 + $0x8] sm:$0xff]
        %v732 = vld [vmem:[%s618 + $0x10] sm:$0xff]
        %v733 = vld [vmem:[%s618 + $0x18] sm:$0xff]
        %v734 = vld [vmem:[%s618 + $0x20] sm:$0xff]
        %v735 = vld [vmem:[%s618 + $0x28] sm:$0xff]
        %v736 = vld [vmem:[%s618 + $0x30] sm:$0xff]
        %v737 = vld [vmem:[%s618 + $0x38] sm:$0xff]
        %v738 = vld [vmem:[%s618 + $0x40] sm:$0xff]
        %v739 = vld [vmem:[%s618 + $0x48] sm:$0xff]
        %v740 = vld [vmem:[%s618 + $0x50] sm:$0xff]
        %v741 = vld [vmem:[%s618 + $0x58] sm:$0xff]
        %v742 = vld [vmem:[%s618 + $0x60] sm:$0xff]
        %v743 = vld [vmem:[%s618 + $0x68] sm:$0xff]
        %v744 = vld [vmem:[%s618 + $0x70] sm:$0xff]
        %v745 = vld [vmem:[%s618 + $0x78] sm:$0xff]
        %v746 = vld [vmem:[%s627] sm:$0xff]
        %v747 = vld [vmem:[%s627 + $0x8] sm:$0xff]
        %v748 = vld [vmem:[%s627 + $0x10] sm:$0xff]
        %v749 = vld [vmem:[%s627 + $0x18] sm:$0xff]
        %v750 = vld [vmem:[%s627 + $0x20] sm:$0xff]
        %v751 = vld [vmem:[%s627 + $0x28] sm:$0xff]
        %v752 = vld [vmem:[%s627 + $0x30] sm:$0xff]
        %v753 = vld [vmem:[%s627 + $0x38] sm:$0xff]
        %v754 = vld [vmem:[%s627 + $0x40] sm:$0xff]
        %v755 = vld [vmem:[%s627 + $0x48] sm:$0xff]
        %v756 = vld [vmem:[%s627 + $0x50] sm:$0xff]
        %v757 = vld [vmem:[%s627 + $0x58] sm:$0xff]
        %v758 = vld [vmem:[%s627 + $0x60] sm:$0xff]
        %v759 = vld [vmem:[%s627 + $0x68] sm:$0xff]
        %v760 = vld [vmem:[%s627 + $0x70] sm:$0xff]
        %v761 = vld [vmem:[%s627 + $0x78] sm:$0xff]
        %v762 = vld [vmem:[#allocation7] sm:$0xff]
        %v763 = vld [vmem:[#allocation7 + $0x8] sm:$0xff]
        %v764 = vld [vmem:[#allocation7 + $0x10] sm:$0xff]
        %v765 = vld [vmem:[#allocation7 + $0x18] sm:$0xff]
        %v766 = vld [vmem:[#allocation7 + $0x20] sm:$0xff]
        %v767 = vld [vmem:[#allocation7 + $0x28] sm:$0xff]
        %v768 = vld [vmem:[#allocation7 + $0x30] sm:$0xff]
        %v769 = vld [vmem:[#allocation7 + $0x38] sm:$0xff]
        %v770 = vld [vmem:[#allocation7 + $0x40] sm:$0xff]
        %v771 = vld [vmem:[#allocation7 + $0x48] sm:$0xff]
        %v772 = vld [vmem:[#allocation7 + $0x50] sm:$0xff]
        %v773 = vld [vmem:[#allocation7 + $0x58] sm:$0xff]
        %v774 = vld [vmem:[#allocation7 + $0x60] sm:$0xff]
        %v775 = vld [vmem:[#allocation7 + $0x68] sm:$0xff]
        %v776 = vld [vmem:[#allocation7 + $0x70] sm:$0xff]
        %v777 = vld [vmem:[#allocation7 + $0x78] sm:$0xff]
        %v778 = vld [vmem:[%s14] sm:$0x1]
        %v780 = vlaneseq
        %v781 = vshrl.u32 %v780, 7
        %v782 = vsub.s32 0, %v781
        %v783 = vrot.slane %v778, %v782
        %785 = vmatprep.subr.mxu0 0.0
        %786 = vmatpush1.msra.mxu0 %v762
        %787 = vmatprep.subr.mxu0 0.0
        %788 = vmatpush1.msra.mxu0 %v763
        %789 = vmatprep.subr.mxu0 0.0
        %790 = vmatpush1.msra.mxu0 %v764
        %791 = vmatprep.subr.mxu0 0.0
        %792 = vmatpush1.msra.mxu0 %v765
        %793 = vmatprep.subr.mxu0 0.0
        %794 = vmatpush1.msra.mxu0 %v766
        %795 = vmatprep.subr.mxu0 0.0
        %796 = vmatpush1.msra.mxu0 %v767
        %797 = vmatprep.subr.mxu0 0.0
        %798 = vmatpush1.msra.mxu0 %v768
        %799 = vmatprep.subr.mxu0 0.0
        %800 = vmatpush1.msra.mxu0 %v769
        %801 = vmatprep.subr.mxu0 0.0
        %802 = vmatpush1.msra.mxu0 %v770
        %803 = vmatprep.subr.mxu0 0.0
        %804 = vmatpush1.msra.mxu0 %v771
        %805 = vmatprep.subr.mxu0 0.0
        %806 = vmatpush1.msra.mxu0 %v772
        %807 = vmatprep.subr.mxu0 0.0
        %808 = vmatpush1.msra.mxu0 %v773
        %809 = vmatprep.subr.mxu0 0.0
        %810 = vmatpush1.msra.mxu0 %v774
        %811 = vmatprep.subr.mxu0 0.0
        %812 = vmatpush1.msra.mxu0 %v775
        %813 = vmatprep.subr.mxu0 0.0
        %814 = vmatpush1.msra.mxu0 %v776
        %815 = vmatprep.subr.mxu0 0.0
        %816 = vmatpush1.msra.mxu0 %v777
        %817 = vmatprep.subr.mxu0 0.0
        %818 = vmatpush1.msra.mxu0 0.0
        %819 = vmatprep.subr.mxu0 0.0
        %820 = vmatpush1.msra.mxu0 0.0
        %821 = vmatprep.subr.mxu0 0.0
        %822 = vmatpush1.msra.mxu0 0.0
        %823 = vmatprep.subr.mxu0 0.0
        %824 = vmatpush1.msra.mxu0 0.0
        %825 = vmatprep.subr.mxu0 0.0
        %826 = vmatpush1.msra.mxu0 0.0
        %827 = vmatprep.subr.mxu0 0.0
        %828 = vmatpush1.msra.mxu0 0.0
        %829 = vmatprep.subr.mxu0 0.0
        %830 = vmatpush1.msra.mxu0 0.0
        %831 = vmatprep.subr.mxu0 0.0
        %832 = vmatpush1.msra.mxu0 0.0
        %833 = vmatprep.subr.mxu0 0.0
        %834 = vmatpush1.msra.mxu0 0.0
        %835 = vmatprep.subr.mxu0 0.0
        %836 = vmatpush1.msra.mxu0 0.0
        %837 = vmatprep.subr.mxu0 0.0
        %838 = vmatpush1.msra.mxu0 0.0
        %839 = vmatprep.subr.mxu0 0.0
        %840 = vmatpush1.msra.mxu0 0.0
        %841 = vmatprep.subr.mxu0 0.0
        %842 = vmatpush1.msra.mxu0 0.0
        %843 = vmatprep.subr.mxu0 0.0
        %844 = vmatpush1.msra.mxu0 0.0
        %845 = vmatprep.subr.mxu0 0.0
        %846 = vmatpush1.msra.mxu0 0.0
        %847 = vmatprep.subr.mxu0 0.0
        %848 = vmatpush1.msra.mxu0 0.0
        %849 = vmatprep.mubr.f32.mxu0 0.0
        %850 = vmatmul.mubr.f32.gmra.mrb[0].mxu0 %v746
        %v851 = vpop.f32.mrb[0].mxu0
        %v852 = vadd.f32 %v783, %v851
        %v853 = vpop.f32.mrb[0].mxu0
        %854 = vmatprep.mubr.f32.mxu0 0.0
        %855 = vmatmul.mubr.f32.gmra.mrb[0].mxu0 %v747
        %v856 = vpop.f32.mrb[0].mxu0
        %v857 = vadd.f32 %v783, %v856
        %v858 = vpop.f32.mrb[0].mxu0
        %859 = vmatprep.mubr.f32.mxu0 0.0
        %860 = vmatmul.mubr.f32.gmra.mrb[0].mxu0 %v748
        %v861 = vpop.f32.mrb[0].mxu0
        %v862 = vadd.f32 %v783, %v861
        %v863 = vpop.f32.mrb[0].mxu0
        %864 = vmatprep.mubr.f32.mxu0 0.0
        %865 = vmatmul.mubr.f32.gmra.mrb[0].mxu0 %v749
        %v866 = vpop.f32.mrb[0].mxu0
        %v867 = vadd.f32 %v783, %v866
        %v868 = vpop.f32.mrb[0].mxu0
        %869 = vmatprep.mubr.f32.mxu0 0.0
        %870 = vmatmul.mubr.f32.gmra.mrb[0].mxu0 %v750
        %v871 = vpop.f32.mrb[0].mxu0
        %v872 = vadd.f32 %v783, %v871
        %v873 = vpop.f32.mrb[0].mxu0
        %874 = vmatprep.mubr.f32.mxu0 0.0
        %875 = vmatmul.mubr.f32.gmra.mrb[0].mxu0 %v751
        %v876 = vpop.f32.mrb[0].mxu0
        %v877 = vadd.f32 %v783, %v876
        %v878 = vpop.f32.mrb[0].mxu0
        %879 = vmatprep.mubr.f32.mxu0 0.0
        %880 = vmatmul.mubr.f32.gmra.mrb[0].mxu0 %v752
        %v881 = vpop.f32.mrb[0].mxu0
        %v882 = vadd.f32 %v783, %v881
        %v883 = vpop.f32.mrb[0].mxu0
        %884 = vmatprep.mubr.f32.mxu0 0.0
        %885 = vmatmul.mubr.f32.gmra.mrb[0].mxu0 %v753
        %v886 = vpop.f32.mrb[0].mxu0
        %v887 = vadd.f32 %v783, %v886
        %v888 = vpop.f32.mrb[0].mxu0
        %889 = vmatprep.mubr.f32.mxu0 0.0
        %890 = vmatmul.mubr.f32.gmra.mrb[0].mxu0 %v754
        %v891 = vpop.f32.mrb[0].mxu0
        %v892 = vadd.f32 %v783, %v891
        %v893 = vpop.f32.mrb[0].mxu0
        %894 = vmatprep.mubr.f32.mxu0 0.0
        %895 = vmatmul.mubr.f32.gmra.mrb[0].mxu0 %v755
        %v896 = vpop.f32.mrb[0].mxu0
        %v897 = vadd.f32 %v783, %v896
        %v898 = vpop.f32.mrb[0].mxu0
        %899 = vmatprep.mubr.f32.mxu0 0.0
        %900 = vmatmul.mubr.f32.gmra.mrb[0].mxu0 %v756
        %v901 = vpop.f32.mrb[0].mxu0
        %v902 = vadd.f32 %v783, %v901
        %v903 = vpop.f32.mrb[0].mxu0
        %904 = vmatprep.mubr.f32.mxu0 0.0
        %905 = vmatmul.mubr.f32.gmra.mrb[0].mxu0 %v757
        %v906 = vpop.f32.mrb[0].mxu0
        %v907 = vadd.f32 %v783, %v906
        %v908 = vpop.f32.mrb[0].mxu0
        %909 = vmatprep.mubr.f32.mxu0 0.0
        %910 = vmatmul.mubr.f32.gmra.mrb[0].mxu0 %v758
        %v911 = vpop.f32.mrb[0].mxu0
        %v912 = vadd.f32 %v783, %v911
        %v913 = vpop.f32.mrb[0].mxu0
        %914 = vmatprep.mubr.f32.mxu0 0.0
        %915 = vmatmul.mubr.f32.gmra.mrb[0].mxu0 %v759
        %v916 = vpop.f32.mrb[0].mxu0
        %v917 = vadd.f32 %v783, %v916
        %v918 = vpop.f32.mrb[0].mxu0
        %919 = vmatprep.mubr.f32.mxu0 0.0
        %920 = vmatmul.mubr.f32.gmra.mrb[0].mxu0 %v760
        %v921 = vpop.f32.mrb[0].mxu0
        %v922 = vadd.f32 %v783, %v921
        %v923 = vpop.f32.mrb[0].mxu0
        %924 = vmatprep.mubr.f32.mxu0 0.0
        %925 = vmatmul.mubr.f32.gmra.mrb[0].mxu0 %v761
        %v926 = vpop.f32.mrb[0].mxu0
        %v927 = vadd.f32 %v783, %v926
        %v928 = vpop.f32.mrb[0].mxu0
        %929 = vdwg.mxu0
        %v930 = vmax.f32 %v852, 0.0
        %v931 = vmax.f32 %v857, 0.0
        %v932 = vmax.f32 %v862, 0.0
        %v933 = vmax.f32 %v867, 0.0
        %v934 = vmax.f32 %v872, 0.0
        %v935 = vmax.f32 %v877, 0.0
        %v936 = vmax.f32 %v882, 0.0
        %v937 = vmax.f32 %v887, 0.0
        %v938 = vmax.f32 %v892, 0.0
        %v939 = vmax.f32 %v897, 0.0
        %v940 = vmax.f32 %v902, 0.0
        %v941 = vmax.f32 %v907, 0.0
        %v942 = vmax.f32 %v912, 0.0
        %v943 = vmax.f32 %v917, 0.0
        %v944 = vmax.f32 %v922, 0.0
        %v945 = vmax.f32 %v927, 0.0
        %v946 = vld [vmem:[#allocation8] sm:$0xff]
        %v947 = vld [vmem:[#allocation8 + $0x8] sm:$0xff]
        %v948 = vld [vmem:[#allocation8 + $0x10] sm:$0xff]
        %v949 = vld [vmem:[#allocation8 + $0x18] sm:$0xff]
        %v950 = vld [vmem:[#allocation8 + $0x20] sm:$0xff]
        %v951 = vld [vmem:[#allocation8 + $0x28] sm:$0xff]
        %v952 = vld [vmem:[#allocation8 + $0x30] sm:$0xff]
        %v953 = vld [vmem:[#allocation8 + $0x38] sm:$0xff]
        %v954 = vld [vmem:[#allocation8 + $0x40] sm:$0xff]
        %v955 = vld [vmem:[#allocation8 + $0x48] sm:$0xff]
        %v956 = vld [vmem:[#allocation8 + $0x50] sm:$0xff]
        %v957 = vld [vmem:[#allocation8 + $0x58] sm:$0xff]
        %v958 = vld [vmem:[#allocation8 + $0x60] sm:$0xff]
        %v959 = vld [vmem:[#allocation8 + $0x68] sm:$0xff]
        %v960 = vld [vmem:[#allocation8 + $0x70] sm:$0xff]
        %v961 = vld [vmem:[#allocation8 + $0x78] sm:$0xff]
        %v962 = vld [vmem:[%s14 + $0x1] sm:$0x1]
        %v964 = vlaneseq
        %v965 = vshrl.u32 %v964, 7
        %v966 = vsub.s32 0, %v965
        %v967 = vrot.slane %v962, %v966
        %969 = vmatprep.subr.mxu0 0.0
        %970 = vmatpush1.msra.mxu0 %v946
        %971 = vmatprep.subr.mxu0 0.0
        %972 = vmatpush1.msra.mxu0 %v947
        %973 = vmatprep.subr.mxu0 0.0
        %974 = vmatpush1.msra.mxu0 %v948
        %975 = vmatprep.subr.mxu0 0.0
        %976 = vmatpush1.msra.mxu0 %v949
        %977 = vmatprep.subr.mxu0 0.0
        %978 = vmatpush1.msra.mxu0 %v950
        %979 = vmatprep.subr.mxu0 0.0
        %980 = vmatpush1.msra.mxu0 %v951
        %981 = vmatprep.subr.mxu0 0.0
        %982 = vmatpush1.msra.mxu0 %v952
        %983 = vmatprep.subr.mxu0 0.0
        %984 = vmatpush1.msra.mxu0 %v953
        %985 = vmatprep.subr.mxu0 0.0
        %986 = vmatpush1.msra.mxu0 %v954
        %987 = vmatprep.subr.mxu0 0.0
        %988 = vmatpush1.msra.mxu0 %v955
        %989 = vmatprep.subr.mxu0 0.0
        %990 = vmatpush1.msra.mxu0 %v956
        %991 = vmatprep.subr.mxu0 0.0
        %992 = vmatpush1.msra.mxu0 %v957
        %993 = vmatprep.subr.mxu0 0.0
        %994 = vmatpush1.msra.mxu0 %v958
        %995 = vmatprep.subr.mxu0 0.0
        %996 = vmatpush1.msra.mxu0 %v959
        %997 = vmatprep.subr.mxu0 0.0
        %998 = vmatpush1.msra.mxu0 %v960
        %999 = vmatprep.subr.mxu0 0.0
        %1000 = vmatpush1.msra.mxu0 %v961
        %1001 = vmatprep.subr.mxu0 0.0
        %1002 = vmatpush1.msra.mxu0 0.0
        %1003 = vmatprep.subr.mxu0 0.0
        %1004 = vmatpush1.msra.mxu0 0.0
        %1005 = vmatprep.subr.mxu0 0.0
        %1006 = vmatpush1.msra.mxu0 0.0
        %1007 = vmatprep.subr.mxu0 0.0
        %1008 = vmatpush1.msra.mxu0 0.0
        %1009 = vmatprep.subr.mxu0 0.0
        %1010 = vmatpush1.msra.mxu0 0.0
        %1011 = vmatprep.subr.mxu0 0.0
        %1012 = vmatpush1.msra.mxu0 0.0
        %1013 = vmatprep.subr.mxu0 0.0
        %1014 = vmatpush1.msra.mxu0 0.0
        %1015 = vmatprep.subr.mxu0 0.0
        %1016 = vmatpush1.msra.mxu0 0.0
        %1017 = vmatprep.subr.mxu0 0.0
        %1018 = vmatpush1.msra.mxu0 0.0
        %1019 = vmatprep.subr.mxu0 0.0
        %1020 = vmatpush1.msra.mxu0 0.0
        %1021 = vmatprep.subr.mxu0 0.0
        %1022 = vmatpush1.msra.mxu0 0.0
        %1023 = vmatprep.subr.mxu0 0.0
        %1024 = vmatpush1.msra.mxu0 0.0
        %1025 = vmatprep.subr.mxu0 0.0
        %1026 = vmatpush1.msra.mxu0 0.0
        %1027 = vmatprep.subr.mxu0 0.0
        %1028 = vmatpush1.msra.mxu0 0.0
        %1029 = vmatprep.subr.mxu0 0.0
        %1030 = vmatpush1.msra.mxu0 0.0
        %1031 = vmatprep.subr.mxu0 0.0
        %1032 = vmatpush1.msra.mxu0 0.0
        %1033 = vmatprep.mubr.f32.mxu0 0.0
        %1034 = vmatmul.mubr.f32.gmra.mrb[0].mxu0 %v730
        %v1035 = vpop.f32.mrb[0].mxu0
        %v1036 = vadd.f32 %v967, %v1035
        %v1037 = vpop.f32.mrb[0].mxu0
        %1038 = vmatprep.mubr.f32.mxu0 0.0
        %1039 = vmatmul.mubr.f32.gmra.mrb[0].mxu0 %v731
        %v1040 = vpop.f32.mrb[0].mxu0
        %v1041 = vadd.f32 %v967, %v1040
        %v1042 = vpop.f32.mrb[0].mxu0
        %1043 = vmatprep.mubr.f32.mxu0 0.0
        %1044 = vmatmul.mubr.f32.gmra.mrb[0].mxu0 %v732
        %v1045 = vpop.f32.mrb[0].mxu0
        %v1046 = vadd.f32 %v967, %v1045
        %v1047 = vpop.f32.mrb[0].mxu0
        %1048 = vmatprep.mubr.f32.mxu0 0.0
        %1049 = vmatmul.mubr.f32.gmra.mrb[0].mxu0 %v733
        %v1050 = vpop.f32.mrb[0].mxu0
        %v1051 = vadd.f32 %v967, %v1050
        %v1052 = vpop.f32.mrb[0].mxu0
        %1053 = vmatprep.mubr.f32.mxu0 0.0
        %1054 = vmatmul.mubr.f32.gmra.mrb[0].mxu0 %v734
        %v1055 = vpop.f32.mrb[0].mxu0
        %v1056 = vadd.f32 %v967, %v1055
        %v1057 = vpop.f32.mrb[0].mxu0
        %1058 = vmatprep.mubr.f32.mxu0 0.0
        %1059 = vmatmul.mubr.f32.gmra.mrb[0].mxu0 %v735
        %v1060 = vpop.f32.mrb[0].mxu0
        %v1061 = vadd.f32 %v967, %v1060
        %v1062 = vpop.f32.mrb[0].mxu0
        %1063 = vmatprep.mubr.f32.mxu0 0.0
        %1064 = vmatmul.mubr.f32.gmra.mrb[0].mxu0 %v736
        %v1065 = vpop.f32.mrb[0].mxu0
        %v1066 = vadd.f32 %v967, %v1065
        %v1067 = vpop.f32.mrb[0].mxu0
        %1068 = vmatprep.mubr.f32.mxu0 0.0
        %1069 = vmatmul.mubr.f32.gmra.mrb[0].mxu0 %v737
        %v1070 = vpop.f32.mrb[0].mxu0
        %v1071 = vadd.f32 %v967, %v1070
        %v1072 = vpop.f32.mrb[0].mxu0
        %1073 = vmatprep.mubr.f32.mxu0 0.0
        %1074 = vmatmul.mubr.f32.gmra.mrb[0].mxu0 %v738
        %v1075 = vpop.f32.mrb[0].mxu0
        %v1076 = vadd.f32 %v967, %v1075
        %v1077 = vpop.f32.mrb[0].mxu0
        %1078 = vmatprep.mubr.f32.mxu0 0.0
        %1079 = vmatmul.mubr.f32.gmra.mrb[0].mxu0 %v739
        %v1080 = vpop.f32.mrb[0].mxu0
        %v1081 = vadd.f32 %v967, %v1080
        %v1082 = vpop.f32.mrb[0].mxu0
        %1083 = vmatprep.mubr.f32.mxu0 0.0
        %1084 = vmatmul.mubr.f32.gmra.mrb[0].mxu0 %v740
        %v1085 = vpop.f32.mrb[0].mxu0
        %v1086 = vadd.f32 %v967, %v1085
        %v1087 = vpop.f32.mrb[0].mxu0
        %1088 = vmatprep.mubr.f32.mxu0 0.0
        %1089 = vmatmul.mubr.f32.gmra.mrb[0].mxu0 %v741
        %v1090 = vpop.f32.mrb[0].mxu0
        %v1091 = vadd.f32 %v967, %v1090
        %v1092 = vpop.f32.mrb[0].mxu0
        %1093 = vmatprep.mubr.f32.mxu0 0.0
        %1094 = vmatmul.mubr.f32.gmra.mrb[0].mxu0 %v742
        %v1095 = vpop.f32.mrb[0].mxu0
        %v1096 = vadd.f32 %v967, %v1095
        %v1097 = vpop.f32.mrb[0].mxu0
        %1098 = vmatprep.mubr.f32.mxu0 0.0
        %1099 = vmatmul.mubr.f32.gmra.mrb[0].mxu0 %v743
        %v1100 = vpop.f32.mrb[0].mxu0
        %v1101 = vadd.f32 %v967, %v1100
        %v1102 = vpop.f32.mrb[0].mxu0
        %1103 = vmatprep.mubr.f32.mxu0 0.0
        %1104 = vmatmul.mubr.f32.gmra.mrb[0].mxu0 %v744
        %v1105 = vpop.f32.mrb[0].mxu0
        %v1106 = vadd.f32 %v967, %v1105
        %v1107 = vpop.f32.mrb[0].mxu0
        %1108 = vmatprep.mubr.f32.mxu0 0.0
        %1109 = vmatmul.mubr.f32.gmra.mrb[0].mxu0 %v745
        %v1110 = vpop.f32.mrb[0].mxu0
        %v1111 = vadd.f32 %v967, %v1110
        %v1112 = vpop.f32.mrb[0].mxu0
        %1113 = vdwg.mxu0
        %v1114 = vmax.f32 %v1036, 0.0
        %v1115 = vmax.f32 %v1041, 0.0
        %v1116 = vmax.f32 %v1046, 0.0
        %v1117 = vmax.f32 %v1051, 0.0
        %v1118 = vmax.f32 %v1056, 0.0
        %v1119 = vmax.f32 %v1061, 0.0
        %v1120 = vmax.f32 %v1066, 0.0
        %v1121 = vmax.f32 %v1071, 0.0
        %v1122 = vmax.f32 %v1076, 0.0
        %v1123 = vmax.f32 %v1081, 0.0
        %v1124 = vmax.f32 %v1086, 0.0
        %v1125 = vmax.f32 %v1091, 0.0
        %v1126 = vmax.f32 %v1096, 0.0
        %v1127 = vmax.f32 %v1101, 0.0
        %v1128 = vmax.f32 %v1106, 0.0
        %v1129 = vmax.f32 %v1111, 0.0
        %v1130 = vld [vmem:[#allocation10] sm:$0xff]
        %v1131 = vld [vmem:[#allocation10 + $0x8] sm:$0xff]
        %v1132 = vld [vmem:[#allocation10 + $0x10] sm:$0xff]
        %v1133 = vld [vmem:[#allocation10 + $0x18] sm:$0xff]
        %v1134 = vld [vmem:[#allocation10 + $0x20] sm:$0xff]
        %v1135 = vld [vmem:[#allocation10 + $0x28] sm:$0xff]
        %v1136 = vld [vmem:[#allocation10 + $0x30] sm:$0xff]
        %v1137 = vld [vmem:[#allocation10 + $0x38] sm:$0xff]
        %v1138 = vld [vmem:[#allocation10 + $0x40] sm:$0xff]
        %v1139 = vld [vmem:[#allocation10 + $0x48] sm:$0xff]
        %v1140 = vld [vmem:[#allocation10 + $0x50] sm:$0xff]
        %v1141 = vld [vmem:[#allocation10 + $0x58] sm:$0xff]
        %v1142 = vld [vmem:[#allocation10 + $0x60] sm:$0xff]
        %v1143 = vld [vmem:[#allocation10 + $0x68] sm:$0xff]
        %v1144 = vld [vmem:[#allocation10 + $0x70] sm:$0xff]
        %v1145 = vld [vmem:[#allocation10 + $0x78] sm:$0xff]
        %v1146 = vld [vmem:[#allocation10 + $0x80] sm:$0xff]
        %v1147 = vld [vmem:[#allocation10 + $0x88] sm:$0xff]
        %v1148 = vld [vmem:[#allocation10 + $0x90] sm:$0xff]
        %v1149 = vld [vmem:[#allocation10 + $0x98] sm:$0xff]
        %v1150 = vld [vmem:[#allocation10 + $0xa0] sm:$0xff]
        %v1151 = vld [vmem:[#allocation10 + $0xa8] sm:$0xff]
        %v1152 = vld [vmem:[#allocation10 + $0xb0] sm:$0xff]
        %v1153 = vld [vmem:[#allocation10 + $0xb8] sm:$0xff]
        %v1154 = vld [vmem:[#allocation10 + $0xc0] sm:$0xff]
        %v1155 = vld [vmem:[#allocation10 + $0xc8] sm:$0xff]
        %v1156 = vld [vmem:[#allocation10 + $0xd0] sm:$0xff]
        %v1157 = vld [vmem:[#allocation10 + $0xd8] sm:$0xff]
        %v1158 = vld [vmem:[#allocation10 + $0xe0] sm:$0xff]
        %v1159 = vld [vmem:[#allocation10 + $0xe8] sm:$0xff]
        %v1160 = vld [vmem:[#allocation10 + $0xf0] sm:$0xff]
        %v1161 = vld [vmem:[#allocation10 + $0xf8] sm:$0xff]
        %v1162 = vld [vmem:[%s14 + $0x2] sm:$0x3]
        %v1164 = vlaneseq
        %v1165 = vshrl.u32 %v1164, 7
        %v1166 = vsub.s32 0, %v1165
        %v1167 = vrot.slane %v1162, %v1166
        %v1168 = vlaneseq
        %v1169 = vshrl.u32 %v1168, 7
        %v1170 = vsub.s32 1, %v1169
        %v1171 = vrot.slane %v1162, %v1170
        %1174 = vmatprep.subr.mxu0 %v1131
        %1175 = vmatpush1.msra.mxu0 %v1130
        %1176 = vmatprep.subr.mxu0 %v1133
        %1177 = vmatpush1.msra.mxu0 %v1132
        %1178 = vmatprep.subr.mxu0 %v1135
        %1179 = vmatpush1.msra.mxu0 %v1134
        %1180 = vmatprep.subr.mxu0 %v1137
        %1181 = vmatpush1.msra.mxu0 %v1136
        %1182 = vmatprep.subr.mxu0 %v1139
        %1183 = vmatpush1.msra.mxu0 %v1138
        %1184 = vmatprep.subr.mxu0 %v1141
        %1185 = vmatpush1.msra.mxu0 %v1140
        %1186 = vmatprep.subr.mxu0 %v1143
        %1187 = vmatpush1.msra.mxu0 %v1142
        %1188 = vmatprep.subr.mxu0 %v1145
        %1189 = vmatpush1.msra.mxu0 %v1144
        %1190 = vmatprep.subr.mxu0 %v1147
        %1191 = vmatpush1.msra.mxu0 %v1146
        %1192 = vmatprep.subr.mxu0 %v1149
        %1193 = vmatpush1.msra.mxu0 %v1148
        %1194 = vmatprep.subr.mxu0 %v1151
        %1195 = vmatpush1.msra.mxu0 %v1150
        %1196 = vmatprep.subr.mxu0 %v1153
        %1197 = vmatpush1.msra.mxu0 %v1152
        %1198 = vmatprep.subr.mxu0 %v1155
        %1199 = vmatpush1.msra.mxu0 %v1154
        %1200 = vmatprep.subr.mxu0 %v1157
        %1201 = vmatpush1.msra.mxu0 %v1156
        %1202 = vmatprep.subr.mxu0 %v1159
        %1203 = vmatpush1.msra.mxu0 %v1158
        %1204 = vmatprep.subr.mxu0 %v1161
        %1205 = vmatpush1.msra.mxu0 %v1160
        %1206 = vmatprep.subr.mxu0 0.0
        %1207 = vmatpush1.msra.mxu0 0.0
        %1208 = vmatprep.subr.mxu0 0.0
        %1209 = vmatpush1.msra.mxu0 0.0
        %1210 = vmatprep.subr.mxu0 0.0
        %1211 = vmatpush1.msra.mxu0 0.0
        %1212 = vmatprep.subr.mxu0 0.0
        %1213 = vmatpush1.msra.mxu0 0.0
        %1214 = vmatprep.subr.mxu0 0.0
        %1215 = vmatpush1.msra.mxu0 0.0
        %1216 = vmatprep.subr.mxu0 0.0
        %1217 = vmatpush1.msra.mxu0 0.0
        %1218 = vmatprep.subr.mxu0 0.0
        %1219 = vmatpush1.msra.mxu0 0.0
        %1220 = vmatprep.subr.mxu0 0.0
        %1221 = vmatpush1.msra.mxu0 0.0
        %1222 = vmatprep.subr.mxu0 0.0
        %1223 = vmatpush1.msra.mxu0 0.0
        %1224 = vmatprep.subr.mxu0 0.0
        %1225 = vmatpush1.msra.mxu0 0.0
        %1226 = vmatprep.subr.mxu0 0.0
        %1227 = vmatpush1.msra.mxu0 0.0
        %1228 = vmatprep.subr.mxu0 0.0
        %1229 = vmatpush1.msra.mxu0 0.0
        %1230 = vmatprep.subr.mxu0 0.0
        %1231 = vmatpush1.msra.mxu0 0.0
        %1232 = vmatprep.subr.mxu0 0.0
        %1233 = vmatpush1.msra.mxu0 0.0
        %1234 = vmatprep.subr.mxu0 0.0
        %1235 = vmatpush1.msra.mxu0 0.0
        %1236 = vmatprep.subr.mxu0 0.0
        %1237 = vmatpush1.msra.mxu0 0.0
        %1238 = vmatprep.mubr.f32.mxu0 0.0
        %1239 = vmatmul.mubr.f32.gmra.mrb[0].mxu0 %v930
        %v1240 = vpop.f32.mrb[0].mxu0
        %v1241 = vadd.f32 %v1167, %v1240
        %v1242 = vpop.f32.mrb[0].mxu0
        %v1243 = vadd.f32 %v1171, %v1242
        %1244 = vmatprep.mubr.f32.mxu0 0.0
        %1245 = vmatmul.mubr.f32.gmra.mrb[0].mxu0 %v931
        %v1246 = vpop.f32.mrb[0].mxu0
        %v1247 = vadd.f32 %v1167, %v1246
        %v1248 = vpop.f32.mrb[0].mxu0
        %v1249 = vadd.f32 %v1171, %v1248
        %1250 = vmatprep.mubr.f32.mxu0 0.0
        %1251 = vmatmul.mubr.f32.gmra.mrb[0].mxu0 %v932
        %v1252 = vpop.f32.mrb[0].mxu0
        %v1253 = vadd.f32 %v1167, %v1252
        %v1254 = vpop.f32.mrb[0].mxu0
        %v1255 = vadd.f32 %v1171, %v1254
        %1256 = vmatprep.mubr.f32.mxu0 0.0
        %1257 = vmatmul.mubr.f32.gmra.mrb[0].mxu0 %v933
        %v1258 = vpop.f32.mrb[0].mxu0
        %v1259 = vadd.f32 %v1167, %v1258
        %v1260 = vpop.f32.mrb[0].mxu0
        %v1261 = vadd.f32 %v1171, %v1260
        %1262 = vmatprep.mubr.f32.mxu0 0.0
        %1263 = vmatmul.mubr.f32.gmra.mrb[0].mxu0 %v934
        %v1264 = vpop.f32.mrb[0].mxu0
        %v1265 = vadd.f32 %v1167, %v1264
        %v1266 = vpop.f32.mrb[0].mxu0
        %v1267 = vadd.f32 %v1171, %v1266
        %1268 = vmatprep.mubr.f32.mxu0 0.0
        %1269 = vmatmul.mubr.f32.gmra.mrb[0].mxu0 %v935
        %v1270 = vpop.f32.mrb[0].mxu0
        %v1271 = vadd.f32 %v1167, %v1270
        %v1272 = vpop.f32.mrb[0].mxu0
        %v1273 = vadd.f32 %v1171, %v1272
        %1274 = vmatprep.mubr.f32.mxu0 0.0
        %1275 = vmatmul.mubr.f32.gmra.mrb[0].mxu0 %v936
        %v1276 = vpop.f32.mrb[0].mxu0
        %v1277 = vadd.f32 %v1167, %v1276
        %v1278 = vpop.f32.mrb[0].mxu0
        %v1279 = vadd.f32 %v1171, %v1278
        %1280 = vmatprep.mubr.f32.mxu0 0.0
        %1281 = vmatmul.mubr.f32.gmra.mrb[0].mxu0 %v937
        %v1282 = vpop.f32.mrb[0].mxu0
        %v1283 = vadd.f32 %v1167, %v1282
        %v1284 = vpop.f32.mrb[0].mxu0
        %v1285 = vadd.f32 %v1171, %v1284
        %1286 = vmatprep.mubr.f32.mxu0 0.0
        %1287 = vmatmul.mubr.f32.gmra.mrb[0].mxu0 %v938
        %v1288 = vpop.f32.mrb[0].mxu0
        %v1289 = vadd.f32 %v1167, %v1288
        %v1290 = vpop.f32.mrb[0].mxu0
        %v1291 = vadd.f32 %v1171, %v1290
        %1292 = vmatprep.mubr.f32.mxu0 0.0
        %1293 = vmatmul.mubr.f32.gmra.mrb[0].mxu0 %v939
        %v1294 = vpop.f32.mrb[0].mxu0
        %v1295 = vadd.f32 %v1167, %v1294
        %v1296 = vpop.f32.mrb[0].mxu0
        %v1297 = vadd.f32 %v1171, %v1296
        %1298 = vmatprep.mubr.f32.mxu0 0.0
        %1299 = vmatmul.mubr.f32.gmra.mrb[0].mxu0 %v940
        %v1300 = vpop.f32.mrb[0].mxu0
        %v1301 = vadd.f32 %v1167, %v1300
        %v1302 = vpop.f32.mrb[0].mxu0
        %v1303 = vadd.f32 %v1171, %v1302
        %1304 = vmatprep.mubr.f32.mxu0 0.0
        %1305 = vmatmul.mubr.f32.gmra.mrb[0].mxu0 %v941
        %v1306 = vpop.f32.mrb[0].mxu0
        %v1307 = vadd.f32 %v1167, %v1306
        %v1308 = vpop.f32.mrb[0].mxu0
        %v1309 = vadd.f32 %v1171, %v1308
        %1310 = vmatprep.mubr.f32.mxu0 0.0
        %1311 = vmatmul.mubr.f32.gmra.mrb[0].mxu0 %v942
        %v1312 = vpop.f32.mrb[0].mxu0
        %v1313 = vadd.f32 %v1167, %v1312
        %v1314 = vpop.f32.mrb[0].mxu0
        %v1315 = vadd.f32 %v1171, %v1314
        %1316 = vmatprep.mubr.f32.mxu0 0.0
        %1317 = vmatmul.mubr.f32.gmra.mrb[0].mxu0 %v943
        %v1318 = vpop.f32.mrb[0].mxu0
        %v1319 = vadd.f32 %v1167, %v1318
        %v1320 = vpop.f32.mrb[0].mxu0
        %v1321 = vadd.f32 %v1171, %v1320
        %1322 = vmatprep.mubr.f32.mxu0 0.0
        %1323 = vmatmul.mubr.f32.gmra.mrb[0].mxu0 %v944
        %v1324 = vpop.f32.mrb[0].mxu0
        %v1325 = vadd.f32 %v1167, %v1324
        %v1326 = vpop.f32.mrb[0].mxu0
        %v1327 = vadd.f32 %v1171, %v1326
        %1328 = vmatprep.mubr.f32.mxu0 0.0
        %1329 = vmatmul.mubr.f32.gmra.mrb[0].mxu0 %v945
        %v1330 = vpop.f32.mrb[0].mxu0
        %v1331 = vadd.f32 %v1167, %v1330
        %v1332 = vpop.f32.mrb[0].mxu0
        %v1333 = vadd.f32 %v1171, %v1332
        %1334 = vdwg.mxu0
        %v1335 = vmax.f32 %v1241, 0.0
        %v1336 = vmax.f32 %v1243, 0.0
        %v1337 = vmax.f32 %v1247, 0.0
        %v1338 = vmax.f32 %v1249, 0.0
        %v1339 = vmax.f32 %v1253, 0.0
        %v1340 = vmax.f32 %v1255, 0.0
        %v1341 = vmax.f32 %v1259, 0.0
        %v1342 = vmax.f32 %v1261, 0.0
        %v1343 = vmax.f32 %v1265, 0.0
        %v1344 = vmax.f32 %v1267, 0.0
        %v1345 = vmax.f32 %v1271, 0.0
        %v1346 = vmax.f32 %v1273, 0.0
        %v1347 = vmax.f32 %v1277, 0.0
        %v1348 = vmax.f32 %v1279, 0.0
        %v1349 = vmax.f32 %v1283, 0.0
        %v1350 = vmax.f32 %v1285, 0.0
        %v1351 = vmax.f32 %v1289, 0.0
        %v1352 = vmax.f32 %v1291, 0.0
        %v1353 = vmax.f32 %v1295, 0.0
        %v1354 = vmax.f32 %v1297, 0.0
        %v1355 = vmax.f32 %v1301, 0.0
        %v1356 = vmax.f32 %v1303, 0.0
        %v1357 = vmax.f32 %v1307, 0.0
        %v1358 = vmax.f32 %v1309, 0.0
        %v1359 = vmax.f32 %v1313, 0.0
        %v1360 = vmax.f32 %v1315, 0.0
        %v1361 = vmax.f32 %v1319, 0.0
        %v1362 = vmax.f32 %v1321, 0.0
        %v1363 = vmax.f32 %v1325, 0.0
        %v1364 = vmax.f32 %v1327, 0.0
        %v1365 = vmax.f32 %v1331, 0.0
        %v1366 = vmax.f32 %v1333, 0.0
        %v1367 = vld [vmem:[#allocation11] sm:$0xff]
        %v1368 = vld [vmem:[#allocation11 + $0x8] sm:$0xff]
        %v1369 = vld [vmem:[#allocation11 + $0x10] sm:$0xff]
        %v1370 = vld [vmem:[#allocation11 + $0x18] sm:$0xff]
        %v1371 = vld [vmem:[#allocation11 + $0x20] sm:$0xff]
        %v1372 = vld [vmem:[#allocation11 + $0x28] sm:$0xff]
        %v1373 = vld [vmem:[#allocation11 + $0x30] sm:$0xff]
        %v1374 = vld [vmem:[#allocation11 + $0x38] sm:$0xff]
        %v1375 = vld [vmem:[#allocation11 + $0x40] sm:$0xff]
        %v1376 = vld [vmem:[#allocation11 + $0x48] sm:$0xff]
        %v1377 = vld [vmem:[#allocation11 + $0x50] sm:$0xff]
        %v1378 = vld [vmem:[#allocation11 + $0x58] sm:$0xff]
        %v1379 = vld [vmem:[#allocation11 + $0x60] sm:$0xff]
        %v1380 = vld [vmem:[#allocation11 + $0x68] sm:$0xff]
        %v1381 = vld [vmem:[#allocation11 + $0x70] sm:$0xff]
        %v1382 = vld [vmem:[#allocation11 + $0x78] sm:$0xff]
        %v1383 = vld [vmem:[#allocation11 + $0x80] sm:$0xff]
        %v1384 = vld [vmem:[#allocation11 + $0x88] sm:$0xff]
        %v1385 = vld [vmem:[#allocation11 + $0x90] sm:$0xff]
        %v1386 = vld [vmem:[#allocation11 + $0x98] sm:$0xff]
        %v1387 = vld [vmem:[#allocation11 + $0xa0] sm:$0xff]
        %v1388 = vld [vmem:[#allocation11 + $0xa8] sm:$0xff]
        %v1389 = vld [vmem:[#allocation11 + $0xb0] sm:$0xff]
        %v1390 = vld [vmem:[#allocation11 + $0xb8] sm:$0xff]
        %v1391 = vld [vmem:[#allocation11 + $0xc0] sm:$0xff]
        %v1392 = vld [vmem:[#allocation11 + $0xc8] sm:$0xff]
        %v1393 = vld [vmem:[#allocation11 + $0xd0] sm:$0xff]
        %v1394 = vld [vmem:[#allocation11 + $0xd8] sm:$0xff]
        %v1395 = vld [vmem:[#allocation11 + $0xe0] sm:$0xff]
        %v1396 = vld [vmem:[#allocation11 + $0xe8] sm:$0xff]
        %v1397 = vld [vmem:[#allocation11 + $0xf0] sm:$0xff]
        %v1398 = vld [vmem:[#allocation11 + $0xf8] sm:$0xff]
        %v1399 = vld [vmem:[%s14 + $0x4] sm:$0x1]
        %v1401 = vlaneseq
        %v1402 = vshrl.u32 %v1401, 7
        %v1403 = vsub.s32 0, %v1402
        %v1404 = vrot.slane %v1399, %v1403
        %1406 = vmatprep.subr.mxu0 0.0
        %1407 = vmatpush1.msra.mxu0 %v1367
        %1408 = vmatprep.subr.mxu0 0.0
        %1409 = vmatpush1.msra.mxu0 %v1368
        %1410 = vmatprep.subr.mxu0 0.0
        %1411 = vmatpush1.msra.mxu0 %v1369
        %1412 = vmatprep.subr.mxu0 0.0
        %1413 = vmatpush1.msra.mxu0 %v1370
        %1414 = vmatprep.subr.mxu0 0.0
        %1415 = vmatpush1.msra.mxu0 %v1371
        %1416 = vmatprep.subr.mxu0 0.0
        %1417 = vmatpush1.msra.mxu0 %v1372
        %1418 = vmatprep.subr.mxu0 0.0
        %1419 = vmatpush1.msra.mxu0 %v1373
        %1420 = vmatprep.subr.mxu0 0.0
        %1421 = vmatpush1.msra.mxu0 %v1374
        %1422 = vmatprep.subr.mxu0 0.0
        %1423 = vmatpush1.msra.mxu0 %v1375
        %1424 = vmatprep.subr.mxu0 0.0
        %1425 = vmatpush1.msra.mxu0 %v1376
        %1426 = vmatprep.subr.mxu0 0.0
        %1427 = vmatpush1.msra.mxu0 %v1377
        %1428 = vmatprep.subr.mxu0 0.0
        %1429 = vmatpush1.msra.mxu0 %v1378
        %1430 = vmatprep.subr.mxu0 0.0
        %1431 = vmatpush1.msra.mxu0 %v1379
        %1432 = vmatprep.subr.mxu0 0.0
        %1433 = vmatpush1.msra.mxu0 %v1380
        %1434 = vmatprep.subr.mxu0 0.0
        %1435 = vmatpush1.msra.mxu0 %v1381
        %1436 = vmatprep.subr.mxu0 0.0
        %1437 = vmatpush1.msra.mxu0 %v1382
        %1438 = vmatprep.subr.mxu0 0.0
        %1439 = vmatpush1.msra.mxu0 %v1383
        %1440 = vmatprep.subr.mxu0 0.0
        %1441 = vmatpush1.msra.mxu0 %v1384
        %1442 = vmatprep.subr.mxu0 0.0
        %1443 = vmatpush1.msra.mxu0 %v1385
        %1444 = vmatprep.subr.mxu0 0.0
        %1445 = vmatpush1.msra.mxu0 %v1386
        %1446 = vmatprep.subr.mxu0 0.0
        %1447 = vmatpush1.msra.mxu0 %v1387
        %1448 = vmatprep.subr.mxu0 0.0
        %1449 = vmatpush1.msra.mxu0 %v1388
        %1450 = vmatprep.subr.mxu0 0.0
        %1451 = vmatpush1.msra.mxu0 %v1389
        %1452 = vmatprep.subr.mxu0 0.0
        %1453 = vmatpush1.msra.mxu0 %v1390
        %1454 = vmatprep.subr.mxu0 0.0
        %1455 = vmatpush1.msra.mxu0 %v1391
        %1456 = vmatprep.subr.mxu0 0.0
        %1457 = vmatpush1.msra.mxu0 %v1392
        %1458 = vmatprep.subr.mxu0 0.0
        %1459 = vmatpush1.msra.mxu0 %v1393
        %1460 = vmatprep.subr.mxu0 0.0
        %1461 = vmatpush1.msra.mxu0 %v1394
        %1462 = vmatprep.subr.mxu0 0.0
        %1463 = vmatpush1.msra.mxu0 %v1395
        %1464 = vmatprep.subr.mxu0 0.0
        %1465 = vmatpush1.msra.mxu0 %v1396
        %1466 = vmatprep.subr.mxu0 0.0
        %1467 = vmatpush1.msra.mxu0 %v1397
        %1468 = vmatprep.subr.mxu0 0.0
        %1469 = vmatpush1.msra.mxu0 %v1398
        %1470 = vmatprep.mubr.f32.mxu0 %v1336
        %1471 = vmatmul.mubr.f32.gmra.mrb[0].mxu0 %v1335
        %v1472 = vpop.f32.mrb[0].mxu0
        %v1473 = vadd.f32 %v1404, %v1472
        %v1474 = vpop.f32.mrb[0].mxu0
        %1475 = vmatprep.mubr.f32.mxu0 %v1338
        %1476 = vmatmul.mubr.f32.gmra.mrb[0].mxu0 %v1337
        %v1477 = vpop.f32.mrb[0].mxu0
        %v1478 = vadd.f32 %v1404, %v1477
        %v1479 = vpop.f32.mrb[0].mxu0
        %1480 = vmatprep.mubr.f32.mxu0 %v1340
        %1481 = vmatmul.mubr.f32.gmra.mrb[0].mxu0 %v1339
        %v1482 = vpop.f32.mrb[0].mxu0
        %v1483 = vadd.f32 %v1404, %v1482
        %v1484 = vpop.f32.mrb[0].mxu0
        %1485 = vmatprep.mubr.f32.mxu0 %v1342
        %1486 = vmatmul.mubr.f32.gmra.mrb[0].mxu0 %v1341
        %v1487 = vpop.f32.mrb[0].mxu0
        %v1488 = vadd.f32 %v1404, %v1487
        %v1489 = vpop.f32.mrb[0].mxu0
        %1490 = vmatprep.mubr.f32.mxu0 %v1344
        %1491 = vmatmul.mubr.f32.gmra.mrb[0].mxu0 %v1343
        %v1492 = vpop.f32.mrb[0].mxu0
        %v1493 = vadd.f32 %v1404, %v1492
        %v1494 = vpop.f32.mrb[0].mxu0
        %1495 = vmatprep.mubr.f32.mxu0 %v1346
        %1496 = vmatmul.mubr.f32.gmra.mrb[0].mxu0 %v1345
        %v1497 = vpop.f32.mrb[0].mxu0
        %v1498 = vadd.f32 %v1404, %v1497
        %v1499 = vpop.f32.mrb[0].mxu0
        %1500 = vmatprep.mubr.f32.mxu0 %v1348
        %1501 = vmatmul.mubr.f32.gmra.mrb[0].mxu0 %v1347
        %v1502 = vpop.f32.mrb[0].mxu0
        %v1503 = vadd.f32 %v1404, %v1502
        %v1504 = vpop.f32.mrb[0].mxu0
        %1505 = vmatprep.mubr.f32.mxu0 %v1350
        %1506 = vmatmul.mubr.f32.gmra.mrb[0].mxu0 %v1349
        %v1507 = vpop.f32.mrb[0].mxu0
        %v1508 = vadd.f32 %v1404, %v1507
        %v1509 = vpop.f32.mrb[0].mxu0
        %1510 = vmatprep.mubr.f32.mxu0 %v1352
        %1511 = vmatmul.mubr.f32.gmra.mrb[0].mxu0 %v1351
        %v1512 = vpop.f32.mrb[0].mxu0
        %v1513 = vadd.f32 %v1404, %v1512
        %v1514 = vpop.f32.mrb[0].mxu0
        %1515 = vmatprep.mubr.f32.mxu0 %v1354
        %1516 = vmatmul.mubr.f32.gmra.mrb[0].mxu0 %v1353
        %v1517 = vpop.f32.mrb[0].mxu0
        %v1518 = vadd.f32 %v1404, %v1517
        %v1519 = vpop.f32.mrb[0].mxu0
        %1520 = vmatprep.mubr.f32.mxu0 %v1356
        %1521 = vmatmul.mubr.f32.gmra.mrb[0].mxu0 %v1355
        %v1522 = vpop.f32.mrb[0].mxu0
        %v1523 = vadd.f32 %v1404, %v1522
        %v1524 = vpop.f32.mrb[0].mxu0
        %1525 = vmatprep.mubr.f32.mxu0 %v1358
        %1526 = vmatmul.mubr.f32.gmra.mrb[0].mxu0 %v1357
        %v1527 = vpop.f32.mrb[0].mxu0
        %v1528 = vadd.f32 %v1404, %v1527
        %v1529 = vpop.f32.mrb[0].mxu0
        %1530 = vmatprep.mubr.f32.mxu0 %v1360
        %1531 = vmatmul.mubr.f32.gmra.mrb[0].mxu0 %v1359
        %v1532 = vpop.f32.mrb[0].mxu0
        %v1533 = vadd.f32 %v1404, %v1532
        %v1534 = vpop.f32.mrb[0].mxu0
        %1535 = vmatprep.mubr.f32.mxu0 %v1362
        %1536 = vmatmul.mubr.f32.gmra.mrb[0].mxu0 %v1361
        %v1537 = vpop.f32.mrb[0].mxu0
        %v1538 = vadd.f32 %v1404, %v1537
        %v1539 = vpop.f32.mrb[0].mxu0
        %1540 = vmatprep.mubr.f32.mxu0 %v1364
        %1541 = vmatmul.mubr.f32.gmra.mrb[0].mxu0 %v1363
        %v1542 = vpop.f32.mrb[0].mxu0
        %v1543 = vadd.f32 %v1404, %v1542
        %v1544 = vpop.f32.mrb[0].mxu0
        %1545 = vmatprep.mubr.f32.mxu0 %v1366
        %1546 = vmatmul.mubr.f32.gmra.mrb[0].mxu0 %v1365
        %v1547 = vpop.f32.mrb[0].mxu0
        %v1548 = vadd.f32 %v1404, %v1547
        %v1549 = vpop.f32.mrb[0].mxu0
        %1550 = vdwg.mxu0
        %1551 = vmatprep.subr.mxu0 %v1131
        %1552 = vmatpush1.msra.mxu0 %v1130
        %1553 = vmatprep.subr.mxu0 %v1133
        %1554 = vmatpush1.msra.mxu0 %v1132
        %1555 = vmatprep.subr.mxu0 %v1135
        %1556 = vmatpush1.msra.mxu0 %v1134
        %1557 = vmatprep.subr.mxu0 %v1137
        %1558 = vmatpush1.msra.mxu0 %v1136
        %1559 = vmatprep.subr.mxu0 %v1139
        %1560 = vmatpush1.msra.mxu0 %v1138
        %1561 = vmatprep.subr.mxu0 %v1141
        %1562 = vmatpush1.msra.mxu0 %v1140
        %1563 = vmatprep.subr.mxu0 %v1143
        %1564 = vmatpush1.msra.mxu0 %v1142
        %1565 = vmatprep.subr.mxu0 %v1145
        %1566 = vmatpush1.msra.mxu0 %v1144
        %1567 = vmatprep.subr.mxu0 %v1147
        %1568 = vmatpush1.msra.mxu0 %v1146
        %1569 = vmatprep.subr.mxu0 %v1149
        %1570 = vmatpush1.msra.mxu0 %v1148
        %1571 = vmatprep.subr.mxu0 %v1151
        %1572 = vmatpush1.msra.mxu0 %v1150
        %1573 = vmatprep.subr.mxu0 %v1153
        %1574 = vmatpush1.msra.mxu0 %v1152
        %1575 = vmatprep.subr.mxu0 %v1155
        %1576 = vmatpush1.msra.mxu0 %v1154
        %1577 = vmatprep.subr.mxu0 %v1157
        %1578 = vmatpush1.msra.mxu0 %v1156
        %1579 = vmatprep.subr.mxu0 %v1159
        %1580 = vmatpush1.msra.mxu0 %v1158
        %1581 = vmatprep.subr.mxu0 %v1161
        %1582 = vmatpush1.msra.mxu0 %v1160
        %1583 = vmatprep.subr.mxu0 0.0
        %1584 = vmatpush1.msra.mxu0 0.0
        %1585 = vmatprep.subr.mxu0 0.0
        %1586 = vmatpush1.msra.mxu0 0.0
        %1587 = vmatprep.subr.mxu0 0.0
        %1588 = vmatpush1.msra.mxu0 0.0
        %1589 = vmatprep.subr.mxu0 0.0
        %1590 = vmatpush1.msra.mxu0 0.0
        %1591 = vmatprep.subr.mxu0 0.0
        %1592 = vmatpush1.msra.mxu0 0.0
        %1593 = vmatprep.subr.mxu0 0.0
        %1594 = vmatpush1.msra.mxu0 0.0
        %1595 = vmatprep.subr.mxu0 0.0
        %1596 = vmatpush1.msra.mxu0 0.0
        %1597 = vmatprep.subr.mxu0 0.0
        %1598 = vmatpush1.msra.mxu0 0.0
        %1599 = vmatprep.subr.mxu0 0.0
        %1600 = vmatpush1.msra.mxu0 0.0
        %1601 = vmatprep.subr.mxu0 0.0
        %1602 = vmatpush1.msra.mxu0 0.0
        %1603 = vmatprep.subr.mxu0 0.0
        %1604 = vmatpush1.msra.mxu0 0.0
        %1605 = vmatprep.subr.mxu0 0.0
        %1606 = vmatpush1.msra.mxu0 0.0
        %1607 = vmatprep.subr.mxu0 0.0
        %1608 = vmatpush1.msra.mxu0 0.0
        %1609 = vmatprep.subr.mxu0 0.0
        %1610 = vmatpush1.msra.mxu0 0.0
        %1611 = vmatprep.subr.mxu0 0.0
        %1612 = vmatpush1.msra.mxu0 0.0
        %1613 = vmatprep.subr.mxu0 0.0
        %1614 = vmatpush1.msra.mxu0 0.0
        %1615 = vmatprep.mubr.f32.mxu0 0.0
        %1616 = vmatmul.mubr.f32.gmra.mrb[0].mxu0 %v1114
        %v1617 = vpop.f32.mrb[0].mxu0
        %v1618 = vadd.f32 %v1167, %v1617
        %v1619 = vpop.f32.mrb[0].mxu0
        %v1620 = vadd.f32 %v1171, %v1619
        %1621 = vmatprep.mubr.f32.mxu0 0.0
        %1622 = vmatmul.mubr.f32.gmra.mrb[0].mxu0 %v1115
        %v1623 = vpop.f32.mrb[0].mxu0
        %v1624 = vadd.f32 %v1167, %v1623
        %v1625 = vpop.f32.mrb[0].mxu0
        %v1626 = vadd.f32 %v1171, %v1625
        %1627 = vmatprep.mubr.f32.mxu0 0.0
        %1628 = vmatmul.mubr.f32.gmra.mrb[0].mxu0 %v1116
        %v1629 = vpop.f32.mrb[0].mxu0
        %v1630 = vadd.f32 %v1167, %v1629
        %v1631 = vpop.f32.mrb[0].mxu0
        %v1632 = vadd.f32 %v1171, %v1631
        %1633 = vmatprep.mubr.f32.mxu0 0.0
        %1634 = vmatmul.mubr.f32.gmra.mrb[0].mxu0 %v1117
        %v1635 = vpop.f32.mrb[0].mxu0
        %v1636 = vadd.f32 %v1167, %v1635
        %v1637 = vpop.f32.mrb[0].mxu0
        %v1638 = vadd.f32 %v1171, %v1637
        %1639 = vmatprep.mubr.f32.mxu0 0.0
        %1640 = vmatmul.mubr.f32.gmra.mrb[0].mxu0 %v1118
        %v1641 = vpop.f32.mrb[0].mxu0
        %v1642 = vadd.f32 %v1167, %v1641
        %v1643 = vpop.f32.mrb[0].mxu0
        %v1644 = vadd.f32 %v1171, %v1643
        %1645 = vmatprep.mubr.f32.mxu0 0.0
        %1646 = vmatmul.mubr.f32.gmra.mrb[0].mxu0 %v1119
        %v1647 = vpop.f32.mrb[0].mxu0
        %v1648 = vadd.f32 %v1167, %v1647
        %v1649 = vpop.f32.mrb[0].mxu0
        %v1650 = vadd.f32 %v1171, %v1649
        %1651 = vmatprep.mubr.f32.mxu0 0.0
        %1652 = vmatmul.mubr.f32.gmra.mrb[0].mxu0 %v1120
        %v1653 = vpop.f32.mrb[0].mxu0
        %v1654 = vadd.f32 %v1167, %v1653
        %v1655 = vpop.f32.mrb[0].mxu0
        %v1656 = vadd.f32 %v1171, %v1655
        %1657 = vmatprep.mubr.f32.mxu0 0.0
        %1658 = vmatmul.mubr.f32.gmra.mrb[0].mxu0 %v1121
        %v1659 = vpop.f32.mrb[0].mxu0
        %v1660 = vadd.f32 %v1167, %v1659
        %v1661 = vpop.f32.mrb[0].mxu0
        %v1662 = vadd.f32 %v1171, %v1661
        %1663 = vmatprep.mubr.f32.mxu0 0.0
        %1664 = vmatmul.mubr.f32.gmra.mrb[0].mxu0 %v1122
        %v1665 = vpop.f32.mrb[0].mxu0
        %v1666 = vadd.f32 %v1167, %v1665
        %v1667 = vpop.f32.mrb[0].mxu0
        %v1668 = vadd.f32 %v1171, %v1667
        %1669 = vmatprep.mubr.f32.mxu0 0.0
        %1670 = vmatmul.mubr.f32.gmra.mrb[0].mxu0 %v1123
        %v1671 = vpop.f32.mrb[0].mxu0
        %v1672 = vadd.f32 %v1167, %v1671
        %v1673 = vpop.f32.mrb[0].mxu0
        %v1674 = vadd.f32 %v1171, %v1673
        %1675 = vmatprep.mubr.f32.mxu0 0.0
        %1676 = vmatmul.mubr.f32.gmra.mrb[0].mxu0 %v1124
        %v1677 = vpop.f32.mrb[0].mxu0
        %v1678 = vadd.f32 %v1167, %v1677
        %v1679 = vpop.f32.mrb[0].mxu0
        %v1680 = vadd.f32 %v1171, %v1679
        %1681 = vmatprep.mubr.f32.mxu0 0.0
        %1682 = vmatmul.mubr.f32.gmra.mrb[0].mxu0 %v1125
        %v1683 = vpop.f32.mrb[0].mxu0
        %v1684 = vadd.f32 %v1167, %v1683
        %v1685 = vpop.f32.mrb[0].mxu0
        %v1686 = vadd.f32 %v1171, %v1685
        %1687 = vmatprep.mubr.f32.mxu0 0.0
        %1688 = vmatmul.mubr.f32.gmra.mrb[0].mxu0 %v1126
        %v1689 = vpop.f32.mrb[0].mxu0
        %v1690 = vadd.f32 %v1167, %v1689
        %v1691 = vpop.f32.mrb[0].mxu0
        %v1692 = vadd.f32 %v1171, %v1691
        %1693 = vmatprep.mubr.f32.mxu0 0.0
        %1694 = vmatmul.mubr.f32.gmra.mrb[0].mxu0 %v1127
        %v1695 = vpop.f32.mrb[0].mxu0
        %v1696 = vadd.f32 %v1167, %v1695
        %v1697 = vpop.f32.mrb[0].mxu0
        %v1698 = vadd.f32 %v1171, %v1697
        %1699 = vmatprep.mubr.f32.mxu0 0.0
        %1700 = vmatmul.mubr.f32.gmra.mrb[0].mxu0 %v1128
        %v1701 = vpop.f32.mrb[0].mxu0
        %v1702 = vadd.f32 %v1167, %v1701
        %v1703 = vpop.f32.mrb[0].mxu0
        %v1704 = vadd.f32 %v1171, %v1703
        %1705 = vmatprep.mubr.f32.mxu0 0.0
        %1706 = vmatmul.mubr.f32.gmra.mrb[0].mxu0 %v1129
        %v1707 = vpop.f32.mrb[0].mxu0
        %v1708 = vadd.f32 %v1167, %v1707
        %v1709 = vpop.f32.mrb[0].mxu0
        %v1710 = vadd.f32 %v1171, %v1709
        %1711 = vdwg.mxu0
        %v1712 = vmax.f32 %v1618, 0.0
        %v1713 = vmax.f32 %v1620, 0.0
        %v1714 = vmax.f32 %v1624, 0.0
        %v1715 = vmax.f32 %v1626, 0.0
        %v1716 = vmax.f32 %v1630, 0.0
        %v1717 = vmax.f32 %v1632, 0.0
        %v1718 = vmax.f32 %v1636, 0.0
        %v1719 = vmax.f32 %v1638, 0.0
        %v1720 = vmax.f32 %v1642, 0.0
        %v1721 = vmax.f32 %v1644, 0.0
        %v1722 = vmax.f32 %v1648, 0.0
        %v1723 = vmax.f32 %v1650, 0.0
        %v1724 = vmax.f32 %v1654, 0.0
        %v1725 = vmax.f32 %v1656, 0.0
        %v1726 = vmax.f32 %v1660, 0.0
        %v1727 = vmax.f32 %v1662, 0.0
        %v1728 = vmax.f32 %v1666, 0.0
        %v1729 = vmax.f32 %v1668, 0.0
        %v1730 = vmax.f32 %v1672, 0.0
        %v1731 = vmax.f32 %v1674, 0.0
        %v1732 = vmax.f32 %v1678, 0.0
        %v1733 = vmax.f32 %v1680, 0.0
        %v1734 = vmax.f32 %v1684, 0.0
        %v1735 = vmax.f32 %v1686, 0.0
        %v1736 = vmax.f32 %v1690, 0.0
        %v1737 = vmax.f32 %v1692, 0.0
        %v1738 = vmax.f32 %v1696, 0.0
        %v1739 = vmax.f32 %v1698, 0.0
        %v1740 = vmax.f32 %v1702, 0.0
        %v1741 = vmax.f32 %v1704, 0.0
        %v1742 = vmax.f32 %v1708, 0.0
        %v1743 = vmax.f32 %v1710, 0.0
        %1744 = vmatprep.subr.mxu0 0.0
        %1745 = vmatpush1.msra.mxu0 %v1367
        %1746 = vmatprep.subr.mxu0 0.0
        %1747 = vmatpush1.msra.mxu0 %v1368
        %1748 = vmatprep.subr.mxu0 0.0
        %1749 = vmatpush1.msra.mxu0 %v1369
        %1750 = vmatprep.subr.mxu0 0.0
        %1751 = vmatpush1.msra.mxu0 %v1370
        %1752 = vmatprep.subr.mxu0 0.0
        %1753 = vmatpush1.msra.mxu0 %v1371
        %1754 = vmatprep.subr.mxu0 0.0
        %1755 = vmatpush1.msra.mxu0 %v1372
        %1756 = vmatprep.subr.mxu0 0.0
        %1757 = vmatpush1.msra.mxu0 %v1373
        %1758 = vmatprep.subr.mxu0 0.0
        %1759 = vmatpush1.msra.mxu0 %v1374
        %1760 = vmatprep.subr.mxu0 0.0
        %1761 = vmatpush1.msra.mxu0 %v1375
        %1762 = vmatprep.subr.mxu0 0.0
        %1763 = vmatpush1.msra.mxu0 %v1376
        %1764 = vmatprep.subr.mxu0 0.0
        %1765 = vmatpush1.msra.mxu0 %v1377
        %1766 = vmatprep.subr.mxu0 0.0
        %1767 = vmatpush1.msra.mxu0 %v1378
        %1768 = vmatprep.subr.mxu0 0.0
        %1769 = vmatpush1.msra.mxu0 %v1379
        %1770 = vmatprep.subr.mxu0 0.0
        %1771 = vmatpush1.msra.mxu0 %v1380
        %1772 = vmatprep.subr.mxu0 0.0
        %1773 = vmatpush1.msra.mxu0 %v1381
        %1774 = vmatprep.subr.mxu0 0.0
        %1775 = vmatpush1.msra.mxu0 %v1382
        %1776 = vmatprep.subr.mxu0 0.0
        %1777 = vmatpush1.msra.mxu0 %v1383
        %1778 = vmatprep.subr.mxu0 0.0
        %1779 = vmatpush1.msra.mxu0 %v1384
        %1780 = vmatprep.subr.mxu0 0.0
        %1781 = vmatpush1.msra.mxu0 %v1385
        %1782 = vmatprep.subr.mxu0 0.0
        %1783 = vmatpush1.msra.mxu0 %v1386
        %1784 = vmatprep.subr.mxu0 0.0
        %1785 = vmatpush1.msra.mxu0 %v1387
        %1786 = vmatprep.subr.mxu0 0.0
        %1787 = vmatpush1.msra.mxu0 %v1388
        %1788 = vmatprep.subr.mxu0 0.0
        %1789 = vmatpush1.msra.mxu0 %v1389
        %1790 = vmatprep.subr.mxu0 0.0
        %1791 = vmatpush1.msra.mxu0 %v1390
        %1792 = vmatprep.subr.mxu0 0.0
        %1793 = vmatpush1.msra.mxu0 %v1391
        %1794 = vmatprep.subr.mxu0 0.0
        %1795 = vmatpush1.msra.mxu0 %v1392
        %1796 = vmatprep.subr.mxu0 0.0
        %1797 = vmatpush1.msra.mxu0 %v1393
        %1798 = vmatprep.subr.mxu0 0.0
        %1799 = vmatpush1.msra.mxu0 %v1394
        %1800 = vmatprep.subr.mxu0 0.0
        %1801 = vmatpush1.msra.mxu0 %v1395
        %1802 = vmatprep.subr.mxu0 0.0
        %1803 = vmatpush1.msra.mxu0 %v1396
        %1804 = vmatprep.subr.mxu0 0.0
        %1805 = vmatpush1.msra.mxu0 %v1397
        %1806 = vmatprep.subr.mxu0 0.0
        %1807 = vmatpush1.msra.mxu0 %v1398
        %1808 = vmatprep.mubr.f32.mxu0 %v1713
        %1809 = vmatmul.mubr.f32.gmra.mrb[0].mxu0 %v1712
        %v1810 = vpop.f32.mrb[0].mxu0
        %v1811 = vadd.f32 %v1404, %v1810
        %v1812 = vpop.f32.mrb[0].mxu0
        %1813 = vmatprep.mubr.f32.mxu0 %v1715
        %1814 = vmatmul.mubr.f32.gmra.mrb[0].mxu0 %v1714
        %v1815 = vpop.f32.mrb[0].mxu0
        %v1816 = vadd.f32 %v1404, %v1815
        %v1817 = vpop.f32.mrb[0].mxu0
        %1818 = vmatprep.mubr.f32.mxu0 %v1717
        %1819 = vmatmul.mubr.f32.gmra.mrb[0].mxu0 %v1716
        %v1820 = vpop.f32.mrb[0].mxu0
        %v1821 = vadd.f32 %v1404, %v1820
        %v1822 = vpop.f32.mrb[0].mxu0
        %1823 = vmatprep.mubr.f32.mxu0 %v1719
        %1824 = vmatmul.mubr.f32.gmra.mrb[0].mxu0 %v1718
        %v1825 = vpop.f32.mrb[0].mxu0
        %v1826 = vadd.f32 %v1404, %v1825
        %v1827 = vpop.f32.mrb[0].mxu0
        %1828 = vmatprep.mubr.f32.mxu0 %v1721
        %1829 = vmatmul.mubr.f32.gmra.mrb[0].mxu0 %v1720
        %v1830 = vpop.f32.mrb[0].mxu0
        %v1831 = vadd.f32 %v1404, %v1830
        %v1832 = vpop.f32.mrb[0].mxu0
        %1833 = vmatprep.mubr.f32.mxu0 %v1723
        %1834 = vmatmul.mubr.f32.gmra.mrb[0].mxu0 %v1722
        %v1835 = vpop.f32.mrb[0].mxu0
        %v1836 = vadd.f32 %v1404, %v1835
        %v1837 = vpop.f32.mrb[0].mxu0
        %1838 = vmatprep.mubr.f32.mxu0 %v1725
        %1839 = vmatmul.mubr.f32.gmra.mrb[0].mxu0 %v1724
        %v1840 = vpop.f32.mrb[0].mxu0
        %v1841 = vadd.f32 %v1404, %v1840
        %v1842 = vpop.f32.mrb[0].mxu0
        %1843 = vmatprep.mubr.f32.mxu0 %v1727
        %1844 = vmatmul.mubr.f32.gmra.mrb[0].mxu0 %v1726
        %v1845 = vpop.f32.mrb[0].mxu0
        %v1846 = vadd.f32 %v1404, %v1845
        %v1847 = vpop.f32.mrb[0].mxu0
        %1848 = vmatprep.mubr.f32.mxu0 %v1729
        %1849 = vmatmul.mubr.f32.gmra.mrb[0].mxu0 %v1728
        %v1850 = vpop.f32.mrb[0].mxu0
        %v1851 = vadd.f32 %v1404, %v1850
        %v1852 = vpop.f32.mrb[0].mxu0
        %1853 = vmatprep.mubr.f32.mxu0 %v1731
        %1854 = vmatmul.mubr.f32.gmra.mrb[0].mxu0 %v1730
        %v1855 = vpop.f32.mrb[0].mxu0
        %v1856 = vadd.f32 %v1404, %v1855
        %v1857 = vpop.f32.mrb[0].mxu0
        %1858 = vmatprep.mubr.f32.mxu0 %v1733
        %1859 = vmatmul.mubr.f32.gmra.mrb[0].mxu0 %v1732
        %v1860 = vpop.f32.mrb[0].mxu0
        %v1861 = vadd.f32 %v1404, %v1860
        %v1862 = vpop.f32.mrb[0].mxu0
        %1863 = vmatprep.mubr.f32.mxu0 %v1735
        %1864 = vmatmul.mubr.f32.gmra.mrb[0].mxu0 %v1734
        %v1865 = vpop.f32.mrb[0].mxu0
        %v1866 = vadd.f32 %v1404, %v1865
        %v1867 = vpop.f32.mrb[0].mxu0
        %1868 = vmatprep.mubr.f32.mxu0 %v1737
        %1869 = vmatmul.mubr.f32.gmra.mrb[0].mxu0 %v1736
        %v1870 = vpop.f32.mrb[0].mxu0
        %v1871 = vadd.f32 %v1404, %v1870
        %v1872 = vpop.f32.mrb[0].mxu0
        %1873 = vmatprep.mubr.f32.mxu0 %v1739
        %1874 = vmatmul.mubr.f32.gmra.mrb[0].mxu0 %v1738
        %v1875 = vpop.f32.mrb[0].mxu0
        %v1876 = vadd.f32 %v1404, %v1875
        %v1877 = vpop.f32.mrb[0].mxu0
        %1878 = vmatprep.mubr.f32.mxu0 %v1741
        %1879 = vmatmul.mubr.f32.gmra.mrb[0].mxu0 %v1740
        %v1880 = vpop.f32.mrb[0].mxu0
        %v1881 = vadd.f32 %v1404, %v1880
        %v1882 = vpop.f32.mrb[0].mxu0
        %1883 = vmatprep.mubr.f32.mxu0 %v1743
        %1884 = vmatmul.mubr.f32.gmra.mrb[0].mxu0 %v1742
        %v1885 = vpop.f32.mrb[0].mxu0
        %v1886 = vadd.f32 %v1404, %v1885
        %v1887 = vpop.f32.mrb[0].mxu0
        %1888 = vdwg.mxu0
        %v1889 = vld [vmem:[#allocation13] sm:$0xff]
        %v1890 = vld [vmem:[#allocation13 + $0x8] sm:$0xff]
        %v1891 = vld [vmem:[#allocation13 + $0x10] sm:$0xff]
        %v1892 = vld [vmem:[#allocation13 + $0x18] sm:$0xff]
        %v1893 = vld [vmem:[#allocation13 + $0x20] sm:$0xff]
        %v1894 = vld [vmem:[#allocation13 + $0x28] sm:$0xff]
        %v1895 = vld [vmem:[#allocation13 + $0x30] sm:$0xff]
        %v1896 = vld [vmem:[#allocation13 + $0x38] sm:$0xff]
        %v1897 = vld [vmem:[#allocation13 + $0x40] sm:$0xff]
        %v1898 = vld [vmem:[#allocation13 + $0x48] sm:$0xff]
        %v1899 = vld [vmem:[#allocation13 + $0x50] sm:$0xff]
        %v1900 = vld [vmem:[#allocation13 + $0x58] sm:$0xff]
        %v1901 = vld [vmem:[#allocation13 + $0x60] sm:$0xff]
        %v1902 = vld [vmem:[#allocation13 + $0x68] sm:$0xff]
        %v1903 = vld [vmem:[#allocation13 + $0x70] sm:$0xff]
        %v1904 = vld [vmem:[#allocation13 + $0x78] sm:$0xff]
        %v1905 = vld [vmem:[%s14 + $0x5] sm:$0x1]
        %v1907 = vlaneseq
        %v1908 = vshrl.u32 %v1907, 7
        %v1909 = vsub.s32 0, %v1908
        %v1910 = vrot.slane %v1905, %v1909
        %1912 = vmatprep.subr.mxu0 0.0
        %1913 = vmatpush1.msra.mxu0 %v1889
        %1914 = vmatprep.subr.mxu0 0.0
        %1915 = vmatpush1.msra.mxu0 %v1890
        %1916 = vmatprep.subr.mxu0 0.0
        %1917 = vmatpush1.msra.mxu0 %v1891
        %1918 = vmatprep.subr.mxu0 0.0
        %1919 = vmatpush1.msra.mxu0 %v1892
        %1920 = vmatprep.subr.mxu0 0.0
        %1921 = vmatpush1.msra.mxu0 %v1893
        %1922 = vmatprep.subr.mxu0 0.0
        %1923 = vmatpush1.msra.mxu0 %v1894
        %1924 = vmatprep.subr.mxu0 0.0
        %1925 = vmatpush1.msra.mxu0 %v1895
        %1926 = vmatprep.subr.mxu0 0.0
        %1927 = vmatpush1.msra.mxu0 %v1896
        %1928 = vmatprep.subr.mxu0 0.0
        %1929 = vmatpush1.msra.mxu0 %v1897
        %1930 = vmatprep.subr.mxu0 0.0
        %1931 = vmatpush1.msra.mxu0 %v1898
        %1932 = vmatprep.subr.mxu0 0.0
        %1933 = vmatpush1.msra.mxu0 %v1899
        %1934 = vmatprep.subr.mxu0 0.0
        %1935 = vmatpush1.msra.mxu0 %v1900
        %1936 = vmatprep.subr.mxu0 0.0
        %1937 = vmatpush1.msra.mxu0 %v1901
        %1938 = vmatprep.subr.mxu0 0.0
        %1939 = vmatpush1.msra.mxu0 %v1902
        %1940 = vmatprep.subr.mxu0 0.0
        %1941 = vmatpush1.msra.mxu0 %v1903
        %1942 = vmatprep.subr.mxu0 0.0
        %1943 = vmatpush1.msra.mxu0 %v1904
        %1944 = vmatprep.subr.mxu0 0.0
        %1945 = vmatpush1.msra.mxu0 0.0
        %1946 = vmatprep.subr.mxu0 0.0
        %1947 = vmatpush1.msra.mxu0 0.0
        %1948 = vmatprep.subr.mxu0 0.0
        %1949 = vmatpush1.msra.mxu0 0.0
        %1950 = vmatprep.subr.mxu0 0.0
        %1951 = vmatpush1.msra.mxu0 0.0
        %1952 = vmatprep.subr.mxu0 0.0
        %1953 = vmatpush1.msra.mxu0 0.0
        %1954 = vmatprep.subr.mxu0 0.0
        %1955 = vmatpush1.msra.mxu0 0.0
        %1956 = vmatprep.subr.mxu0 0.0
        %1957 = vmatpush1.msra.mxu0 0.0
        %1958 = vmatprep.subr.mxu0 0.0
        %1959 = vmatpush1.msra.mxu0 0.0
        %1960 = vmatprep.subr.mxu0 0.0
        %1961 = vmatpush1.msra.mxu0 0.0
        %1962 = vmatprep.subr.mxu0 0.0
        %1963 = vmatpush1.msra.mxu0 0.0
        %1964 = vmatprep.subr.mxu0 0.0
        %1965 = vmatpush1.msra.mxu0 0.0
        %1966 = vmatprep.subr.mxu0 0.0
        %1967 = vmatpush1.msra.mxu0 0.0
        %1968 = vmatprep.subr.mxu0 0.0
        %1969 = vmatpush1.msra.mxu0 0.0
        %1970 = vmatprep.subr.mxu0 0.0
        %1971 = vmatpush1.msra.mxu0 0.0
        %1972 = vmatprep.subr.mxu0 0.0
        %1973 = vmatpush1.msra.mxu0 0.0
        %1974 = vmatprep.subr.mxu0 0.0
        %1975 = vmatpush1.msra.mxu0 0.0
        %1976 = vmatprep.mubr.f32.mxu0 0.0
        %1977 = vmatmul.mubr.f32.gmra.mrb[0].mxu0 %v1473
        %v1978 = vpop.f32.mrb[0].mxu0
        %v1979 = vadd.f32 %v1910, %v1978
        %v1980 = vpop.f32.mrb[0].mxu0
        %1981 = vmatprep.mubr.f32.mxu0 0.0
        %1982 = vmatmul.mubr.f32.gmra.mrb[0].mxu0 %v1478
        %v1983 = vpop.f32.mrb[0].mxu0
        %v1984 = vadd.f32 %v1910, %v1983
        %v1985 = vpop.f32.mrb[0].mxu0
        %1986 = vmatprep.mubr.f32.mxu0 0.0
        %1987 = vmatmul.mubr.f32.gmra.mrb[0].mxu0 %v1483
        %v1988 = vpop.f32.mrb[0].mxu0
        %v1989 = vadd.f32 %v1910, %v1988
        %v1990 = vpop.f32.mrb[0].mxu0
        %1991 = vmatprep.mubr.f32.mxu0 0.0
        %1992 = vmatmul.mubr.f32.gmra.mrb[0].mxu0 %v1488
        %v1993 = vpop.f32.mrb[0].mxu0
        %v1994 = vadd.f32 %v1910, %v1993
        %v1995 = vpop.f32.mrb[0].mxu0
        %1996 = vmatprep.mubr.f32.mxu0 0.0
        %1997 = vmatmul.mubr.f32.gmra.mrb[0].mxu0 %v1493
        %v1998 = vpop.f32.mrb[0].mxu0
        %v1999 = vadd.f32 %v1910, %v1998
        %v2000 = vpop.f32.mrb[0].mxu0
        %2001 = vmatprep.mubr.f32.mxu0 0.0
        %2002 = vmatmul.mubr.f32.gmra.mrb[0].mxu0 %v1498
        %v2003 = vpop.f32.mrb[0].mxu0
        %v2004 = vadd.f32 %v1910, %v2003
        %v2005 = vpop.f32.mrb[0].mxu0
        %2006 = vmatprep.mubr.f32.mxu0 0.0
        %2007 = vmatmul.mubr.f32.gmra.mrb[0].mxu0 %v1503
        %v2008 = vpop.f32.mrb[0].mxu0
        %v2009 = vadd.f32 %v1910, %v2008
        %v2010 = vpop.f32.mrb[0].mxu0
        %2011 = vmatprep.mubr.f32.mxu0 0.0
        %2012 = vmatmul.mubr.f32.gmra.mrb[0].mxu0 %v1508
        %v2013 = vpop.f32.mrb[0].mxu0
        %v2014 = vadd.f32 %v1910, %v2013
        %v2015 = vpop.f32.mrb[0].mxu0
        %2016 = vmatprep.mubr.f32.mxu0 0.0
        %2017 = vmatmul.mubr.f32.gmra.mrb[0].mxu0 %v1513
        %v2018 = vpop.f32.mrb[0].mxu0
        %v2019 = vadd.f32 %v1910, %v2018
        %v2020 = vpop.f32.mrb[0].mxu0
        %2021 = vmatprep.mubr.f32.mxu0 0.0
        %2022 = vmatmul.mubr.f32.gmra.mrb[0].mxu0 %v1518
        %v2023 = vpop.f32.mrb[0].mxu0
        %v2024 = vadd.f32 %v1910, %v2023
        %v2025 = vpop.f32.mrb[0].mxu0
        %2026 = vmatprep.mubr.f32.mxu0 0.0
        %2027 = vmatmul.mubr.f32.gmra.mrb[0].mxu0 %v1523
        %v2028 = vpop.f32.mrb[0].mxu0
        %v2029 = vadd.f32 %v1910, %v2028
        %v2030 = vpop.f32.mrb[0].mxu0
        %2031 = vmatprep.mubr.f32.mxu0 0.0
        %2032 = vmatmul.mubr.f32.gmra.mrb[0].mxu0 %v1528
        %v2033 = vpop.f32.mrb[0].mxu0
        %v2034 = vadd.f32 %v1910, %v2033
        %v2035 = vpop.f32.mrb[0].mxu0
        %2036 = vmatprep.mubr.f32.mxu0 0.0
        %2037 = vmatmul.mubr.f32.gmra.mrb[0].mxu0 %v1533
        %v2038 = vpop.f32.mrb[0].mxu0
        %v2039 = vadd.f32 %v1910, %v2038
        %v2040 = vpop.f32.mrb[0].mxu0
        %2041 = vmatprep.mubr.f32.mxu0 0.0
        %2042 = vmatmul.mubr.f32.gmra.mrb[0].mxu0 %v1538
        %v2043 = vpop.f32.mrb[0].mxu0
        %v2044 = vadd.f32 %v1910, %v2043
        %v2045 = vpop.f32.mrb[0].mxu0
        %2046 = vmatprep.mubr.f32.mxu0 0.0
        %2047 = vmatmul.mubr.f32.gmra.mrb[0].mxu0 %v1543
        %v2048 = vpop.f32.mrb[0].mxu0
        %v2049 = vadd.f32 %v1910, %v2048
        %v2050 = vpop.f32.mrb[0].mxu0
        %2051 = vmatprep.mubr.f32.mxu0 0.0
        %2052 = vmatmul.mubr.f32.gmra.mrb[0].mxu0 %v1548
        %v2053 = vpop.f32.mrb[0].mxu0
        %v2054 = vadd.f32 %v1910, %v2053
        %v2055 = vpop.f32.mrb[0].mxu0
        %2056 = vdwg.mxu0
        %v2057 = vld [vmem:[#allocation14] sm:$0xff]
        %v2058 = vld [vmem:[#allocation14 + $0x8] sm:$0xff]
        %v2059 = vld [vmem:[#allocation14 + $0x10] sm:$0xff]
        %v2060 = vld [vmem:[#allocation14 + $0x18] sm:$0xff]
        %v2061 = vld [vmem:[#allocation14 + $0x20] sm:$0xff]
        %v2062 = vld [vmem:[#allocation14 + $0x28] sm:$0xff]
        %v2063 = vld [vmem:[#allocation14 + $0x30] sm:$0xff]
        %v2064 = vld [vmem:[#allocation14 + $0x38] sm:$0xff]
        %v2065 = vld [vmem:[#allocation14 + $0x40] sm:$0xff]
        %v2066 = vld [vmem:[#allocation14 + $0x48] sm:$0xff]
        %v2067 = vld [vmem:[#allocation14 + $0x50] sm:$0xff]
        %v2068 = vld [vmem:[#allocation14 + $0x58] sm:$0xff]
        %v2069 = vld [vmem:[#allocation14 + $0x60] sm:$0xff]
        %v2070 = vld [vmem:[#allocation14 + $0x68] sm:$0xff]
        %v2071 = vld [vmem:[#allocation14 + $0x70] sm:$0xff]
        %v2072 = vld [vmem:[#allocation14 + $0x78] sm:$0xff]
        %v2073 = vld [vmem:[%s14 + $0x6] sm:$0x1]
        %v2075 = vlaneseq
        %v2076 = vshrl.u32 %v2075, 7
        %v2077 = vsub.s32 0, %v2076
        %v2078 = vrot.slane %v2073, %v2077
        %2080 = vmatprep.subr.mxu0 0.0
        %2081 = vmatpush1.msra.mxu0 %v2057
        %2082 = vmatprep.subr.mxu0 0.0
        %2083 = vmatpush1.msra.mxu0 %v2058
        %2084 = vmatprep.subr.mxu0 0.0
        %2085 = vmatpush1.msra.mxu0 %v2059
        %2086 = vmatprep.subr.mxu0 0.0
        %2087 = vmatpush1.msra.mxu0 %v2060
        %2088 = vmatprep.subr.mxu0 0.0
        %2089 = vmatpush1.msra.mxu0 %v2061
        %2090 = vmatprep.subr.mxu0 0.0
        %2091 = vmatpush1.msra.mxu0 %v2062
        %2092 = vmatprep.subr.mxu0 0.0
        %2093 = vmatpush1.msra.mxu0 %v2063
        %2094 = vmatprep.subr.mxu0 0.0
        %2095 = vmatpush1.msra.mxu0 %v2064
        %2096 = vmatprep.subr.mxu0 0.0
        %2097 = vmatpush1.msra.mxu0 %v2065
        %2098 = vmatprep.subr.mxu0 0.0
        %2099 = vmatpush1.msra.mxu0 %v2066
        %2100 = vmatprep.subr.mxu0 0.0
        %2101 = vmatpush1.msra.mxu0 %v2067
        %2102 = vmatprep.subr.mxu0 0.0
        %2103 = vmatpush1.msra.mxu0 %v2068
        %2104 = vmatprep.subr.mxu0 0.0
        %2105 = vmatpush1.msra.mxu0 %v2069
        %2106 = vmatprep.subr.mxu0 0.0
        %2107 = vmatpush1.msra.mxu0 %v2070
        %2108 = vmatprep.subr.mxu0 0.0
        %2109 = vmatpush1.msra.mxu0 %v2071
        %2110 = vmatprep.subr.mxu0 0.0
        %2111 = vmatpush1.msra.mxu0 %v2072
        %2112 = vmatprep.subr.mxu0 0.0
        %2113 = vmatpush1.msra.mxu0 0.0
        %2114 = vmatprep.subr.mxu0 0.0
        %2115 = vmatpush1.msra.mxu0 0.0
        %2116 = vmatprep.subr.mxu0 0.0
        %2117 = vmatpush1.msra.mxu0 0.0
        %2118 = vmatprep.subr.mxu0 0.0
        %2119 = vmatpush1.msra.mxu0 0.0
        %2120 = vmatprep.subr.mxu0 0.0
        %2121 = vmatpush1.msra.mxu0 0.0
        %2122 = vmatprep.subr.mxu0 0.0
        %2123 = vmatpush1.msra.mxu0 0.0
        %2124 = vmatprep.subr.mxu0 0.0
        %2125 = vmatpush1.msra.mxu0 0.0
        %2126 = vmatprep.subr.mxu0 0.0
        %2127 = vmatpush1.msra.mxu0 0.0
        %2128 = vmatprep.subr.mxu0 0.0
        %2129 = vmatpush1.msra.mxu0 0.0
        %2130 = vmatprep.subr.mxu0 0.0
        %2131 = vmatpush1.msra.mxu0 0.0
        %2132 = vmatprep.subr.mxu0 0.0
        %2133 = vmatpush1.msra.mxu0 0.0
        %2134 = vmatprep.subr.mxu0 0.0
        %2135 = vmatpush1.msra.mxu0 0.0
        %2136 = vmatprep.subr.mxu0 0.0
        %2137 = vmatpush1.msra.mxu0 0.0
        %2138 = vmatprep.subr.mxu0 0.0
        %2139 = vmatpush1.msra.mxu0 0.0
        %2140 = vmatprep.subr.mxu0 0.0
        %2141 = vmatpush1.msra.mxu0 0.0
        %2142 = vmatprep.subr.mxu0 0.0
        %2143 = vmatpush1.msra.mxu0 0.0
        %2144 = vmatprep.mubr.f32.mxu0 0.0
        %2145 = vmatmul.mubr.f32.gmra.mrb[0].mxu0 %v1979
        %v2146 = vpop.f32.mrb[0].mxu0
        %v2147 = vadd.f32 %v2078, %v2146
        %v2148 = vpop.f32.mrb[0].mxu0
        %2149 = vmatprep.mubr.f32.mxu0 0.0
        %2150 = vmatmul.mubr.f32.gmra.mrb[0].mxu0 %v1984
        %v2151 = vpop.f32.mrb[0].mxu0
        %v2152 = vadd.f32 %v2078, %v2151
        %v2153 = vpop.f32.mrb[0].mxu0
        %2154 = vmatprep.mubr.f32.mxu0 0.0
        %2155 = vmatmul.mubr.f32.gmra.mrb[0].mxu0 %v1989
        %v2156 = vpop.f32.mrb[0].mxu0
        %v2157 = vadd.f32 %v2078, %v2156
        %v2158 = vpop.f32.mrb[0].mxu0
        %2159 = vmatprep.mubr.f32.mxu0 0.0
        %2160 = vmatmul.mubr.f32.gmra.mrb[0].mxu0 %v1994
        %v2161 = vpop.f32.mrb[0].mxu0
        %v2162 = vadd.f32 %v2078, %v2161
        %v2163 = vpop.f32.mrb[0].mxu0
        %2164 = vmatprep.mubr.f32.mxu0 0.0
        %2165 = vmatmul.mubr.f32.gmra.mrb[0].mxu0 %v1999
        %v2166 = vpop.f32.mrb[0].mxu0
        %v2167 = vadd.f32 %v2078, %v2166
        %v2168 = vpop.f32.mrb[0].mxu0
        %2169 = vmatprep.mubr.f32.mxu0 0.0
        %2170 = vmatmul.mubr.f32.gmra.mrb[0].mxu0 %v2004
        %v2171 = vpop.f32.mrb[0].mxu0
        %v2172 = vadd.f32 %v2078, %v2171
        %v2173 = vpop.f32.mrb[0].mxu0
        %2174 = vmatprep.mubr.f32.mxu0 0.0
        %2175 = vmatmul.mubr.f32.gmra.mrb[0].mxu0 %v2009
        %v2176 = vpop.f32.mrb[0].mxu0
        %v2177 = vadd.f32 %v2078, %v2176
        %v2178 = vpop.f32.mrb[0].mxu0
        %2179 = vmatprep.mubr.f32.mxu0 0.0
        %2180 = vmatmul.mubr.f32.gmra.mrb[0].mxu0 %v2014
        %v2181 = vpop.f32.mrb[0].mxu0
        %v2182 = vadd.f32 %v2078, %v2181
        %v2183 = vpop.f32.mrb[0].mxu0
        %2184 = vmatprep.mubr.f32.mxu0 0.0
        %2185 = vmatmul.mubr.f32.gmra.mrb[0].mxu0 %v2019
        %v2186 = vpop.f32.mrb[0].mxu0
        %v2187 = vadd.f32 %v2078, %v2186
        %v2188 = vpop.f32.mrb[0].mxu0
        %2189 = vmatprep.mubr.f32.mxu0 0.0
        %2190 = vmatmul.mubr.f32.gmra.mrb[0].mxu0 %v2024
        %v2191 = vpop.f32.mrb[0].mxu0
        %v2192 = vadd.f32 %v2078, %v2191
        %v2193 = vpop.f32.mrb[0].mxu0
        %2194 = vmatprep.mubr.f32.mxu0 0.0
        %2195 = vmatmul.mubr.f32.gmra.mrb[0].mxu0 %v2029
        %v2196 = vpop.f32.mrb[0].mxu0
        %v2197 = vadd.f32 %v2078, %v2196
        %v2198 = vpop.f32.mrb[0].mxu0
        %2199 = vmatprep.mubr.f32.mxu0 0.0
        %2200 = vmatmul.mubr.f32.gmra.mrb[0].mxu0 %v2034
        %v2201 = vpop.f32.mrb[0].mxu0
        %v2202 = vadd.f32 %v2078, %v2201
        %v2203 = vpop.f32.mrb[0].mxu0
        %2204 = vmatprep.mubr.f32.mxu0 0.0
        %2205 = vmatmul.mubr.f32.gmra.mrb[0].mxu0 %v2039
        %v2206 = vpop.f32.mrb[0].mxu0
        %v2207 = vadd.f32 %v2078, %v2206
        %v2208 = vpop.f32.mrb[0].mxu0
        %2209 = vmatprep.mubr.f32.mxu0 0.0
        %2210 = vmatmul.mubr.f32.gmra.mrb[0].mxu0 %v2044
        %v2211 = vpop.f32.mrb[0].mxu0
        %v2212 = vadd.f32 %v2078, %v2211
        %v2213 = vpop.f32.mrb[0].mxu0
        %2214 = vmatprep.mubr.f32.mxu0 0.0
        %2215 = vmatmul.mubr.f32.gmra.mrb[0].mxu0 %v2049
        %v2216 = vpop.f32.mrb[0].mxu0
        %v2217 = vadd.f32 %v2078, %v2216
        %v2218 = vpop.f32.mrb[0].mxu0
        %2219 = vmatprep.mubr.f32.mxu0 0.0
        %2220 = vmatmul.mubr.f32.gmra.mrb[0].mxu0 %v2054
        %v2221 = vpop.f32.mrb[0].mxu0
        %v2222 = vadd.f32 %v2078, %v2221
        %v2223 = vpop.f32.mrb[0].mxu0
        %2224 = vdwg.mxu0
        %v2225 = vsub.f32 %v1811, %v2147
        %v2226 = vsub.f32 %v1816, %v2152
        %v2227 = vsub.f32 %v1821, %v2157
        %v2228 = vsub.f32 %v1826, %v2162
        %v2229 = vsub.f32 %v1831, %v2167
        %v2230 = vsub.f32 %v1836, %v2172
        %v2231 = vsub.f32 %v1841, %v2177
        %v2232 = vsub.f32 %v1846, %v2182
        %v2233 = vsub.f32 %v1851, %v2187
        %v2234 = vsub.f32 %v1856, %v2192
        %v2235 = vsub.f32 %v1861, %v2197
        %v2236 = vsub.f32 %v1866, %v2202
        %v2237 = vsub.f32 %v1871, %v2207
        %v2238 = vsub.f32 %v1876, %v2212
        %v2239 = vsub.f32 %v1881, %v2217
        %v2240 = vsub.f32 %v1886, %v2222
        %v2241 = vsub.f32 %v1473, %v2147
        %v2242 = vsub.f32 %v1478, %v2152
        %v2243 = vsub.f32 %v1483, %v2157
        %v2244 = vsub.f32 %v1488, %v2162
        %v2245 = vsub.f32 %v1493, %v2167
        %v2246 = vsub.f32 %v1498, %v2172
        %v2247 = vsub.f32 %v1503, %v2177
        %v2248 = vsub.f32 %v1508, %v2182
        %v2249 = vsub.f32 %v1513, %v2187
        %v2250 = vsub.f32 %v1518, %v2192
        %v2251 = vsub.f32 %v1523, %v2197
        %v2252 = vsub.f32 %v1528, %v2202
        %v2253 = vsub.f32 %v1533, %v2207
        %v2254 = vsub.f32 %v1538, %v2212
        %v2255 = vsub.f32 %v1543, %v2217
        %v2256 = vsub.f32 %v1548, %v2222
        %v2257 = vld [vmem:[#allocation16] sm:$0xff]
        %v2258 = vld [vmem:[#allocation16 + $0x8] sm:$0xff]
        %v2259 = vld [vmem:[#allocation16 + $0x10] sm:$0xff]
        %v2260 = vld [vmem:[#allocation16 + $0x18] sm:$0xff]
        %v2261 = vld [vmem:[#allocation16 + $0x20] sm:$0xff]
        %v2262 = vld [vmem:[#allocation16 + $0x28] sm:$0xff]
        %v2263 = vld [vmem:[#allocation16 + $0x30] sm:$0xff]
        %v2264 = vld [vmem:[#allocation16 + $0x38] sm:$0xff]
        %v2265 = vld [vmem:[#allocation16 + $0x40] sm:$0xff]
        %v2266 = vld [vmem:[#allocation16 + $0x48] sm:$0xff]
        %v2267 = vld [vmem:[#allocation16 + $0x50] sm:$0xff]
        %v2268 = vld [vmem:[#allocation16 + $0x58] sm:$0xff]
        %v2269 = vld [vmem:[#allocation16 + $0x60] sm:$0xff]
        %v2270 = vld [vmem:[#allocation16 + $0x68] sm:$0xff]
        %v2271 = vld [vmem:[#allocation16 + $0x70] sm:$0xff]
        %v2272 = vld [vmem:[#allocation16 + $0x78] sm:$0xff]
        %v2273 = vld [vmem:[#allocation16 + $0x80] sm:$0xff]
        %v2274 = vld [vmem:[#allocation16 + $0x88] sm:$0xff]
        %v2275 = vld [vmem:[#allocation16 + $0x90] sm:$0xff]
        %v2276 = vld [vmem:[#allocation16 + $0x98] sm:$0xff]
        %v2277 = vld [vmem:[#allocation16 + $0xa0] sm:$0xff]
        %v2278 = vld [vmem:[#allocation16 + $0xa8] sm:$0xff]
        %v2279 = vld [vmem:[#allocation16 + $0xb0] sm:$0xff]
        %v2280 = vld [vmem:[#allocation16 + $0xb8] sm:$0xff]
        %v2281 = vld [vmem:[#allocation16 + $0xc0] sm:$0xff]
        %v2282 = vld [vmem:[#allocation16 + $0xc8] sm:$0xff]
        %v2283 = vld [vmem:[#allocation16 + $0xd0] sm:$0xff]
        %v2284 = vld [vmem:[#allocation16 + $0xd8] sm:$0xff]
        %v2285 = vld [vmem:[#allocation16 + $0xe0] sm:$0xff]
        %v2286 = vld [vmem:[#allocation16 + $0xe8] sm:$0xff]
        %v2287 = vld [vmem:[#allocation16 + $0xf0] sm:$0xff]
        %v2288 = vld [vmem:[#allocation16 + $0xf8] sm:$0xff]
        %v2289 = vld [vmem:[#allocation17] sm:$0xff]
        %v2290 = vld [vmem:[#allocation17 + $0x8] sm:$0xff]
        %v2291 = vld [vmem:[#allocation17 + $0x10] sm:$0xff]
        %v2292 = vld [vmem:[#allocation17 + $0x18] sm:$0xff]
        %v2293 = vld [vmem:[#allocation17 + $0x20] sm:$0xff]
        %v2294 = vld [vmem:[#allocation17 + $0x28] sm:$0xff]
        %v2295 = vld [vmem:[#allocation17 + $0x30] sm:$0xff]
        %v2296 = vld [vmem:[#allocation17 + $0x38] sm:$0xff]
        %v2297 = vld [vmem:[#allocation17 + $0x40] sm:$0xff]
        %v2298 = vld [vmem:[#allocation17 + $0x48] sm:$0xff]
        %v2299 = vld [vmem:[#allocation17 + $0x50] sm:$0xff]
        %v2300 = vld [vmem:[#allocation17 + $0x58] sm:$0xff]
        %v2301 = vld [vmem:[#allocation17 + $0x60] sm:$0xff]
        %v2302 = vld [vmem:[#allocation17 + $0x68] sm:$0xff]
        %v2303 = vld [vmem:[#allocation17 + $0x70] sm:$0xff]
        %v2304 = vld [vmem:[#allocation17 + $0x78] sm:$0xff]
        %v2305 = vld [vmem:[#allocation17 + $0x80] sm:$0xff]
        %v2306 = vld [vmem:[#allocation17 + $0x88] sm:$0xff]
        %v2307 = vld [vmem:[#allocation17 + $0x90] sm:$0xff]
        %v2308 = vld [vmem:[#allocation17 + $0x98] sm:$0xff]
        %v2309 = vld [vmem:[#allocation17 + $0xa0] sm:$0xff]
        %v2310 = vld [vmem:[#allocation17 + $0xa8] sm:$0xff]
        %v2311 = vld [vmem:[#allocation17 + $0xb0] sm:$0xff]
        %v2312 = vld [vmem:[#allocation17 + $0xb8] sm:$0xff]
        %v2313 = vld [vmem:[#allocation17 + $0xc0] sm:$0xff]
        %v2314 = vld [vmem:[#allocation17 + $0xc8] sm:$0xff]
        %v2315 = vld [vmem:[#allocation17 + $0xd0] sm:$0xff]
        %v2316 = vld [vmem:[#allocation17 + $0xd8] sm:$0xff]
        %v2317 = vld [vmem:[#allocation17 + $0xe0] sm:$0xff]
        %v2318 = vld [vmem:[#allocation17 + $0xe8] sm:$0xff]
        %v2319 = vld [vmem:[#allocation17 + $0xf0] sm:$0xff]
        %v2320 = vld [vmem:[#allocation17 + $0xf8] sm:$0xff]
        %2321 = vmatprep.subr.mxu0 %v2290
        %2322 = vmatpush1.msra.mxu0 %v2289
        %2323 = vmatprep.subr.mxu0 %v2292
        %2324 = vmatpush1.msra.mxu0 %v2291
        %2325 = vmatprep.subr.mxu0 %v2294
        %2326 = vmatpush1.msra.mxu0 %v2293
        %2327 = vmatprep.subr.mxu0 %v2296
        %2328 = vmatpush1.msra.mxu0 %v2295
        %2329 = vmatprep.subr.mxu0 %v2298
        %2330 = vmatpush1.msra.mxu0 %v2297
        %2331 = vmatprep.subr.mxu0 %v2300
        %2332 = vmatpush1.msra.mxu0 %v2299
        %2333 = vmatprep.subr.mxu0 %v2302
        %2334 = vmatpush1.msra.mxu0 %v2301
        %2335 = vmatprep.subr.mxu0 %v2304
        %2336 = vmatpush1.msra.mxu0 %v2303
        %2337 = vmatprep.subr.mxu0 %v2306
        %2338 = vmatpush1.msra.mxu0 %v2305
        %2339 = vmatprep.subr.mxu0 %v2308
        %2340 = vmatpush1.msra.mxu0 %v2307
        %2341 = vmatprep.subr.mxu0 %v2310
        %2342 = vmatpush1.msra.mxu0 %v2309
        %2343 = vmatprep.subr.mxu0 %v2312
        %2344 = vmatpush1.msra.mxu0 %v2311
        %2345 = vmatprep.subr.mxu0 %v2314
        %2346 = vmatpush1.msra.mxu0 %v2313
        %2347 = vmatprep.subr.mxu0 %v2316
        %2348 = vmatpush1.msra.mxu0 %v2315
        %2349 = vmatprep.subr.mxu0 %v2318
        %2350 = vmatpush1.msra.mxu0 %v2317
        %2351 = vmatprep.subr.mxu0 %v2320
        %2352 = vmatpush1.msra.mxu0 %v2319
        %2353 = vmatprep.subr.mxu0 0.0
        %2354 = vmatpush1.msra.mxu0 0.0
        %2355 = vmatprep.subr.mxu0 0.0
        %2356 = vmatpush1.msra.mxu0 0.0
        %2357 = vmatprep.subr.mxu0 0.0
        %2358 = vmatpush1.msra.mxu0 0.0
        %2359 = vmatprep.subr.mxu0 0.0
        %2360 = vmatpush1.msra.mxu0 0.0
        %2361 = vmatprep.subr.mxu0 0.0
        %2362 = vmatpush1.msra.mxu0 0.0
        %2363 = vmatprep.subr.mxu0 0.0
        %2364 = vmatpush1.msra.mxu0 0.0
        %2365 = vmatprep.subr.mxu0 0.0
        %2366 = vmatpush1.msra.mxu0 0.0
        %2367 = vmatprep.subr.mxu0 0.0
        %2368 = vmatpush1.msra.mxu0 0.0
        %2369 = vmatprep.subr.mxu0 0.0
        %2370 = vmatpush1.msra.mxu0 0.0
        %2371 = vmatprep.subr.mxu0 0.0
        %2372 = vmatpush1.msra.mxu0 0.0
        %2373 = vmatprep.subr.mxu0 0.0
        %2374 = vmatpush1.msra.mxu0 0.0
        %2375 = vmatprep.subr.mxu0 0.0
        %2376 = vmatpush1.msra.mxu0 0.0
        %2377 = vmatprep.subr.mxu0 0.0
        %2378 = vmatpush1.msra.mxu0 0.0
        %2379 = vmatprep.subr.mxu0 0.0
        %2380 = vmatpush1.msra.mxu0 0.0
        %2381 = vmatprep.subr.mxu0 0.0
        %2382 = vmatpush1.msra.mxu0 0.0
        %2383 = vmatprep.subr.mxu0 0.0
        %2384 = vmatpush1.msra.mxu0 0.0
        %2385 = vmatprep.mubr.f32.mxu0 0.0
        %2386 = vmatmul.mubr.f32.gmra.mrb[0].mxu0 %v2241
        %v2387 = vpop.f32.mrb[0].mxu0
        %v2388 = vadd.f32 0.0, %v2387
        %v2389 = vpop.f32.mrb[0].mxu0
        %v2390 = vadd.f32 0.0, %v2389
        %2391 = vmatprep.mubr.f32.mxu0 0.0
        %2392 = vmatmul.mubr.f32.gmra.mrb[0].mxu0 %v2242
        %v2393 = vpop.f32.mrb[0].mxu0
        %v2394 = vadd.f32 0.0, %v2393
        %v2395 = vpop.f32.mrb[0].mxu0
        %v2396 = vadd.f32 0.0, %v2395
        %2397 = vmatprep.mubr.f32.mxu0 0.0
        %2398 = vmatmul.mubr.f32.gmra.mrb[0].mxu0 %v2243
        %v2399 = vpop.f32.mrb[0].mxu0
        %v2400 = vadd.f32 0.0, %v2399
        %v2401 = vpop.f32.mrb[0].mxu0
        %v2402 = vadd.f32 0.0, %v2401
        %2403 = vmatprep.mubr.f32.mxu0 0.0
        %2404 = vmatmul.mubr.f32.gmra.mrb[0].mxu0 %v2244
        %v2405 = vpop.f32.mrb[0].mxu0
        %v2406 = vadd.f32 0.0, %v2405
        %v2407 = vpop.f32.mrb[0].mxu0
        %v2408 = vadd.f32 0.0, %v2407
        %2409 = vmatprep.mubr.f32.mxu0 0.0
        %2410 = vmatmul.mubr.f32.gmra.mrb[0].mxu0 %v2245
        %v2411 = vpop.f32.mrb[0].mxu0
        %v2412 = vadd.f32 0.0, %v2411
        %v2413 = vpop.f32.mrb[0].mxu0
        %v2414 = vadd.f32 0.0, %v2413
        %2415 = vmatprep.mubr.f32.mxu0 0.0
        %2416 = vmatmul.mubr.f32.gmra.mrb[0].mxu0 %v2246
        %v2417 = vpop.f32.mrb[0].mxu0
        %v2418 = vadd.f32 0.0, %v2417
        %v2419 = vpop.f32.mrb[0].mxu0
        %v2420 = vadd.f32 0.0, %v2419
        %2421 = vmatprep.mubr.f32.mxu0 0.0
        %2422 = vmatmul.mubr.f32.gmra.mrb[0].mxu0 %v2247
        %v2423 = vpop.f32.mrb[0].mxu0
        %v2424 = vadd.f32 0.0, %v2423
        %v2425 = vpop.f32.mrb[0].mxu0
        %v2426 = vadd.f32 0.0, %v2425
        %2427 = vmatprep.mubr.f32.mxu0 0.0
        %2428 = vmatmul.mubr.f32.gmra.mrb[0].mxu0 %v2248
        %v2429 = vpop.f32.mrb[0].mxu0
        %v2430 = vadd.f32 0.0, %v2429
        %v2431 = vpop.f32.mrb[0].mxu0
        %v2432 = vadd.f32 0.0, %v2431
        %2433 = vmatprep.mubr.f32.mxu0 0.0
        %2434 = vmatmul.mubr.f32.gmra.mrb[0].mxu0 %v2249
        %v2435 = vpop.f32.mrb[0].mxu0
        %v2436 = vadd.f32 0.0, %v2435
        %v2437 = vpop.f32.mrb[0].mxu0
        %v2438 = vadd.f32 0.0, %v2437
        %2439 = vmatprep.mubr.f32.mxu0 0.0
        %2440 = vmatmul.mubr.f32.gmra.mrb[0].mxu0 %v2250
        %v2441 = vpop.f32.mrb[0].mxu0
        %v2442 = vadd.f32 0.0, %v2441
        %v2443 = vpop.f32.mrb[0].mxu0
        %v2444 = vadd.f32 0.0, %v2443
        %2445 = vmatprep.mubr.f32.mxu0 0.0
        %2446 = vmatmul.mubr.f32.gmra.mrb[0].mxu0 %v2251
        %v2447 = vpop.f32.mrb[0].mxu0
        %v2448 = vadd.f32 0.0, %v2447
        %v2449 = vpop.f32.mrb[0].mxu0
        %v2450 = vadd.f32 0.0, %v2449
        %2451 = vmatprep.mubr.f32.mxu0 0.0
        %2452 = vmatmul.mubr.f32.gmra.mrb[0].mxu0 %v2252
        %v2453 = vpop.f32.mrb[0].mxu0
        %v2454 = vadd.f32 0.0, %v2453
        %v2455 = vpop.f32.mrb[0].mxu0
        %v2456 = vadd.f32 0.0, %v2455
        %2457 = vmatprep.mubr.f32.mxu0 0.0
        %2458 = vmatmul.mubr.f32.gmra.mrb[0].mxu0 %v2253
        %v2459 = vpop.f32.mrb[0].mxu0
        %v2460 = vadd.f32 0.0, %v2459
        %v2461 = vpop.f32.mrb[0].mxu0
        %v2462 = vadd.f32 0.0, %v2461
        %2463 = vmatprep.mubr.f32.mxu0 0.0
        %2464 = vmatmul.mubr.f32.gmra.mrb[0].mxu0 %v2254
        %v2465 = vpop.f32.mrb[0].mxu0
        %v2466 = vadd.f32 0.0, %v2465
        %v2467 = vpop.f32.mrb[0].mxu0
        %v2468 = vadd.f32 0.0, %v2467
        %2469 = vmatprep.mubr.f32.mxu0 0.0
        %2470 = vmatmul.mubr.f32.gmra.mrb[0].mxu0 %v2255
        %v2471 = vpop.f32.mrb[0].mxu0
        %v2472 = vadd.f32 0.0, %v2471
        %v2473 = vpop.f32.mrb[0].mxu0
        %v2474 = vadd.f32 0.0, %v2473
        %2475 = vmatprep.mubr.f32.mxu0 0.0
        %2476 = vmatmul.mubr.f32.gmra.mrb[0].mxu0 %v2256
        %v2477 = vpop.f32.mrb[0].mxu0
        %v2478 = vadd.f32 0.0, %v2477
        %v2479 = vpop.f32.mrb[0].mxu0
        %v2480 = vadd.f32 0.0, %v2479
        %2481 = vdwg.mxu0
        %2482 = vmatprep.subr.mxu0 %v2258
        %2483 = vmatpush1.msra.mxu0 %v2257
        %2484 = vmatprep.subr.mxu0 %v2260
        %2485 = vmatpush1.msra.mxu0 %v2259
        %2486 = vmatprep.subr.mxu0 %v2262
        %2487 = vmatpush1.msra.mxu0 %v2261
        %2488 = vmatprep.subr.mxu0 %v2264
        %2489 = vmatpush1.msra.mxu0 %v2263
        %2490 = vmatprep.subr.mxu0 %v2266
        %2491 = vmatpush1.msra.mxu0 %v2265
        %2492 = vmatprep.subr.mxu0 %v2268
        %2493 = vmatpush1.msra.mxu0 %v2267
        %2494 = vmatprep.subr.mxu0 %v2270
        %2495 = vmatpush1.msra.mxu0 %v2269
        %2496 = vmatprep.subr.mxu0 %v2272
        %2497 = vmatpush1.msra.mxu0 %v2271
        %2498 = vmatprep.subr.mxu0 %v2274
        %2499 = vmatpush1.msra.mxu0 %v2273
        %2500 = vmatprep.subr.mxu0 %v2276
        %2501 = vmatpush1.msra.mxu0 %v2275
        %2502 = vmatprep.subr.mxu0 %v2278
        %2503 = vmatpush1.msra.mxu0 %v2277
        %2504 = vmatprep.subr.mxu0 %v2280
        %2505 = vmatpush1.msra.mxu0 %v2279
        %2506 = vmatprep.subr.mxu0 %v2282
        %2507 = vmatpush1.msra.mxu0 %v2281
        %2508 = vmatprep.subr.mxu0 %v2284
        %2509 = vmatpush1.msra.mxu0 %v2283
        %2510 = vmatprep.subr.mxu0 %v2286
        %2511 = vmatpush1.msra.mxu0 %v2285
        %2512 = vmatprep.subr.mxu0 %v2288
        %2513 = vmatpush1.msra.mxu0 %v2287
        %2514 = vmatprep.subr.mxu0 0.0
        %2515 = vmatpush1.msra.mxu0 0.0
        %2516 = vmatprep.subr.mxu0 0.0
        %2517 = vmatpush1.msra.mxu0 0.0
        %2518 = vmatprep.subr.mxu0 0.0
        %2519 = vmatpush1.msra.mxu0 0.0
        %2520 = vmatprep.subr.mxu0 0.0
        %2521 = vmatpush1.msra.mxu0 0.0
        %2522 = vmatprep.subr.mxu0 0.0
        %2523 = vmatpush1.msra.mxu0 0.0
        %2524 = vmatprep.subr.mxu0 0.0
        %2525 = vmatpush1.msra.mxu0 0.0
        %2526 = vmatprep.subr.mxu0 0.0
        %2527 = vmatpush1.msra.mxu0 0.0
        %2528 = vmatprep.subr.mxu0 0.0
        %2529 = vmatpush1.msra.mxu0 0.0
        %2530 = vmatprep.subr.mxu0 0.0
        %2531 = vmatpush1.msra.mxu0 0.0
        %2532 = vmatprep.subr.mxu0 0.0
        %2533 = vmatpush1.msra.mxu0 0.0
        %2534 = vmatprep.subr.mxu0 0.0
        %2535 = vmatpush1.msra.mxu0 0.0
        %2536 = vmatprep.subr.mxu0 0.0
        %2537 = vmatpush1.msra.mxu0 0.0
        %2538 = vmatprep.subr.mxu0 0.0
        %2539 = vmatpush1.msra.mxu0 0.0
        %2540 = vmatprep.subr.mxu0 0.0
        %2541 = vmatpush1.msra.mxu0 0.0
        %2542 = vmatprep.subr.mxu0 0.0
        %2543 = vmatpush1.msra.mxu0 0.0
        %2544 = vmatprep.subr.mxu0 0.0
        %2545 = vmatpush1.msra.mxu0 0.0
        %2546 = vmatprep.mubr.f32.mxu0 0.0
        %2547 = vmatmul.mubr.f32.gmra.mrb[0].mxu0 %v2225
        %v2548 = vpop.f32.mrb[0].mxu0
        %v2549 = vadd.f32 %v2388, %v2548
        %v2550 = vpop.f32.mrb[0].mxu0
        %v2551 = vadd.f32 %v2390, %v2550
        %2552 = vmatprep.mubr.f32.mxu0 0.0
        %2553 = vmatmul.mubr.f32.gmra.mrb[0].mxu0 %v2226
        %v2554 = vpop.f32.mrb[0].mxu0
        %v2555 = vadd.f32 %v2394, %v2554
        %v2556 = vpop.f32.mrb[0].mxu0
        %v2557 = vadd.f32 %v2396, %v2556
        %2558 = vmatprep.mubr.f32.mxu0 0.0
        %2559 = vmatmul.mubr.f32.gmra.mrb[0].mxu0 %v2227
        %v2560 = vpop.f32.mrb[0].mxu0
        %v2561 = vadd.f32 %v2400, %v2560
        %v2562 = vpop.f32.mrb[0].mxu0
        %v2563 = vadd.f32 %v2402, %v2562
        %2564 = vmatprep.mubr.f32.mxu0 0.0
        %2565 = vmatmul.mubr.f32.gmra.mrb[0].mxu0 %v2228
        %v2566 = vpop.f32.mrb[0].mxu0
        %v2567 = vadd.f32 %v2406, %v2566
        %v2568 = vpop.f32.mrb[0].mxu0
        %v2569 = vadd.f32 %v2408, %v2568
        %2570 = vmatprep.mubr.f32.mxu0 0.0
        %2571 = vmatmul.mubr.f32.gmra.mrb[0].mxu0 %v2229
        %v2572 = vpop.f32.mrb[0].mxu0
        %v2573 = vadd.f32 %v2412, %v2572
        %v2574 = vpop.f32.mrb[0].mxu0
        %v2575 = vadd.f32 %v2414, %v2574
        %2576 = vmatprep.mubr.f32.mxu0 0.0
        %2577 = vmatmul.mubr.f32.gmra.mrb[0].mxu0 %v2230
        %v2578 = vpop.f32.mrb[0].mxu0
        %v2579 = vadd.f32 %v2418, %v2578
        %v2580 = vpop.f32.mrb[0].mxu0
        %v2581 = vadd.f32 %v2420, %v2580
        %2582 = vmatprep.mubr.f32.mxu0 0.0
        %2583 = vmatmul.mubr.f32.gmra.mrb[0].mxu0 %v2231
        %v2584 = vpop.f32.mrb[0].mxu0
        %v2585 = vadd.f32 %v2424, %v2584
        %v2586 = vpop.f32.mrb[0].mxu0
        %v2587 = vadd.f32 %v2426, %v2586
        %2588 = vmatprep.mubr.f32.mxu0 0.0
        %2589 = vmatmul.mubr.f32.gmra.mrb[0].mxu0 %v2232
        %v2590 = vpop.f32.mrb[0].mxu0
        %v2591 = vadd.f32 %v2430, %v2590
        %v2592 = vpop.f32.mrb[0].mxu0
        %v2593 = vadd.f32 %v2432, %v2592
        %2594 = vmatprep.mubr.f32.mxu0 0.0
        %2595 = vmatmul.mubr.f32.gmra.mrb[0].mxu0 %v2233
        %v2596 = vpop.f32.mrb[0].mxu0
        %v2597 = vadd.f32 %v2436, %v2596
        %v2598 = vpop.f32.mrb[0].mxu0
        %v2599 = vadd.f32 %v2438, %v2598
        %2600 = vmatprep.mubr.f32.mxu0 0.0
        %2601 = vmatmul.mubr.f32.gmra.mrb[0].mxu0 %v2234
        %v2602 = vpop.f32.mrb[0].mxu0
        %v2603 = vadd.f32 %v2442, %v2602
        %v2604 = vpop.f32.mrb[0].mxu0
        %v2605 = vadd.f32 %v2444, %v2604
        %2606 = vmatprep.mubr.f32.mxu0 0.0
        %2607 = vmatmul.mubr.f32.gmra.mrb[0].mxu0 %v2235
        %v2608 = vpop.f32.mrb[0].mxu0
        %v2609 = vadd.f32 %v2448, %v2608
        %v2610 = vpop.f32.mrb[0].mxu0
        %v2611 = vadd.f32 %v2450, %v2610
        %2612 = vmatprep.mubr.f32.mxu0 0.0
        %2613 = vmatmul.mubr.f32.gmra.mrb[0].mxu0 %v2236
        %v2614 = vpop.f32.mrb[0].mxu0
        %v2615 = vadd.f32 %v2454, %v2614
        %v2616 = vpop.f32.mrb[0].mxu0
        %v2617 = vadd.f32 %v2456, %v2616
        %2618 = vmatprep.mubr.f32.mxu0 0.0
        %2619 = vmatmul.mubr.f32.gmra.mrb[0].mxu0 %v2237
        %v2620 = vpop.f32.mrb[0].mxu0
        %v2621 = vadd.f32 %v2460, %v2620
        %v2622 = vpop.f32.mrb[0].mxu0
        %v2623 = vadd.f32 %v2462, %v2622
        %2624 = vmatprep.mubr.f32.mxu0 0.0
        %2625 = vmatmul.mubr.f32.gmra.mrb[0].mxu0 %v2238
        %v2626 = vpop.f32.mrb[0].mxu0
        %v2627 = vadd.f32 %v2466, %v2626
        %v2628 = vpop.f32.mrb[0].mxu0
        %v2629 = vadd.f32 %v2468, %v2628
        %2630 = vmatprep.mubr.f32.mxu0 0.0
        %2631 = vmatmul.mubr.f32.gmra.mrb[0].mxu0 %v2239
        %v2632 = vpop.f32.mrb[0].mxu0
        %v2633 = vadd.f32 %v2472, %v2632
        %v2634 = vpop.f32.mrb[0].mxu0
        %v2635 = vadd.f32 %v2474, %v2634
        %2636 = vmatprep.mubr.f32.mxu0 0.0
        %2637 = vmatmul.mubr.f32.gmra.mrb[0].mxu0 %v2240
        %v2638 = vpop.f32.mrb[0].mxu0
        %v2639 = vadd.f32 %v2478, %v2638
        %v2640 = vpop.f32.mrb[0].mxu0
        %v2641 = vadd.f32 %v2480, %v2640
        %2642 = vdwg.mxu0
        %v2643 = vld [vmem:[%s14 + $0x7] sm:$0x3]
        %v2645 = vlaneseq
        %v2646 = vshrl.u32 %v2645, 7
        %v2647 = vsub.s32 0, %v2646
        %v2648 = vrot.slane %v2643, %v2647
        %v2649 = vlaneseq
        %v2650 = vshrl.u32 %v2649, 7
        %v2651 = vsub.s32 1, %v2650
        %v2652 = vrot.slane %v2643, %v2651
        %v2655 = vadd.f32 %v2549, %v2648
        %v2656 = vadd.f32 %v2551, %v2652
        %v2657 = vadd.f32 %v2555, %v2648
        %v2658 = vadd.f32 %v2557, %v2652
        %v2659 = vadd.f32 %v2561, %v2648
        %v2660 = vadd.f32 %v2563, %v2652
        %v2661 = vadd.f32 %v2567, %v2648
        %v2662 = vadd.f32 %v2569, %v2652
        %v2663 = vadd.f32 %v2573, %v2648
        %v2664 = vadd.f32 %v2575, %v2652
        %v2665 = vadd.f32 %v2579, %v2648
        %v2666 = vadd.f32 %v2581, %v2652
        %v2667 = vadd.f32 %v2585, %v2648
        %v2668 = vadd.f32 %v2587, %v2652
        %v2669 = vadd.f32 %v2591, %v2648
        %v2670 = vadd.f32 %v2593, %v2652
        %v2671 = vadd.f32 %v2597, %v2648
        %v2672 = vadd.f32 %v2599, %v2652
        %v2673 = vadd.f32 %v2603, %v2648
        %v2674 = vadd.f32 %v2605, %v2652
        %v2675 = vadd.f32 %v2609, %v2648
        %v2676 = vadd.f32 %v2611, %v2652
        %v2677 = vadd.f32 %v2615, %v2648
        %v2678 = vadd.f32 %v2617, %v2652
        %v2679 = vadd.f32 %v2621, %v2648
        %v2680 = vadd.f32 %v2623, %v2652
        %v2681 = vadd.f32 %v2627, %v2648
        %v2682 = vadd.f32 %v2629, %v2652
        %v2683 = vadd.f32 %v2633, %v2648
        %v2684 = vadd.f32 %v2635, %v2652
        %v2685 = vadd.f32 %v2639, %v2648
        %v2686 = vadd.f32 %v2641, %v2652
        %v2687 = vmax.f32 %v2655, 0.0
        %v2688 = vmax.f32 %v2656, 0.0
        %v2689 = vmax.f32 %v2657, 0.0
        %v2690 = vmax.f32 %v2658, 0.0
        %v2691 = vmax.f32 %v2659, 0.0
        %v2692 = vmax.f32 %v2660, 0.0
        %v2693 = vmax.f32 %v2661, 0.0
        %v2694 = vmax.f32 %v2662, 0.0
        %v2695 = vmax.f32 %v2663, 0.0
        %v2696 = vmax.f32 %v2664, 0.0
        %v2697 = vmax.f32 %v2665, 0.0
        %v2698 = vmax.f32 %v2666, 0.0
        %v2699 = vmax.f32 %v2667, 0.0
        %v2700 = vmax.f32 %v2668, 0.0
        %v2701 = vmax.f32 %v2669, 0.0
        %v2702 = vmax.f32 %v2670, 0.0
        %v2703 = vmax.f32 %v2671, 0.0
        %v2704 = vmax.f32 %v2672, 0.0
        %v2705 = vmax.f32 %v2673, 0.0
        %v2706 = vmax.f32 %v2674, 0.0
        %v2707 = vmax.f32 %v2675, 0.0
        %v2708 = vmax.f32 %v2676, 0.0
        %v2709 = vmax.f32 %v2677, 0.0
        %v2710 = vmax.f32 %v2678, 0.0
        %v2711 = vmax.f32 %v2679, 0.0
        %v2712 = vmax.f32 %v2680, 0.0
        %v2713 = vmax.f32 %v2681, 0.0
        %v2714 = vmax.f32 %v2682, 0.0
        %v2715 = vmax.f32 %v2683, 0.0
        %v2716 = vmax.f32 %v2684, 0.0
        %v2717 = vmax.f32 %v2685, 0.0
        %v2718 = vmax.f32 %v2686, 0.0
        %v2719 = vld [vmem:[%s14 + $0xc] sm:$0x3]
        %v2721 = vlaneseq
        %v2722 = vshrl.u32 %v2721, 7
        %v2723 = vsub.s32 0, %v2722
        %v2724 = vrot.slane %v2719, %v2723
        %v2725 = vlaneseq
        %v2726 = vshrl.u32 %v2725, 7
        %v2727 = vsub.s32 1, %v2726
        %v2728 = vrot.slane %v2719, %v2727
        %v2731 = vmul.f32 %v2687, %v2724
        %v2732 = vmul.f32 %v2688, %v2728
        %v2733 = vmul.f32 %v2689, %v2724
        %v2734 = vmul.f32 %v2690, %v2728
        %v2735 = vmul.f32 %v2691, %v2724
        %v2736 = vmul.f32 %v2692, %v2728
        %v2737 = vmul.f32 %v2693, %v2724
        %v2738 = vmul.f32 %v2694, %v2728
        %v2739 = vmul.f32 %v2695, %v2724
        %v2740 = vmul.f32 %v2696, %v2728
        %v2741 = vmul.f32 %v2697, %v2724
        %v2742 = vmul.f32 %v2698, %v2728
        %v2743 = vmul.f32 %v2699, %v2724
        %v2744 = vmul.f32 %v2700, %v2728
        %v2745 = vmul.f32 %v2701, %v2724
        %v2746 = vmul.f32 %v2702, %v2728
        %v2747 = vmul.f32 %v2703, %v2724
        %v2748 = vmul.f32 %v2704, %v2728
        %v2749 = vmul.f32 %v2705, %v2724
        %v2750 = vmul.f32 %v2706, %v2728
        %v2751 = vmul.f32 %v2707, %v2724
        %v2752 = vmul.f32 %v2708, %v2728
        %v2753 = vmul.f32 %v2709, %v2724
        %v2754 = vmul.f32 %v2710, %v2728
        %v2755 = vmul.f32 %v2711, %v2724
        %v2756 = vmul.f32 %v2712, %v2728
        %v2757 = vmul.f32 %v2713, %v2724
        %v2758 = vmul.f32 %v2714, %v2728
        %v2759 = vmul.f32 %v2715, %v2724
        %v2760 = vmul.f32 %v2716, %v2728
        %v2761 = vmul.f32 %v2717, %v2724
        %v2762 = vmul.f32 %v2718, %v2728
        %v2763 = vadd.f32 %v2731, %v2732
        %2764 = vadd.xlane.f32.xlu0 %v2763
        %v2765 = vpop.xlane.xlu0 %2764
        %v2766 = vadd.f32 %v2733, %v2734
        %2767 = vadd.xlane.f32.xlu0 %v2766
        %v2768 = vpop.xlane.xlu0 %2767
        %v2769 = vadd.f32 %v2735, %v2736
        %2770 = vadd.xlane.f32.xlu0 %v2769
        %v2771 = vpop.xlane.xlu0 %2770
        %v2772 = vadd.f32 %v2737, %v2738
        %2773 = vadd.xlane.f32.xlu0 %v2772
        %v2774 = vpop.xlane.xlu0 %2773
        %v2775 = vadd.f32 %v2739, %v2740
        %2776 = vadd.xlane.f32.xlu0 %v2775
        %v2777 = vpop.xlane.xlu0 %2776
        %v2778 = vadd.f32 %v2741, %v2742
        %2779 = vadd.xlane.f32.xlu0 %v2778
        %v2780 = vpop.xlane.xlu0 %2779
        %v2781 = vadd.f32 %v2743, %v2744
        %2782 = vadd.xlane.f32.xlu0 %v2781
        %v2783 = vpop.xlane.xlu0 %2782
        %v2784 = vadd.f32 %v2745, %v2746
        %2785 = vadd.xlane.f32.xlu0 %v2784
        %v2786 = vpop.xlane.xlu0 %2785
        %v2787 = vadd.f32 %v2747, %v2748
        %2788 = vadd.xlane.f32.xlu0 %v2787
        %v2789 = vpop.xlane.xlu0 %2788
        %v2790 = vadd.f32 %v2749, %v2750
        %2791 = vadd.xlane.f32.xlu0 %v2790
        %v2792 = vpop.xlane.xlu0 %2791
        %v2793 = vadd.f32 %v2751, %v2752
        %2794 = vadd.xlane.f32.xlu0 %v2793
        %v2795 = vpop.xlane.xlu0 %2794
        %v2796 = vadd.f32 %v2753, %v2754
        %2797 = vadd.xlane.f32.xlu0 %v2796
        %v2798 = vpop.xlane.xlu0 %2797
        %v2799 = vadd.f32 %v2755, %v2756
        %2800 = vadd.xlane.f32.xlu0 %v2799
        %v2801 = vpop.xlane.xlu0 %2800
        %v2802 = vadd.f32 %v2757, %v2758
        %2803 = vadd.xlane.f32.xlu0 %v2802
        %v2804 = vpop.xlane.xlu0 %2803
        %v2805 = vadd.f32 %v2759, %v2760
        %2806 = vadd.xlane.f32.xlu0 %v2805
        %v2807 = vpop.xlane.xlu0 %2806
        %v2808 = vadd.f32 %v2761, %v2762
        %2809 = vadd.xlane.f32.xlu0 %v2808
        %v2810 = vpop.xlane.xlu0 %2809
        %v2811 = vld [vmem:[%s14 + $0xe] sm:$0x1]
        %v2813 = vlaneseq
        %v2814 = vshrl.u32 %v2813, 7
        %v2815 = vsub.s32 0, %v2814
        %v2816 = vrot.slane %v2811, %v2815
        %v2818 = vadd.f32 %v2765, %v2816
        %v2819 = vadd.f32 %v2768, %v2816
        %v2820 = vadd.f32 %v2771, %v2816
        %v2821 = vadd.f32 %v2774, %v2816
        %v2822 = vadd.f32 %v2777, %v2816
        %v2823 = vadd.f32 %v2780, %v2816
        %v2824 = vadd.f32 %v2783, %v2816
        %v2825 = vadd.f32 %v2786, %v2816
        %v2826 = vadd.f32 %v2789, %v2816
        %v2827 = vadd.f32 %v2792, %v2816
        %v2828 = vadd.f32 %v2795, %v2816
        %v2829 = vadd.f32 %v2798, %v2816
        %v2830 = vadd.f32 %v2801, %v2816
        %v2831 = vadd.f32 %v2804, %v2816
        %v2832 = vadd.f32 %v2807, %v2816
        %v2833 = vadd.f32 %v2810, %v2816
        %v2834 = vxor.u32 %v2818, 2147483648
        %v2835 = vxor.u32 %v2819, 2147483648
        %v2836 = vxor.u32 %v2820, 2147483648
        %v2837 = vxor.u32 %v2821, 2147483648
        %v2838 = vxor.u32 %v2822, 2147483648
        %v2839 = vxor.u32 %v2823, 2147483648
        %v2840 = vxor.u32 %v2824, 2147483648
        %v2841 = vxor.u32 %v2825, 2147483648
        %v2842 = vxor.u32 %v2826, 2147483648
        %v2843 = vxor.u32 %v2827, 2147483648
        %v2844 = vxor.u32 %v2828, 2147483648
        %v2845 = vxor.u32 %v2829, 2147483648
        %v2846 = vxor.u32 %v2830, 2147483648
        %v2847 = vxor.u32 %v2831, 2147483648
        %v2848 = vxor.u32 %v2832, 2147483648
        %v2849 = vxor.u32 %v2833, 2147483648
        %v2850 = vmul.f32 %v2834, 1.442695
        %v2851 = vpow.pop %v2850
        %v2852 = vmul.f32 %v2835, 1.442695
        %v2853 = vpow.pop %v2852
        %v2854 = vmul.f32 %v2836, 1.442695
        %v2855 = vpow.pop %v2854
        %v2856 = vmul.f32 %v2837, 1.442695
        %v2857 = vpow.pop %v2856
        %v2858 = vmul.f32 %v2838, 1.442695
        %v2859 = vpow.pop %v2858
        %v2860 = vmul.f32 %v2839, 1.442695
        %v2861 = vpow.pop %v2860
        %v2862 = vmul.f32 %v2840, 1.442695
        %v2863 = vpow.pop %v2862
        %v2864 = vmul.f32 %v2841, 1.442695
        %v2865 = vpow.pop %v2864
        %v2866 = vmul.f32 %v2842, 1.442695
        %v2867 = vpow.pop %v2866
        %v2868 = vmul.f32 %v2843, 1.442695
        %v2869 = vpow.pop %v2868
        %v2870 = vmul.f32 %v2844, 1.442695
        %v2871 = vpow.pop %v2870
        %v2872 = vmul.f32 %v2845, 1.442695
        %v2873 = vpow.pop %v2872
        %v2874 = vmul.f32 %v2846, 1.442695
        %v2875 = vpow.pop %v2874
        %v2876 = vmul.f32 %v2847, 1.442695
        %v2877 = vpow.pop %v2876
        %v2878 = vmul.f32 %v2848, 1.442695
        %v2879 = vpow.pop %v2878
        %v2880 = vmul.f32 %v2849, 1.442695
        %v2881 = vpow.pop %v2880
        %v2882 = vadd.f32 %v2851, 1.0
        %v2883 = vadd.f32 %v2853, 1.0
        %v2884 = vadd.f32 %v2855, 1.0
        %v2885 = vadd.f32 %v2857, 1.0
        %v2886 = vadd.f32 %v2859, 1.0
        %v2887 = vadd.f32 %v2861, 1.0
        %v2888 = vadd.f32 %v2863, 1.0
        %v2889 = vadd.f32 %v2865, 1.0
        %v2890 = vadd.f32 %v2867, 1.0
        %v2891 = vadd.f32 %v2869, 1.0
        %v2892 = vadd.f32 %v2871, 1.0
        %v2893 = vadd.f32 %v2873, 1.0
        %v2894 = vadd.f32 %v2875, 1.0
        %v2895 = vadd.f32 %v2877, 1.0
        %v2896 = vadd.f32 %v2879, 1.0
        %v2897 = vadd.f32 %v2881, 1.0
        %v2898 = vrcp.pop %v2882
        %v2899 = vmul.f32 1.0, %v2898
        %v2900 = vrcp.pop %v2883
        %v2901 = vmul.f32 1.0, %v2900
        %v2902 = vrcp.pop %v2884
        %v2903 = vmul.f32 1.0, %v2902
        %v2904 = vrcp.pop %v2885
        %v2905 = vmul.f32 1.0, %v2904
        %v2906 = vrcp.pop %v2886
        %v2907 = vmul.f32 1.0, %v2906
        %v2908 = vrcp.pop %v2887
        %v2909 = vmul.f32 1.0, %v2908
        %v2910 = vrcp.pop %v2888
        %v2911 = vmul.f32 1.0, %v2910
        %v2912 = vrcp.pop %v2889
        %v2913 = vmul.f32 1.0, %v2912
        %v2914 = vrcp.pop %v2890
        %v2915 = vmul.f32 1.0, %v2914
        %v2916 = vrcp.pop %v2891
        %v2917 = vmul.f32 1.0, %v2916
        %v2918 = vrcp.pop %v2892
        %v2919 = vmul.f32 1.0, %v2918
        %v2920 = vrcp.pop %v2893
        %v2921 = vmul.f32 1.0, %v2920
        %v2922 = vrcp.pop %v2894
        %v2923 = vmul.f32 1.0, %v2922
        %v2924 = vrcp.pop %v2895
        %v2925 = vmul.f32 1.0, %v2924
        %v2926 = vrcp.pop %v2896
        %v2927 = vmul.f32 1.0, %v2926
        %v2928 = vrcp.pop %v2897
        %v2929 = vmul.f32 1.0, %v2928
        %v2930 = vld [vmem:[#allocation19] sm:$0xff]
        %v2931 = vld [vmem:[#allocation19 + $0x8] sm:$0xff]
        %v2932 = vld [vmem:[#allocation19 + $0x10] sm:$0xff]
        %v2933 = vld [vmem:[#allocation19 + $0x18] sm:$0xff]
        %v2934 = vld [vmem:[#allocation19 + $0x20] sm:$0xff]
        %v2935 = vld [vmem:[#allocation19 + $0x28] sm:$0xff]
        %v2936 = vld [vmem:[#allocation19 + $0x30] sm:$0xff]
        %v2937 = vld [vmem:[#allocation19 + $0x38] sm:$0xff]
        %v2938 = vld [vmem:[#allocation19 + $0x40] sm:$0xff]
        %v2939 = vld [vmem:[#allocation19 + $0x48] sm:$0xff]
        %v2940 = vld [vmem:[#allocation19 + $0x50] sm:$0xff]
        %v2941 = vld [vmem:[#allocation19 + $0x58] sm:$0xff]
        %v2942 = vld [vmem:[#allocation19 + $0x60] sm:$0xff]
        %v2943 = vld [vmem:[#allocation19 + $0x68] sm:$0xff]
        %v2944 = vld [vmem:[#allocation19 + $0x70] sm:$0xff]
        %v2945 = vld [vmem:[#allocation19 + $0x78] sm:$0xff]
        %v2946 = vld [vmem:[#allocation19 + $0x80] sm:$0xff]
        %v2947 = vld [vmem:[#allocation19 + $0x88] sm:$0xff]
        %v2948 = vld [vmem:[#allocation19 + $0x90] sm:$0xff]
        %v2949 = vld [vmem:[#allocation19 + $0x98] sm:$0xff]
        %v2950 = vld [vmem:[#allocation19 + $0xa0] sm:$0xff]
        %v2951 = vld [vmem:[#allocation19 + $0xa8] sm:$0xff]
        %v2952 = vld [vmem:[#allocation19 + $0xb0] sm:$0xff]
        %v2953 = vld [vmem:[#allocation19 + $0xb8] sm:$0xff]
        %v2954 = vld [vmem:[#allocation19 + $0xc0] sm:$0xff]
        %v2955 = vld [vmem:[#allocation19 + $0xc8] sm:$0xff]
        %v2956 = vld [vmem:[#allocation19 + $0xd0] sm:$0xff]
        %v2957 = vld [vmem:[#allocation19 + $0xd8] sm:$0xff]
        %v2958 = vld [vmem:[#allocation19 + $0xe0] sm:$0xff]
        %v2959 = vld [vmem:[#allocation19 + $0xe8] sm:$0xff]
        %v2960 = vld [vmem:[#allocation19 + $0xf0] sm:$0xff]
        %v2961 = vld [vmem:[#allocation19 + $0xf8] sm:$0xff]
        %v2962 = vld [vmem:[#allocation20] sm:$0xff]
        %v2963 = vld [vmem:[#allocation20 + $0x8] sm:$0xff]
        %v2964 = vld [vmem:[#allocation20 + $0x10] sm:$0xff]
        %v2965 = vld [vmem:[#allocation20 + $0x18] sm:$0xff]
        %v2966 = vld [vmem:[#allocation20 + $0x20] sm:$0xff]
        %v2967 = vld [vmem:[#allocation20 + $0x28] sm:$0xff]
        %v2968 = vld [vmem:[#allocation20 + $0x30] sm:$0xff]
        %v2969 = vld [vmem:[#allocation20 + $0x38] sm:$0xff]
        %v2970 = vld [vmem:[#allocation20 + $0x40] sm:$0xff]
        %v2971 = vld [vmem:[#allocation20 + $0x48] sm:$0xff]
        %v2972 = vld [vmem:[#allocation20 + $0x50] sm:$0xff]
        %v2973 = vld [vmem:[#allocation20 + $0x58] sm:$0xff]
        %v2974 = vld [vmem:[#allocation20 + $0x60] sm:$0xff]
        %v2975 = vld [vmem:[#allocation20 + $0x68] sm:$0xff]
        %v2976 = vld [vmem:[#allocation20 + $0x70] sm:$0xff]
        %v2977 = vld [vmem:[#allocation20 + $0x78] sm:$0xff]
        %v2978 = vld [vmem:[#allocation20 + $0x80] sm:$0xff]
        %v2979 = vld [vmem:[#allocation20 + $0x88] sm:$0xff]
        %v2980 = vld [vmem:[#allocation20 + $0x90] sm:$0xff]
        %v2981 = vld [vmem:[#allocation20 + $0x98] sm:$0xff]
        %v2982 = vld [vmem:[#allocation20 + $0xa0] sm:$0xff]
        %v2983 = vld [vmem:[#allocation20 + $0xa8] sm:$0xff]
        %v2984 = vld [vmem:[#allocation20 + $0xb0] sm:$0xff]
        %v2985 = vld [vmem:[#allocation20 + $0xb8] sm:$0xff]
        %v2986 = vld [vmem:[#allocation20 + $0xc0] sm:$0xff]
        %v2987 = vld [vmem:[#allocation20 + $0xc8] sm:$0xff]
        %v2988 = vld [vmem:[#allocation20 + $0xd0] sm:$0xff]
        %v2989 = vld [vmem:[#allocation20 + $0xd8] sm:$0xff]
        %v2990 = vld [vmem:[#allocation20 + $0xe0] sm:$0xff]
        %v2991 = vld [vmem:[#allocation20 + $0xe8] sm:$0xff]
        %v2992 = vld [vmem:[#allocation20 + $0xf0] sm:$0xff]
        %v2993 = vld [vmem:[#allocation20 + $0xf8] sm:$0xff]
        %2994 = vmatprep.subr.mxu0 %v2963
        %2995 = vmatpush1.msra.mxu0 %v2962
        %2996 = vmatprep.subr.mxu0 %v2965
        %2997 = vmatpush1.msra.mxu0 %v2964
        %2998 = vmatprep.subr.mxu0 %v2967
        %2999 = vmatpush1.msra.mxu0 %v2966
        %3000 = vmatprep.subr.mxu0 %v2969
        %3001 = vmatpush1.msra.mxu0 %v2968
        %3002 = vmatprep.subr.mxu0 %v2971
        %3003 = vmatpush1.msra.mxu0 %v2970
        %3004 = vmatprep.subr.mxu0 %v2973
        %3005 = vmatpush1.msra.mxu0 %v2972
        %3006 = vmatprep.subr.mxu0 %v2975
        %3007 = vmatpush1.msra.mxu0 %v2974
        %3008 = vmatprep.subr.mxu0 %v2977
        %3009 = vmatpush1.msra.mxu0 %v2976
        %3010 = vmatprep.subr.mxu0 %v2979
        %3011 = vmatpush1.msra.mxu0 %v2978
        %3012 = vmatprep.subr.mxu0 %v2981
        %3013 = vmatpush1.msra.mxu0 %v2980
        %3014 = vmatprep.subr.mxu0 %v2983
        %3015 = vmatpush1.msra.mxu0 %v2982
        %3016 = vmatprep.subr.mxu0 %v2985
        %3017 = vmatpush1.msra.mxu0 %v2984
        %3018 = vmatprep.subr.mxu0 %v2987
        %3019 = vmatpush1.msra.mxu0 %v2986
        %3020 = vmatprep.subr.mxu0 %v2989
        %3021 = vmatpush1.msra.mxu0 %v2988
        %3022 = vmatprep.subr.mxu0 %v2991
        %3023 = vmatpush1.msra.mxu0 %v2990
        %3024 = vmatprep.subr.mxu0 %v2993
        %3025 = vmatpush1.msra.mxu0 %v2992
        %3026 = vmatprep.subr.mxu0 0.0
        %3027 = vmatpush1.msra.mxu0 0.0
        %3028 = vmatprep.subr.mxu0 0.0
        %3029 = vmatpush1.msra.mxu0 0.0
        %3030 = vmatprep.subr.mxu0 0.0
        %3031 = vmatpush1.msra.mxu0 0.0
        %3032 = vmatprep.subr.mxu0 0.0
        %3033 = vmatpush1.msra.mxu0 0.0
        %3034 = vmatprep.subr.mxu0 0.0
        %3035 = vmatpush1.msra.mxu0 0.0
        %3036 = vmatprep.subr.mxu0 0.0
        %3037 = vmatpush1.msra.mxu0 0.0
        %3038 = vmatprep.subr.mxu0 0.0
        %3039 = vmatpush1.msra.mxu0 0.0
        %3040 = vmatprep.subr.mxu0 0.0
        %3041 = vmatpush1.msra.mxu0 0.0
        %3042 = vmatprep.subr.mxu0 0.0
        %3043 = vmatpush1.msra.mxu0 0.0
        %3044 = vmatprep.subr.mxu0 0.0
        %3045 = vmatpush1.msra.mxu0 0.0
        %3046 = vmatprep.subr.mxu0 0.0
        %3047 = vmatpush1.msra.mxu0 0.0
        %3048 = vmatprep.subr.mxu0 0.0
        %3049 = vmatpush1.msra.mxu0 0.0
        %3050 = vmatprep.subr.mxu0 0.0
        %3051 = vmatpush1.msra.mxu0 0.0
        %3052 = vmatprep.subr.mxu0 0.0
        %3053 = vmatpush1.msra.mxu0 0.0
        %3054 = vmatprep.subr.mxu0 0.0
        %3055 = vmatpush1.msra.mxu0 0.0
        %3056 = vmatprep.subr.mxu0 0.0
        %3057 = vmatpush1.msra.mxu0 0.0
        %3058 = vmatprep.mubr.f32.mxu0 0.0
        %3059 = vmatmul.mubr.f32.gmra.mrb[0].mxu0 %v2241
        %v3060 = vpop.f32.mrb[0].mxu0
        %v3061 = vadd.f32 0.0, %v3060
        %v3062 = vpop.f32.mrb[0].mxu0
        %v3063 = vadd.f32 0.0, %v3062
        %3064 = vmatprep.mubr.f32.mxu0 0.0
        %3065 = vmatmul.mubr.f32.gmra.mrb[0].mxu0 %v2242
        %v3066 = vpop.f32.mrb[0].mxu0
        %v3067 = vadd.f32 0.0, %v3066
        %v3068 = vpop.f32.mrb[0].mxu0
        %v3069 = vadd.f32 0.0, %v3068
        %3070 = vmatprep.mubr.f32.mxu0 0.0
        %3071 = vmatmul.mubr.f32.gmra.mrb[0].mxu0 %v2243
        %v3072 = vpop.f32.mrb[0].mxu0
        %v3073 = vadd.f32 0.0, %v3072
        %v3074 = vpop.f32.mrb[0].mxu0
        %v3075 = vadd.f32 0.0, %v3074
        %3076 = vmatprep.mubr.f32.mxu0 0.0
        %3077 = vmatmul.mubr.f32.gmra.mrb[0].mxu0 %v2244
        %v3078 = vpop.f32.mrb[0].mxu0
        %v3079 = vadd.f32 0.0, %v3078
        %v3080 = vpop.f32.mrb[0].mxu0
        %v3081 = vadd.f32 0.0, %v3080
        %3082 = vmatprep.mubr.f32.mxu0 0.0
        %3083 = vmatmul.mubr.f32.gmra.mrb[0].mxu0 %v2245
        %v3084 = vpop.f32.mrb[0].mxu0
        %v3085 = vadd.f32 0.0, %v3084
        %v3086 = vpop.f32.mrb[0].mxu0
        %v3087 = vadd.f32 0.0, %v3086
        %3088 = vmatprep.mubr.f32.mxu0 0.0
        %3089 = vmatmul.mubr.f32.gmra.mrb[0].mxu0 %v2246
        %v3090 = vpop.f32.mrb[0].mxu0
        %v3091 = vadd.f32 0.0, %v3090
        %v3092 = vpop.f32.mrb[0].mxu0
        %v3093 = vadd.f32 0.0, %v3092
        %3094 = vmatprep.mubr.f32.mxu0 0.0
        %3095 = vmatmul.mubr.f32.gmra.mrb[0].mxu0 %v2247
        %v3096 = vpop.f32.mrb[0].mxu0
        %v3097 = vadd.f32 0.0, %v3096
        %v3098 = vpop.f32.mrb[0].mxu0
        %v3099 = vadd.f32 0.0, %v3098
        %3100 = vmatprep.mubr.f32.mxu0 0.0
        %3101 = vmatmul.mubr.f32.gmra.mrb[0].mxu0 %v2248
        %v3102 = vpop.f32.mrb[0].mxu0
        %v3103 = vadd.f32 0.0, %v3102
        %v3104 = vpop.f32.mrb[0].mxu0
        %v3105 = vadd.f32 0.0, %v3104
        %3106 = vmatprep.mubr.f32.mxu0 0.0
        %3107 = vmatmul.mubr.f32.gmra.mrb[0].mxu0 %v2249
        %v3108 = vpop.f32.mrb[0].mxu0
        %v3109 = vadd.f32 0.0, %v3108
        %v3110 = vpop.f32.mrb[0].mxu0
        %v3111 = vadd.f32 0.0, %v3110
        %3112 = vmatprep.mubr.f32.mxu0 0.0
        %3113 = vmatmul.mubr.f32.gmra.mrb[0].mxu0 %v2250
        %v3114 = vpop.f32.mrb[0].mxu0
        %v3115 = vadd.f32 0.0, %v3114
        %v3116 = vpop.f32.mrb[0].mxu0
        %v3117 = vadd.f32 0.0, %v3116
        %3118 = vmatprep.mubr.f32.mxu0 0.0
        %3119 = vmatmul.mubr.f32.gmra.mrb[0].mxu0 %v2251
        %v3120 = vpop.f32.mrb[0].mxu0
        %v3121 = vadd.f32 0.0, %v3120
        %v3122 = vpop.f32.mrb[0].mxu0
        %v3123 = vadd.f32 0.0, %v3122
        %3124 = vmatprep.mubr.f32.mxu0 0.0
        %3125 = vmatmul.mubr.f32.gmra.mrb[0].mxu0 %v2252
        %v3126 = vpop.f32.mrb[0].mxu0
        %v3127 = vadd.f32 0.0, %v3126
        %v3128 = vpop.f32.mrb[0].mxu0
        %v3129 = vadd.f32 0.0, %v3128
        %3130 = vmatprep.mubr.f32.mxu0 0.0
        %3131 = vmatmul.mubr.f32.gmra.mrb[0].mxu0 %v2253
        %v3132 = vpop.f32.mrb[0].mxu0
        %v3133 = vadd.f32 0.0, %v3132
        %v3134 = vpop.f32.mrb[0].mxu0
        %v3135 = vadd.f32 0.0, %v3134
        %3136 = vmatprep.mubr.f32.mxu0 0.0
        %3137 = vmatmul.mubr.f32.gmra.mrb[0].mxu0 %v2254
        %v3138 = vpop.f32.mrb[0].mxu0
        %v3139 = vadd.f32 0.0, %v3138
        %v3140 = vpop.f32.mrb[0].mxu0
        %v3141 = vadd.f32 0.0, %v3140
        %3142 = vmatprep.mubr.f32.mxu0 0.0
        %3143 = vmatmul.mubr.f32.gmra.mrb[0].mxu0 %v2255
        %v3144 = vpop.f32.mrb[0].mxu0
        %v3145 = vadd.f32 0.0, %v3144
        %v3146 = vpop.f32.mrb[0].mxu0
        %v3147 = vadd.f32 0.0, %v3146
        %3148 = vmatprep.mubr.f32.mxu0 0.0
        %3149 = vmatmul.mubr.f32.gmra.mrb[0].mxu0 %v2256
        %v3150 = vpop.f32.mrb[0].mxu0
        %v3151 = vadd.f32 0.0, %v3150
        %v3152 = vpop.f32.mrb[0].mxu0
        %v3153 = vadd.f32 0.0, %v3152
        %3154 = vdwg.mxu0
        %3155 = vmatprep.subr.mxu0 %v2931
        %3156 = vmatpush1.msra.mxu0 %v2930
        %3157 = vmatprep.subr.mxu0 %v2933
        %3158 = vmatpush1.msra.mxu0 %v2932
        %3159 = vmatprep.subr.mxu0 %v2935
        %3160 = vmatpush1.msra.mxu0 %v2934
        %3161 = vmatprep.subr.mxu0 %v2937
        %3162 = vmatpush1.msra.mxu0 %v2936
        %3163 = vmatprep.subr.mxu0 %v2939
        %3164 = vmatpush1.msra.mxu0 %v2938
        %3165 = vmatprep.subr.mxu0 %v2941
        %3166 = vmatpush1.msra.mxu0 %v2940
        %3167 = vmatprep.subr.mxu0 %v2943
        %3168 = vmatpush1.msra.mxu0 %v2942
        %3169 = vmatprep.subr.mxu0 %v2945
        %3170 = vmatpush1.msra.mxu0 %v2944
        %3171 = vmatprep.subr.mxu0 %v2947
        %3172 = vmatpush1.msra.mxu0 %v2946
        %3173 = vmatprep.subr.mxu0 %v2949
        %3174 = vmatpush1.msra.mxu0 %v2948
        %3175 = vmatprep.subr.mxu0 %v2951
        %3176 = vmatpush1.msra.mxu0 %v2950
        %3177 = vmatprep.subr.mxu0 %v2953
        %3178 = vmatpush1.msra.mxu0 %v2952
        %3179 = vmatprep.subr.mxu0 %v2955
        %3180 = vmatpush1.msra.mxu0 %v2954
        %3181 = vmatprep.subr.mxu0 %v2957
        %3182 = vmatpush1.msra.mxu0 %v2956
        %3183 = vmatprep.subr.mxu0 %v2959
        %3184 = vmatpush1.msra.mxu0 %v2958
        %3185 = vmatprep.subr.mxu0 %v2961
        %3186 = vmatpush1.msra.mxu0 %v2960
        %3187 = vmatprep.subr.mxu0 0.0
        %3188 = vmatpush1.msra.mxu0 0.0
        %3189 = vmatprep.subr.mxu0 0.0
        %3190 = vmatpush1.msra.mxu0 0.0
        %3191 = vmatprep.subr.mxu0 0.0
        %3192 = vmatpush1.msra.mxu0 0.0
        %3193 = vmatprep.subr.mxu0 0.0
        %3194 = vmatpush1.msra.mxu0 0.0
        %3195 = vmatprep.subr.mxu0 0.0
        %3196 = vmatpush1.msra.mxu0 0.0
        %3197 = vmatprep.subr.mxu0 0.0
        %3198 = vmatpush1.msra.mxu0 0.0
        %3199 = vmatprep.subr.mxu0 0.0
        %3200 = vmatpush1.msra.mxu0 0.0
        %3201 = vmatprep.subr.mxu0 0.0
        %3202 = vmatpush1.msra.mxu0 0.0
        %3203 = vmatprep.subr.mxu0 0.0
        %3204 = vmatpush1.msra.mxu0 0.0
        %3205 = vmatprep.subr.mxu0 0.0
        %3206 = vmatpush1.msra.mxu0 0.0
        %3207 = vmatprep.subr.mxu0 0.0
        %3208 = vmatpush1.msra.mxu0 0.0
        %3209 = vmatprep.subr.mxu0 0.0
        %3210 = vmatpush1.msra.mxu0 0.0
        %3211 = vmatprep.subr.mxu0 0.0
        %3212 = vmatpush1.msra.mxu0 0.0
        %3213 = vmatprep.subr.mxu0 0.0
        %3214 = vmatpush1.msra.mxu0 0.0
        %3215 = vmatprep.subr.mxu0 0.0
        %3216 = vmatpush1.msra.mxu0 0.0
        %3217 = vmatprep.subr.mxu0 0.0
        %3218 = vmatpush1.msra.mxu0 0.0
        %3219 = vmatprep.mubr.f32.mxu0 0.0
        %3220 = vmatmul.mubr.f32.gmra.mrb[0].mxu0 %v2225
        %v3221 = vpop.f32.mrb[0].mxu0
        %v3222 = vadd.f32 %v3061, %v3221
        %v3223 = vpop.f32.mrb[0].mxu0
        %v3224 = vadd.f32 %v3063, %v3223
        %3225 = vmatprep.mubr.f32.mxu0 0.0
        %3226 = vmatmul.mubr.f32.gmra.mrb[0].mxu0 %v2226
        %v3227 = vpop.f32.mrb[0].mxu0
        %v3228 = vadd.f32 %v3067, %v3227
        %v3229 = vpop.f32.mrb[0].mxu0
        %v3230 = vadd.f32 %v3069, %v3229
        %3231 = vmatprep.mubr.f32.mxu0 0.0
        %3232 = vmatmul.mubr.f32.gmra.mrb[0].mxu0 %v2227
        %v3233 = vpop.f32.mrb[0].mxu0
        %v3234 = vadd.f32 %v3073, %v3233
        %v3235 = vpop.f32.mrb[0].mxu0
        %v3236 = vadd.f32 %v3075, %v3235
        %3237 = vmatprep.mubr.f32.mxu0 0.0
        %3238 = vmatmul.mubr.f32.gmra.mrb[0].mxu0 %v2228
        %v3239 = vpop.f32.mrb[0].mxu0
        %v3240 = vadd.f32 %v3079, %v3239
        %v3241 = vpop.f32.mrb[0].mxu0
        %v3242 = vadd.f32 %v3081, %v3241
        %3243 = vmatprep.mubr.f32.mxu0 0.0
        %3244 = vmatmul.mubr.f32.gmra.mrb[0].mxu0 %v2229
        %v3245 = vpop.f32.mrb[0].mxu0
        %v3246 = vadd.f32 %v3085, %v3245
        %v3247 = vpop.f32.mrb[0].mxu0
        %v3248 = vadd.f32 %v3087, %v3247
        %3249 = vmatprep.mubr.f32.mxu0 0.0
        %3250 = vmatmul.mubr.f32.gmra.mrb[0].mxu0 %v2230
        %v3251 = vpop.f32.mrb[0].mxu0
        %v3252 = vadd.f32 %v3091, %v3251
        %v3253 = vpop.f32.mrb[0].mxu0
        %v3254 = vadd.f32 %v3093, %v3253
        %3255 = vmatprep.mubr.f32.mxu0 0.0
        %3256 = vmatmul.mubr.f32.gmra.mrb[0].mxu0 %v2231
        %v3257 = vpop.f32.mrb[0].mxu0
        %v3258 = vadd.f32 %v3097, %v3257
        %v3259 = vpop.f32.mrb[0].mxu0
        %v3260 = vadd.f32 %v3099, %v3259
        %3261 = vmatprep.mubr.f32.mxu0 0.0
        %3262 = vmatmul.mubr.f32.gmra.mrb[0].mxu0 %v2232
        %v3263 = vpop.f32.mrb[0].mxu0
        %v3264 = vadd.f32 %v3103, %v3263
        %v3265 = vpop.f32.mrb[0].mxu0
        %v3266 = vadd.f32 %v3105, %v3265
        %3267 = vmatprep.mubr.f32.mxu0 0.0
        %3268 = vmatmul.mubr.f32.gmra.mrb[0].mxu0 %v2233
        %v3269 = vpop.f32.mrb[0].mxu0
        %v3270 = vadd.f32 %v3109, %v3269
        %v3271 = vpop.f32.mrb[0].mxu0
        %v3272 = vadd.f32 %v3111, %v3271
        %3273 = vmatprep.mubr.f32.mxu0 0.0
        %3274 = vmatmul.mubr.f32.gmra.mrb[0].mxu0 %v2234
        %v3275 = vpop.f32.mrb[0].mxu0
        %v3276 = vadd.f32 %v3115, %v3275
        %v3277 = vpop.f32.mrb[0].mxu0
        %v3278 = vadd.f32 %v3117, %v3277
        %3279 = vmatprep.mubr.f32.mxu0 0.0
        %3280 = vmatmul.mubr.f32.gmra.mrb[0].mxu0 %v2235
        %v3281 = vpop.f32.mrb[0].mxu0
        %v3282 = vadd.f32 %v3121, %v3281
        %v3283 = vpop.f32.mrb[0].mxu0
        %v3284 = vadd.f32 %v3123, %v3283
        %3285 = vmatprep.mubr.f32.mxu0 0.0
        %3286 = vmatmul.mubr.f32.gmra.mrb[0].mxu0 %v2236
        %v3287 = vpop.f32.mrb[0].mxu0
        %v3288 = vadd.f32 %v3127, %v3287
        %v3289 = vpop.f32.mrb[0].mxu0
        %v3290 = vadd.f32 %v3129, %v3289
        %3291 = vmatprep.mubr.f32.mxu0 0.0
        %3292 = vmatmul.mubr.f32.gmra.mrb[0].mxu0 %v2237
        %v3293 = vpop.f32.mrb[0].mxu0
        %v3294 = vadd.f32 %v3133, %v3293
        %v3295 = vpop.f32.mrb[0].mxu0
        %v3296 = vadd.f32 %v3135, %v3295
        %3297 = vmatprep.mubr.f32.mxu0 0.0
        %3298 = vmatmul.mubr.f32.gmra.mrb[0].mxu0 %v2238
        %v3299 = vpop.f32.mrb[0].mxu0
        %v3300 = vadd.f32 %v3139, %v3299
        %v3301 = vpop.f32.mrb[0].mxu0
        %v3302 = vadd.f32 %v3141, %v3301
        %3303 = vmatprep.mubr.f32.mxu0 0.0
        %3304 = vmatmul.mubr.f32.gmra.mrb[0].mxu0 %v2239
        %v3305 = vpop.f32.mrb[0].mxu0
        %v3306 = vadd.f32 %v3145, %v3305
        %v3307 = vpop.f32.mrb[0].mxu0
        %v3308 = vadd.f32 %v3147, %v3307
        %3309 = vmatprep.mubr.f32.mxu0 0.0
        %3310 = vmatmul.mubr.f32.gmra.mrb[0].mxu0 %v2240
        %v3311 = vpop.f32.mrb[0].mxu0
        %v3312 = vadd.f32 %v3151, %v3311
        %v3313 = vpop.f32.mrb[0].mxu0
        %v3314 = vadd.f32 %v3153, %v3313
        %3315 = vdwg.mxu0
        %v3316 = vld [vmem:[#allocation22] sm:$0xff]
        %v3317 = vld [vmem:[#allocation22 + $0x8] sm:$0xff]
        %v3318 = vld [vmem:[#allocation22 + $0x10] sm:$0xff]
        %v3319 = vld [vmem:[#allocation22 + $0x18] sm:$0xff]
        %v3320 = vld [vmem:[#allocation22 + $0x20] sm:$0xff]
        %v3321 = vld [vmem:[#allocation22 + $0x28] sm:$0xff]
        %v3322 = vld [vmem:[#allocation22 + $0x30] sm:$0xff]
        %v3323 = vld [vmem:[#allocation22 + $0x38] sm:$0xff]
        %v3324 = vld [vmem:[#allocation22 + $0x40] sm:$0xff]
        %v3325 = vld [vmem:[#allocation22 + $0x48] sm:$0xff]
        %v3326 = vld [vmem:[#allocation22 + $0x50] sm:$0xff]
        %v3327 = vld [vmem:[#allocation22 + $0x58] sm:$0xff]
        %v3328 = vld [vmem:[#allocation22 + $0x60] sm:$0xff]
        %v3329 = vld [vmem:[#allocation22 + $0x68] sm:$0xff]
        %v3330 = vld [vmem:[#allocation22 + $0x70] sm:$0xff]
        %v3331 = vld [vmem:[#allocation22 + $0x78] sm:$0xff]
        %v3332 = vld [vmem:[#allocation22 + $0x80] sm:$0xff]
        %v3333 = vld [vmem:[#allocation22 + $0x88] sm:$0xff]
        %v3334 = vld [vmem:[#allocation22 + $0x90] sm:$0xff]
        %v3335 = vld [vmem:[#allocation22 + $0x98] sm:$0xff]
        %v3336 = vld [vmem:[#allocation22 + $0xa0] sm:$0xff]
        %v3337 = vld [vmem:[#allocation22 + $0xa8] sm:$0xff]
        %v3338 = vld [vmem:[#allocation22 + $0xb0] sm:$0xff]
        %v3339 = vld [vmem:[#allocation22 + $0xb8] sm:$0xff]
        %v3340 = vld [vmem:[#allocation22 + $0xc0] sm:$0xff]
        %v3341 = vld [vmem:[#allocation22 + $0xc8] sm:$0xff]
        %v3342 = vld [vmem:[#allocation22 + $0xd0] sm:$0xff]
        %v3343 = vld [vmem:[#allocation22 + $0xd8] sm:$0xff]
        %v3344 = vld [vmem:[#allocation22 + $0xe0] sm:$0xff]
        %v3345 = vld [vmem:[#allocation22 + $0xe8] sm:$0xff]
        %v3346 = vld [vmem:[#allocation22 + $0xf0] sm:$0xff]
        %v3347 = vld [vmem:[#allocation22 + $0xf8] sm:$0xff]
        %3348 = vmatprep.subr.mxu0 %v3317
        %3349 = vmatpush1.msra.mxu0 %v3316
        %3350 = vmatprep.subr.mxu0 %v3319
        %3351 = vmatpush1.msra.mxu0 %v3318
        %3352 = vmatprep.subr.mxu0 %v3321
        %3353 = vmatpush1.msra.mxu0 %v3320
        %3354 = vmatprep.subr.mxu0 %v3323
        %3355 = vmatpush1.msra.mxu0 %v3322
        %3356 = vmatprep.subr.mxu0 %v3325
        %3357 = vmatpush1.msra.mxu0 %v3324
        %3358 = vmatprep.subr.mxu0 %v3327
        %3359 = vmatpush1.msra.mxu0 %v3326
        %3360 = vmatprep.subr.mxu0 %v3329
        %3361 = vmatpush1.msra.mxu0 %v3328
        %3362 = vmatprep.subr.mxu0 %v3331
        %3363 = vmatpush1.msra.mxu0 %v3330
        %3364 = vmatprep.subr.mxu0 %v3333
        %3365 = vmatpush1.msra.mxu0 %v3332
        %3366 = vmatprep.subr.mxu0 %v3335
        %3367 = vmatpush1.msra.mxu0 %v3334
        %3368 = vmatprep.subr.mxu0 %v3337
        %3369 = vmatpush1.msra.mxu0 %v3336
        %3370 = vmatprep.subr.mxu0 %v3339
        %3371 = vmatpush1.msra.mxu0 %v3338
        %3372 = vmatprep.subr.mxu0 %v3341
        %3373 = vmatpush1.msra.mxu0 %v3340
        %3374 = vmatprep.subr.mxu0 %v3343
        %3375 = vmatpush1.msra.mxu0 %v3342
        %3376 = vmatprep.subr.mxu0 %v3345
        %3377 = vmatpush1.msra.mxu0 %v3344
        %3378 = vmatprep.subr.mxu0 %v3347
        %3379 = vmatpush1.msra.mxu0 %v3346
        %3380 = vmatprep.subr.mxu0 0.0
        %3381 = vmatpush1.msra.mxu0 0.0
        %3382 = vmatprep.subr.mxu0 0.0
        %3383 = vmatpush1.msra.mxu0 0.0
        %3384 = vmatprep.subr.mxu0 0.0
        %3385 = vmatpush1.msra.mxu0 0.0
        %3386 = vmatprep.subr.mxu0 0.0
        %3387 = vmatpush1.msra.mxu0 0.0
        %3388 = vmatprep.subr.mxu0 0.0
        %3389 = vmatpush1.msra.mxu0 0.0
        %3390 = vmatprep.subr.mxu0 0.0
        %3391 = vmatpush1.msra.mxu0 0.0
        %3392 = vmatprep.subr.mxu0 0.0
        %3393 = vmatpush1.msra.mxu0 0.0
        %3394 = vmatprep.subr.mxu0 0.0
        %3395 = vmatpush1.msra.mxu0 0.0
        %3396 = vmatprep.subr.mxu0 0.0
        %3397 = vmatpush1.msra.mxu0 0.0
        %3398 = vmatprep.subr.mxu0 0.0
        %3399 = vmatpush1.msra.mxu0 0.0
        %3400 = vmatprep.subr.mxu0 0.0
        %3401 = vmatpush1.msra.mxu0 0.0
        %3402 = vmatprep.subr.mxu0 0.0
        %3403 = vmatpush1.msra.mxu0 0.0
        %3404 = vmatprep.subr.mxu0 0.0
        %3405 = vmatpush1.msra.mxu0 0.0
        %3406 = vmatprep.subr.mxu0 0.0
        %3407 = vmatpush1.msra.mxu0 0.0
        %3408 = vmatprep.subr.mxu0 0.0
        %3409 = vmatpush1.msra.mxu0 0.0
        %3410 = vmatprep.subr.mxu0 0.0
        %3411 = vmatpush1.msra.mxu0 0.0
        %3412 = vmatprep.mubr.f32.mxu0 0.0
        %3413 = vmatmul.mubr.f32.gmra.mrb[0].mxu0 %v2147
        %v3414 = vpop.f32.mrb[0].mxu0
        %v3415 = vadd.f32 0.0, %v3414
        %v3416 = vpop.f32.mrb[0].mxu0
        %v3417 = vadd.f32 0.0, %v3416
        %3418 = vmatprep.mubr.f32.mxu0 0.0
        %3419 = vmatmul.mubr.f32.gmra.mrb[0].mxu0 %v2152
        %v3420 = vpop.f32.mrb[0].mxu0
        %v3421 = vadd.f32 0.0, %v3420
        %v3422 = vpop.f32.mrb[0].mxu0
        %v3423 = vadd.f32 0.0, %v3422
        %3424 = vmatprep.mubr.f32.mxu0 0.0
        %3425 = vmatmul.mubr.f32.gmra.mrb[0].mxu0 %v2157
        %v3426 = vpop.f32.mrb[0].mxu0
        %v3427 = vadd.f32 0.0, %v3426
        %v3428 = vpop.f32.mrb[0].mxu0
        %v3429 = vadd.f32 0.0, %v3428
        %3430 = vmatprep.mubr.f32.mxu0 0.0
        %3431 = vmatmul.mubr.f32.gmra.mrb[0].mxu0 %v2162
        %v3432 = vpop.f32.mrb[0].mxu0
        %v3433 = vadd.f32 0.0, %v3432
        %v3434 = vpop.f32.mrb[0].mxu0
        %v3435 = vadd.f32 0.0, %v3434
        %3436 = vmatprep.mubr.f32.mxu0 0.0
        %3437 = vmatmul.mubr.f32.gmra.mrb[0].mxu0 %v2167
        %v3438 = vpop.f32.mrb[0].mxu0
        %v3439 = vadd.f32 0.0, %v3438
        %v3440 = vpop.f32.mrb[0].mxu0
        %v3441 = vadd.f32 0.0, %v3440
        %3442 = vmatprep.mubr.f32.mxu0 0.0
        %3443 = vmatmul.mubr.f32.gmra.mrb[0].mxu0 %v2172
        %v3444 = vpop.f32.mrb[0].mxu0
        %v3445 = vadd.f32 0.0, %v3444
        %v3446 = vpop.f32.mrb[0].mxu0
        %v3447 = vadd.f32 0.0, %v3446
        %3448 = vmatprep.mubr.f32.mxu0 0.0
        %3449 = vmatmul.mubr.f32.gmra.mrb[0].mxu0 %v2177
        %v3450 = vpop.f32.mrb[0].mxu0
        %v3451 = vadd.f32 0.0, %v3450
        %v3452 = vpop.f32.mrb[0].mxu0
        %v3453 = vadd.f32 0.0, %v3452
        %3454 = vmatprep.mubr.f32.mxu0 0.0
        %3455 = vmatmul.mubr.f32.gmra.mrb[0].mxu0 %v2182
        %v3456 = vpop.f32.mrb[0].mxu0
        %v3457 = vadd.f32 0.0, %v3456
        %v3458 = vpop.f32.mrb[0].mxu0
        %v3459 = vadd.f32 0.0, %v3458
        %3460 = vmatprep.mubr.f32.mxu0 0.0
        %3461 = vmatmul.mubr.f32.gmra.mrb[0].mxu0 %v2187
        %v3462 = vpop.f32.mrb[0].mxu0
        %v3463 = vadd.f32 0.0, %v3462
        %v3464 = vpop.f32.mrb[0].mxu0
        %v3465 = vadd.f32 0.0, %v3464
        %3466 = vmatprep.mubr.f32.mxu0 0.0
        %3467 = vmatmul.mubr.f32.gmra.mrb[0].mxu0 %v2192
        %v3468 = vpop.f32.mrb[0].mxu0
        %v3469 = vadd.f32 0.0, %v3468
        %v3470 = vpop.f32.mrb[0].mxu0
        %v3471 = vadd.f32 0.0, %v3470
        %3472 = vmatprep.mubr.f32.mxu0 0.0
        %3473 = vmatmul.mubr.f32.gmra.mrb[0].mxu0 %v2197
        %v3474 = vpop.f32.mrb[0].mxu0
        %v3475 = vadd.f32 0.0, %v3474
        %v3476 = vpop.f32.mrb[0].mxu0
        %v3477 = vadd.f32 0.0, %v3476
        %3478 = vmatprep.mubr.f32.mxu0 0.0
        %3479 = vmatmul.mubr.f32.gmra.mrb[0].mxu0 %v2202
        %v3480 = vpop.f32.mrb[0].mxu0
        %v3481 = vadd.f32 0.0, %v3480
        %v3482 = vpop.f32.mrb[0].mxu0
        %v3483 = vadd.f32 0.0, %v3482
        %3484 = vmatprep.mubr.f32.mxu0 0.0
        %3485 = vmatmul.mubr.f32.gmra.mrb[0].mxu0 %v2207
        %v3486 = vpop.f32.mrb[0].mxu0
        %v3487 = vadd.f32 0.0, %v3486
        %v3488 = vpop.f32.mrb[0].mxu0
        %v3489 = vadd.f32 0.0, %v3488
        %3490 = vmatprep.mubr.f32.mxu0 0.0
        %3491 = vmatmul.mubr.f32.gmra.mrb[0].mxu0 %v2212
        %v3492 = vpop.f32.mrb[0].mxu0
        %v3493 = vadd.f32 0.0, %v3492
        %v3494 = vpop.f32.mrb[0].mxu0
        %v3495 = vadd.f32 0.0, %v3494
        %3496 = vmatprep.mubr.f32.mxu0 0.0
        %3497 = vmatmul.mubr.f32.gmra.mrb[0].mxu0 %v2217
        %v3498 = vpop.f32.mrb[0].mxu0
        %v3499 = vadd.f32 0.0, %v3498
        %v3500 = vpop.f32.mrb[0].mxu0
        %v3501 = vadd.f32 0.0, %v3500
        %3502 = vmatprep.mubr.f32.mxu0 0.0
        %3503 = vmatmul.mubr.f32.gmra.mrb[0].mxu0 %v2222
        %v3504 = vpop.f32.mrb[0].mxu0
        %v3505 = vadd.f32 0.0, %v3504
        %v3506 = vpop.f32.mrb[0].mxu0
        %v3507 = vadd.f32 0.0, %v3506
        %3508 = vdwg.mxu0
        %v3509 = vadd.f32 %v3222, %v3415
        %v3510 = vadd.f32 %v3224, %v3417
        %v3511 = vadd.f32 %v3228, %v3421
        %v3512 = vadd.f32 %v3230, %v3423
        %v3513 = vadd.f32 %v3234, %v3427
        %v3514 = vadd.f32 %v3236, %v3429
        %v3515 = vadd.f32 %v3240, %v3433
        %v3516 = vadd.f32 %v3242, %v3435
        %v3517 = vadd.f32 %v3246, %v3439
        %v3518 = vadd.f32 %v3248, %v3441
        %v3519 = vadd.f32 %v3252, %v3445
        %v3520 = vadd.f32 %v3254, %v3447
        %v3521 = vadd.f32 %v3258, %v3451
        %v3522 = vadd.f32 %v3260, %v3453
        %v3523 = vadd.f32 %v3264, %v3457
        %v3524 = vadd.f32 %v3266, %v3459
        %v3525 = vadd.f32 %v3270, %v3463
        %v3526 = vadd.f32 %v3272, %v3465
        %v3527 = vadd.f32 %v3276, %v3469
        %v3528 = vadd.f32 %v3278, %v3471
        %v3529 = vadd.f32 %v3282, %v3475
        %v3530 = vadd.f32 %v3284, %v3477
        %v3531 = vadd.f32 %v3288, %v3481
        %v3532 = vadd.f32 %v3290, %v3483
        %v3533 = vadd.f32 %v3294, %v3487
        %v3534 = vadd.f32 %v3296, %v3489
        %v3535 = vadd.f32 %v3300, %v3493
        %v3536 = vadd.f32 %v3302, %v3495
        %v3537 = vadd.f32 %v3306, %v3499
        %v3538 = vadd.f32 %v3308, %v3501
        %v3539 = vadd.f32 %v3312, %v3505
        %v3540 = vadd.f32 %v3314, %v3507
        %v3541 = vld [vmem:[%s14 + $0x9] sm:$0x3]
        %v3543 = vlaneseq
        %v3544 = vshrl.u32 %v3543, 7
        %v3545 = vsub.s32 0, %v3544
        %v3546 = vrot.slane %v3541, %v3545
        %v3547 = vlaneseq
        %v3548 = vshrl.u32 %v3547, 7
        %v3549 = vsub.s32 1, %v3548
        %v3550 = vrot.slane %v3541, %v3549
        %v3553 = vadd.f32 %v3509, %v3546
        %v3554 = vadd.f32 %v3510, %v3550
        %v3555 = vadd.f32 %v3511, %v3546
        %v3556 = vadd.f32 %v3512, %v3550
        %v3557 = vadd.f32 %v3513, %v3546
        %v3558 = vadd.f32 %v3514, %v3550
        %v3559 = vadd.f32 %v3515, %v3546
        %v3560 = vadd.f32 %v3516, %v3550
        %v3561 = vadd.f32 %v3517, %v3546
        %v3562 = vadd.f32 %v3518, %v3550
        %v3563 = vadd.f32 %v3519, %v3546
        %v3564 = vadd.f32 %v3520, %v3550
        %v3565 = vadd.f32 %v3521, %v3546
        %v3566 = vadd.f32 %v3522, %v3550
        %v3567 = vadd.f32 %v3523, %v3546
        %v3568 = vadd.f32 %v3524, %v3550
        %v3569 = vadd.f32 %v3525, %v3546
        %v3570 = vadd.f32 %v3526, %v3550
        %v3571 = vadd.f32 %v3527, %v3546
        %v3572 = vadd.f32 %v3528, %v3550
        %v3573 = vadd.f32 %v3529, %v3546
        %v3574 = vadd.f32 %v3530, %v3550
        %v3575 = vadd.f32 %v3531, %v3546
        %v3576 = vadd.f32 %v3532, %v3550
        %v3577 = vadd.f32 %v3533, %v3546
        %v3578 = vadd.f32 %v3534, %v3550
        %v3579 = vadd.f32 %v3535, %v3546
        %v3580 = vadd.f32 %v3536, %v3550
        %v3581 = vadd.f32 %v3537, %v3546
        %v3582 = vadd.f32 %v3538, %v3550
        %v3583 = vadd.f32 %v3539, %v3546
        %v3584 = vadd.f32 %v3540, %v3550
        %v3585 = vmax.f32 %v3553, 0.0
        %v3586 = vmax.f32 %v3554, 0.0
        %v3587 = vmax.f32 %v3555, 0.0
        %v3588 = vmax.f32 %v3556, 0.0
        %v3589 = vmax.f32 %v3557, 0.0
        %v3590 = vmax.f32 %v3558, 0.0
        %v3591 = vmax.f32 %v3559, 0.0
        %v3592 = vmax.f32 %v3560, 0.0
        %v3593 = vmax.f32 %v3561, 0.0
        %v3594 = vmax.f32 %v3562, 0.0
        %v3595 = vmax.f32 %v3563, 0.0
        %v3596 = vmax.f32 %v3564, 0.0
        %v3597 = vmax.f32 %v3565, 0.0
        %v3598 = vmax.f32 %v3566, 0.0
        %v3599 = vmax.f32 %v3567, 0.0
        %v3600 = vmax.f32 %v3568, 0.0
        %v3601 = vmax.f32 %v3569, 0.0
        %v3602 = vmax.f32 %v3570, 0.0
        %v3603 = vmax.f32 %v3571, 0.0
        %v3604 = vmax.f32 %v3572, 0.0
        %v3605 = vmax.f32 %v3573, 0.0
        %v3606 = vmax.f32 %v3574, 0.0
        %v3607 = vmax.f32 %v3575, 0.0
        %v3608 = vmax.f32 %v3576, 0.0
        %v3609 = vmax.f32 %v3577, 0.0
        %v3610 = vmax.f32 %v3578, 0.0
        %v3611 = vmax.f32 %v3579, 0.0
        %v3612 = vmax.f32 %v3580, 0.0
        %v3613 = vmax.f32 %v3581, 0.0
        %v3614 = vmax.f32 %v3582, 0.0
        %v3615 = vmax.f32 %v3583, 0.0
        %v3616 = vmax.f32 %v3584, 0.0
        %v3617 = vld [vmem:[#allocation23] sm:$0xff]
        %v3618 = vld [vmem:[#allocation23 + $0x8] sm:$0xff]
        %v3619 = vld [vmem:[#allocation23 + $0x10] sm:$0xff]
        %v3620 = vld [vmem:[#allocation23 + $0x18] sm:$0xff]
        %v3621 = vld [vmem:[#allocation23 + $0x20] sm:$0xff]
        %v3622 = vld [vmem:[#allocation23 + $0x28] sm:$0xff]
        %v3623 = vld [vmem:[#allocation23 + $0x30] sm:$0xff]
        %v3624 = vld [vmem:[#allocation23 + $0x38] sm:$0xff]
        %v3625 = vld [vmem:[#allocation23 + $0x40] sm:$0xff]
        %v3626 = vld [vmem:[#allocation23 + $0x48] sm:$0xff]
        %v3627 = vld [vmem:[#allocation23 + $0x50] sm:$0xff]
        %v3628 = vld [vmem:[#allocation23 + $0x58] sm:$0xff]
        %v3629 = vld [vmem:[#allocation23 + $0x60] sm:$0xff]
        %v3630 = vld [vmem:[#allocation23 + $0x68] sm:$0xff]
        %v3631 = vld [vmem:[#allocation23 + $0x70] sm:$0xff]
        %v3632 = vld [vmem:[#allocation23 + $0x78] sm:$0xff]
        %v3633 = vld [vmem:[#allocation23 + $0x80] sm:$0xff]
        %v3634 = vld [vmem:[#allocation23 + $0x88] sm:$0xff]
        %v3635 = vld [vmem:[#allocation23 + $0x90] sm:$0xff]
        %v3636 = vld [vmem:[#allocation23 + $0x98] sm:$0xff]
        %v3637 = vld [vmem:[#allocation23 + $0xa0] sm:$0xff]
        %v3638 = vld [vmem:[#allocation23 + $0xa8] sm:$0xff]
        %v3639 = vld [vmem:[#allocation23 + $0xb0] sm:$0xff]
        %v3640 = vld [vmem:[#allocation23 + $0xb8] sm:$0xff]
        %v3641 = vld [vmem:[#allocation23 + $0xc0] sm:$0xff]
        %v3642 = vld [vmem:[#allocation23 + $0xc8] sm:$0xff]
        %v3643 = vld [vmem:[#allocation23 + $0xd0] sm:$0xff]
        %v3644 = vld [vmem:[#allocation23 + $0xd8] sm:$0xff]
        %v3645 = vld [vmem:[#allocation23 + $0xe0] sm:$0xff]
        %v3646 = vld [vmem:[#allocation23 + $0xe8] sm:$0xff]
        %v3647 = vld [vmem:[#allocation23 + $0xf0] sm:$0xff]
        %v3648 = vld [vmem:[#allocation23 + $0xf8] sm:$0xff]
        %v3649 = vld [vmem:[%s14 + $0xb] sm:$0x1]
        %v3651 = vlaneseq
        %v3652 = vshrl.u32 %v3651, 7
        %v3653 = vsub.s32 0, %v3652
        %v3654 = vrot.slane %v3649, %v3653
        %3656 = vmatprep.subr.mxu0 0.0
        %3657 = vmatpush1.msra.mxu0 %v3617
        %3658 = vmatprep.subr.mxu0 0.0
        %3659 = vmatpush1.msra.mxu0 %v3618
        %3660 = vmatprep.subr.mxu0 0.0
        %3661 = vmatpush1.msra.mxu0 %v3619
        %3662 = vmatprep.subr.mxu0 0.0
        %3663 = vmatpush1.msra.mxu0 %v3620
        %3664 = vmatprep.subr.mxu0 0.0
        %3665 = vmatpush1.msra.mxu0 %v3621
        %3666 = vmatprep.subr.mxu0 0.0
        %3667 = vmatpush1.msra.mxu0 %v3622
        %3668 = vmatprep.subr.mxu0 0.0
        %3669 = vmatpush1.msra.mxu0 %v3623
        %3670 = vmatprep.subr.mxu0 0.0
        %3671 = vmatpush1.msra.mxu0 %v3624
        %3672 = vmatprep.subr.mxu0 0.0
        %3673 = vmatpush1.msra.mxu0 %v3625
        %3674 = vmatprep.subr.mxu0 0.0
        %3675 = vmatpush1.msra.mxu0 %v3626
        %3676 = vmatprep.subr.mxu0 0.0
        %3677 = vmatpush1.msra.mxu0 %v3627
        %3678 = vmatprep.subr.mxu0 0.0
        %3679 = vmatpush1.msra.mxu0 %v3628
        %3680 = vmatprep.subr.mxu0 0.0
        %3681 = vmatpush1.msra.mxu0 %v3629
        %3682 = vmatprep.subr.mxu0 0.0
        %3683 = vmatpush1.msra.mxu0 %v3630
        %3684 = vmatprep.subr.mxu0 0.0
        %3685 = vmatpush1.msra.mxu0 %v3631
        %3686 = vmatprep.subr.mxu0 0.0
        %3687 = vmatpush1.msra.mxu0 %v3632
        %3688 = vmatprep.subr.mxu0 0.0
        %3689 = vmatpush1.msra.mxu0 %v3633
        %3690 = vmatprep.subr.mxu0 0.0
        %3691 = vmatpush1.msra.mxu0 %v3634
        %3692 = vmatprep.subr.mxu0 0.0
        %3693 = vmatpush1.msra.mxu0 %v3635
        %3694 = vmatprep.subr.mxu0 0.0
        %3695 = vmatpush1.msra.mxu0 %v3636
        %3696 = vmatprep.subr.mxu0 0.0
        %3697 = vmatpush1.msra.mxu0 %v3637
        %3698 = vmatprep.subr.mxu0 0.0
        %3699 = vmatpush1.msra.mxu0 %v3638
        %3700 = vmatprep.subr.mxu0 0.0
        %3701 = vmatpush1.msra.mxu0 %v3639
        %3702 = vmatprep.subr.mxu0 0.0
        %3703 = vmatpush1.msra.mxu0 %v3640
        %3704 = vmatprep.subr.mxu0 0.0
        %3705 = vmatpush1.msra.mxu0 %v3641
        %3706 = vmatprep.subr.mxu0 0.0
        %3707 = vmatpush1.msra.mxu0 %v3642
        %3708 = vmatprep.subr.mxu0 0.0
        %3709 = vmatpush1.msra.mxu0 %v3643
        %3710 = vmatprep.subr.mxu0 0.0
        %3711 = vmatpush1.msra.mxu0 %v3644
        %3712 = vmatprep.subr.mxu0 0.0
        %3713 = vmatpush1.msra.mxu0 %v3645
        %3714 = vmatprep.subr.mxu0 0.0
        %3715 = vmatpush1.msra.mxu0 %v3646
        %3716 = vmatprep.subr.mxu0 0.0
        %3717 = vmatpush1.msra.mxu0 %v3647
        %3718 = vmatprep.subr.mxu0 0.0
        %3719 = vmatpush1.msra.mxu0 %v3648
        %3720 = vmatprep.mubr.f32.mxu0 %v3586
        %3721 = vmatmul.mubr.f32.gmra.mrb[0].mxu0 %v3585
        %v3722 = vpop.f32.mrb[0].mxu0
        %v3723 = vadd.f32 %v3654, %v3722
        %v3724 = vpop.f32.mrb[0].mxu0
        %3725 = vmatprep.mubr.f32.mxu0 %v3588
        %3726 = vmatmul.mubr.f32.gmra.mrb[0].mxu0 %v3587
        %v3727 = vpop.f32.mrb[0].mxu0
        %v3728 = vadd.f32 %v3654, %v3727
        %v3729 = vpop.f32.mrb[0].mxu0
        %3730 = vmatprep.mubr.f32.mxu0 %v3590
        %3731 = vmatmul.mubr.f32.gmra.mrb[0].mxu0 %v3589
        %v3732 = vpop.f32.mrb[0].mxu0
        %v3733 = vadd.f32 %v3654, %v3732
        %v3734 = vpop.f32.mrb[0].mxu0
        %3735 = vmatprep.mubr.f32.mxu0 %v3592
        %3736 = vmatmul.mubr.f32.gmra.mrb[0].mxu0 %v3591
        %v3737 = vpop.f32.mrb[0].mxu0
        %v3738 = vadd.f32 %v3654, %v3737
        %v3739 = vpop.f32.mrb[0].mxu0
        %3740 = vmatprep.mubr.f32.mxu0 %v3594
        %3741 = vmatmul.mubr.f32.gmra.mrb[0].mxu0 %v3593
        %v3742 = vpop.f32.mrb[0].mxu0
        %v3743 = vadd.f32 %v3654, %v3742
        %v3744 = vpop.f32.mrb[0].mxu0
        %3745 = vmatprep.mubr.f32.mxu0 %v3596
        %3746 = vmatmul.mubr.f32.gmra.mrb[0].mxu0 %v3595
        %v3747 = vpop.f32.mrb[0].mxu0
        %v3748 = vadd.f32 %v3654, %v3747
        %v3749 = vpop.f32.mrb[0].mxu0
        %3750 = vmatprep.mubr.f32.mxu0 %v3598
        %3751 = vmatmul.mubr.f32.gmra.mrb[0].mxu0 %v3597
        %v3752 = vpop.f32.mrb[0].mxu0
        %v3753 = vadd.f32 %v3654, %v3752
        %v3754 = vpop.f32.mrb[0].mxu0
        %3755 = vmatprep.mubr.f32.mxu0 %v3600
        %3756 = vmatmul.mubr.f32.gmra.mrb[0].mxu0 %v3599
        %v3757 = vpop.f32.mrb[0].mxu0
        %v3758 = vadd.f32 %v3654, %v3757
        %v3759 = vpop.f32.mrb[0].mxu0
        %3760 = vmatprep.mubr.f32.mxu0 %v3602
        %3761 = vmatmul.mubr.f32.gmra.mrb[0].mxu0 %v3601
        %v3762 = vpop.f32.mrb[0].mxu0
        %v3763 = vadd.f32 %v3654, %v3762
        %v3764 = vpop.f32.mrb[0].mxu0
        %3765 = vmatprep.mubr.f32.mxu0 %v3604
        %3766 = vmatmul.mubr.f32.gmra.mrb[0].mxu0 %v3603
        %v3767 = vpop.f32.mrb[0].mxu0
        %v3768 = vadd.f32 %v3654, %v3767
        %v3769 = vpop.f32.mrb[0].mxu0
        %3770 = vmatprep.mubr.f32.mxu0 %v3606
        %3771 = vmatmul.mubr.f32.gmra.mrb[0].mxu0 %v3605
        %v3772 = vpop.f32.mrb[0].mxu0
        %v3773 = vadd.f32 %v3654, %v3772
        %v3774 = vpop.f32.mrb[0].mxu0
        %3775 = vmatprep.mubr.f32.mxu0 %v3608
        %3776 = vmatmul.mubr.f32.gmra.mrb[0].mxu0 %v3607
        %v3777 = vpop.f32.mrb[0].mxu0
        %v3778 = vadd.f32 %v3654, %v3777
        %v3779 = vpop.f32.mrb[0].mxu0
        %3780 = vmatprep.mubr.f32.mxu0 %v3610
        %3781 = vmatmul.mubr.f32.gmra.mrb[0].mxu0 %v3609
        %v3782 = vpop.f32.mrb[0].mxu0
        %v3783 = vadd.f32 %v3654, %v3782
        %v3784 = vpop.f32.mrb[0].mxu0
        %3785 = vmatprep.mubr.f32.mxu0 %v3612
        %3786 = vmatmul.mubr.f32.gmra.mrb[0].mxu0 %v3611
        %v3787 = vpop.f32.mrb[0].mxu0
        %v3788 = vadd.f32 %v3654, %v3787
        %v3789 = vpop.f32.mrb[0].mxu0
        %3790 = vmatprep.mubr.f32.mxu0 %v3614
        %3791 = vmatmul.mubr.f32.gmra.mrb[0].mxu0 %v3613
        %v3792 = vpop.f32.mrb[0].mxu0
        %v3793 = vadd.f32 %v3654, %v3792
        %v3794 = vpop.f32.mrb[0].mxu0
        %3795 = vmatprep.mubr.f32.mxu0 %v3616
        %3796 = vmatmul.mubr.f32.gmra.mrb[0].mxu0 %v3615
        %v3797 = vpop.f32.mrb[0].mxu0
        %v3798 = vadd.f32 %v3654, %v3797
        %v3799 = vpop.f32.mrb[0].mxu0
        %3800 = vdwg.mxu0
        %3802 = vset.pattern.permute.xlu0 0
        %3803 = vperm.xlu0 %3802, %v2899
        %v3804 = vpop.permute.xlu0 %3803
        %3807 = vset.pattern.permute.xlu0 0
        %3808 = vperm.xlu0 %3807, %v2901
        %v3809 = vpop.permute.xlu0 %3808
        %3812 = vset.pattern.permute.xlu0 0
        %3813 = vperm.xlu0 %3812, %v2903
        %v3814 = vpop.permute.xlu0 %3813
        %3817 = vset.pattern.permute.xlu0 0
        %3818 = vperm.xlu0 %3817, %v2905
        %v3819 = vpop.permute.xlu0 %3818
        %3822 = vset.pattern.permute.xlu0 0
        %3823 = vperm.xlu0 %3822, %v2907
        %v3824 = vpop.permute.xlu0 %3823
        %3827 = vset.pattern.permute.xlu0 0
        %3828 = vperm.xlu0 %3827, %v2909
        %v3829 = vpop.permute.xlu0 %3828
        %3832 = vset.pattern.permute.xlu0 0
        %3833 = vperm.xlu0 %3832, %v2911
        %v3834 = vpop.permute.xlu0 %3833
        %3837 = vset.pattern.permute.xlu0 0
        %3838 = vperm.xlu0 %3837, %v2913
        %v3839 = vpop.permute.xlu0 %3838
        %3842 = vset.pattern.permute.xlu0 0
        %3843 = vperm.xlu0 %3842, %v2915
        %v3844 = vpop.permute.xlu0 %3843
        %3847 = vset.pattern.permute.xlu0 0
        %3848 = vperm.xlu0 %3847, %v2917
        %v3849 = vpop.permute.xlu0 %3848
        %3852 = vset.pattern.permute.xlu0 0
        %3853 = vperm.xlu0 %3852, %v2919
        %v3854 = vpop.permute.xlu0 %3853
        %3857 = vset.pattern.permute.xlu0 0
        %3858 = vperm.xlu0 %3857, %v2921
        %v3859 = vpop.permute.xlu0 %3858
        %3862 = vset.pattern.permute.xlu0 0
        %3863 = vperm.xlu0 %3862, %v2923
        %v3864 = vpop.permute.xlu0 %3863
        %3867 = vset.pattern.permute.xlu0 0
        %3868 = vperm.xlu0 %3867, %v2925
        %v3869 = vpop.permute.xlu0 %3868
        %3872 = vset.pattern.permute.xlu0 0
        %3873 = vperm.xlu0 %3872, %v2927
        %v3874 = vpop.permute.xlu0 %3873
        %3877 = vset.pattern.permute.xlu0 0
        %3878 = vperm.xlu0 %3877, %v2929
        %v3879 = vpop.permute.xlu0 %3878
        %v3881 = vmul.f32 %v3804, %v746
        %v3882 = vmul.f32 %v3809, %v747
        %v3883 = vmul.f32 %v3814, %v748
        %v3884 = vmul.f32 %v3819, %v749
        %v3885 = vmul.f32 %v3824, %v750
        %v3886 = vmul.f32 %v3829, %v751
        %v3887 = vmul.f32 %v3834, %v752
        %v3888 = vmul.f32 %v3839, %v753
        %v3889 = vmul.f32 %v3844, %v754
        %v3890 = vmul.f32 %v3849, %v755
        %v3891 = vmul.f32 %v3854, %v756
        %v3892 = vmul.f32 %v3859, %v757
        %v3893 = vmul.f32 %v3864, %v758
        %v3894 = vmul.f32 %v3869, %v759
        %v3895 = vmul.f32 %v3874, %v760
        %v3896 = vmul.f32 %v3879, %v761
        %v3897 = vadd.f32 %v3723, %v3881
        %v3898 = vadd.f32 %v3728, %v3882
        %v3899 = vadd.f32 %v3733, %v3883
        %v3900 = vadd.f32 %v3738, %v3884
        %v3901 = vadd.f32 %v3743, %v3885
        %v3902 = vadd.f32 %v3748, %v3886
        %v3903 = vadd.f32 %v3753, %v3887
        %v3904 = vadd.f32 %v3758, %v3888
        %v3905 = vadd.f32 %v3763, %v3889
        %v3906 = vadd.f32 %v3768, %v3890
        %v3907 = vadd.f32 %v3773, %v3891
        %v3908 = vadd.f32 %v3778, %v3892
        %v3909 = vadd.f32 %v3783, %v3893
        %v3910 = vadd.f32 %v3788, %v3894
        %v3911 = vadd.f32 %v3793, %v3895
        %v3912 = vadd.f32 %v3798, %v3896
        %v3913 = vsub.f32 1.0, %v2899
        %v3914 = vsub.f32 1.0, %v2901
        %v3915 = vsub.f32 1.0, %v2903
        %v3916 = vsub.f32 1.0, %v2905
        %v3917 = vsub.f32 1.0, %v2907
        %v3918 = vsub.f32 1.0, %v2909
        %v3919 = vsub.f32 1.0, %v2911
        %v3920 = vsub.f32 1.0, %v2913
        %v3921 = vsub.f32 1.0, %v2915
        %v3922 = vsub.f32 1.0, %v2917
        %v3923 = vsub.f32 1.0, %v2919
        %v3924 = vsub.f32 1.0, %v2921
        %v3925 = vsub.f32 1.0, %v2923
        %v3926 = vsub.f32 1.0, %v2925
        %v3927 = vsub.f32 1.0, %v2927
        %v3928 = vsub.f32 1.0, %v2929
        %3930 = vset.pattern.permute.xlu0 0
        %3931 = vperm.xlu0 %3930, %v3913
        %v3932 = vpop.permute.xlu0 %3931
        %3935 = vset.pattern.permute.xlu0 0
        %3936 = vperm.xlu0 %3935, %v3914
        %v3937 = vpop.permute.xlu0 %3936
        %3940 = vset.pattern.permute.xlu0 0
        %3941 = vperm.xlu0 %3940, %v3915
        %v3942 = vpop.permute.xlu0 %3941
        %3945 = vset.pattern.permute.xlu0 0
        %3946 = vperm.xlu0 %3945, %v3916
        %v3947 = vpop.permute.xlu0 %3946
        %3950 = vset.pattern.permute.xlu0 0
        %3951 = vperm.xlu0 %3950, %v3917
        %v3952 = vpop.permute.xlu0 %3951
        %3955 = vset.pattern.permute.xlu0 0
        %3956 = vperm.xlu0 %3955, %v3918
        %v3957 = vpop.permute.xlu0 %3956
        %3960 = vset.pattern.permute.xlu0 0
        %3961 = vperm.xlu0 %3960, %v3919
        %v3962 = vpop.permute.xlu0 %3961
        %3965 = vset.pattern.permute.xlu0 0
        %3966 = vperm.xlu0 %3965, %v3920
        %v3967 = vpop.permute.xlu0 %3966
        %3970 = vset.pattern.permute.xlu0 0
        %3971 = vperm.xlu0 %3970, %v3921
        %v3972 = vpop.permute.xlu0 %3971
        %3975 = vset.pattern.permute.xlu0 0
        %3976 = vperm.xlu0 %3975, %v3922
        %v3977 = vpop.permute.xlu0 %3976
        %3980 = vset.pattern.permute.xlu0 0
        %3981 = vperm.xlu0 %3980, %v3923
        %v3982 = vpop.permute.xlu0 %3981
        %3985 = vset.pattern.permute.xlu0 0
        %3986 = vperm.xlu0 %3985, %v3924
        %v3987 = vpop.permute.xlu0 %3986
        %3990 = vset.pattern.permute.xlu0 0
        %3991 = vperm.xlu0 %3990, %v3925
        %v3992 = vpop.permute.xlu0 %3991
        %3995 = vset.pattern.permute.xlu0 0
        %3996 = vperm.xlu0 %3995, %v3926
        %v3997 = vpop.permute.xlu0 %3996
        %4000 = vset.pattern.permute.xlu0 0
        %4001 = vperm.xlu0 %4000, %v3927
        %v4002 = vpop.permute.xlu0 %4001
        %4005 = vset.pattern.permute.xlu0 0
        %4006 = vperm.xlu0 %4005, %v3928
        %v4007 = vpop.permute.xlu0 %4006
        %v4009 = vmul.f32 %v3932, %v730
        %v4010 = vmul.f32 %v3937, %v731
        %v4011 = vmul.f32 %v3942, %v732
        %v4012 = vmul.f32 %v3947, %v733
        %v4013 = vmul.f32 %v3952, %v734
        %v4014 = vmul.f32 %v3957, %v735
        %v4015 = vmul.f32 %v3962, %v736
        %v4016 = vmul.f32 %v3967, %v737
        %v4017 = vmul.f32 %v3972, %v738
        %v4018 = vmul.f32 %v3977, %v739
        %v4019 = vmul.f32 %v3982, %v740
        %v4020 = vmul.f32 %v3987, %v741
        %v4021 = vmul.f32 %v3992, %v742
        %v4022 = vmul.f32 %v3997, %v743
        %v4023 = vmul.f32 %v4002, %v744
        %v4024 = vmul.f32 %v4007, %v745
        %v4025 = vadd.f32 %v3897, %v4009
        %v4026 = vadd.f32 %v3898, %v4010
        %v4027 = vadd.f32 %v3899, %v4011
        %v4028 = vadd.f32 %v3900, %v4012
        %v4029 = vadd.f32 %v3901, %v4013
        %v4030 = vadd.f32 %v3902, %v4014
        %v4031 = vadd.f32 %v3903, %v4015
        %v4032 = vadd.f32 %v3904, %v4016
        %v4033 = vadd.f32 %v3905, %v4017
        %v4034 = vadd.f32 %v3906, %v4018
        %v4035 = vadd.f32 %v3907, %v4019
        %v4036 = vadd.f32 %v3908, %v4020
        %v4037 = vadd.f32 %v3909, %v4021
        %v4038 = vadd.f32 %v3910, %v4022
        %v4039 = vadd.f32 %v3911, %v4023
        %v4040 = vadd.f32 %v3912, %v4024
        %v4041 = vmul.f32 %v4025, %v4025
        %v4042 = vmul.f32 %v4026, %v4026
        %v4043 = vmul.f32 %v4027, %v4027
        %v4044 = vmul.f32 %v4028, %v4028
        %v4045 = vmul.f32 %v4029, %v4029
        %v4046 = vmul.f32 %v4030, %v4030
        %v4047 = vmul.f32 %v4031, %v4031
        %v4048 = vmul.f32 %v4032, %v4032
        %v4049 = vmul.f32 %v4033, %v4033
        %v4050 = vmul.f32 %v4034, %v4034
        %v4051 = vmul.f32 %v4035, %v4035
        %v4052 = vmul.f32 %v4036, %v4036
        %v4053 = vmul.f32 %v4037, %v4037
        %v4054 = vmul.f32 %v4038, %v4038
        %v4055 = vmul.f32 %v4039, %v4039
        %v4056 = vmul.f32 %v4040, %v4040
        %4057 = vadd.xlane.f32.xlu0 %v4041
        %v4058 = vpop.xlane.xlu0 %4057
        %4059 = vadd.xlane.f32.xlu0 %v4042
        %v4060 = vpop.xlane.xlu0 %4059
        %4061 = vadd.xlane.f32.xlu0 %v4043
        %v4062 = vpop.xlane.xlu0 %4061
        %4063 = vadd.xlane.f32.xlu0 %v4044
        %v4064 = vpop.xlane.xlu0 %4063
        %4065 = vadd.xlane.f32.xlu0 %v4045
        %v4066 = vpop.xlane.xlu0 %4065
        %4067 = vadd.xlane.f32.xlu0 %v4046
        %v4068 = vpop.xlane.xlu0 %4067
        %4069 = vadd.xlane.f32.xlu0 %v4047
        %v4070 = vpop.xlane.xlu0 %4069
        %4071 = vadd.xlane.f32.xlu0 %v4048
        %v4072 = vpop.xlane.xlu0 %4071
        %4073 = vadd.xlane.f32.xlu0 %v4049
        %v4074 = vpop.xlane.xlu0 %4073
        %4075 = vadd.xlane.f32.xlu0 %v4050
        %v4076 = vpop.xlane.xlu0 %4075
        %4077 = vadd.xlane.f32.xlu0 %v4051
        %v4078 = vpop.xlane.xlu0 %4077
        %4079 = vadd.xlane.f32.xlu0 %v4052
        %v4080 = vpop.xlane.xlu0 %4079
        %4081 = vadd.xlane.f32.xlu0 %v4053
        %v4082 = vpop.xlane.xlu0 %4081
        %4083 = vadd.xlane.f32.xlu0 %v4054
        %v4084 = vpop.xlane.xlu0 %4083
        %4085 = vadd.xlane.f32.xlu0 %v4055
        %v4086 = vpop.xlane.xlu0 %4085
        %4087 = vadd.xlane.f32.xlu0 %v4056
        %v4088 = vpop.xlane.xlu0 %4087
        %v4089 = vmax.f32 %v4058, 1e-24
        %v4090 = vmax.f32 %v4060, 1e-24
        %v4091 = vmax.f32 %v4062, 1e-24
        %v4092 = vmax.f32 %v4064, 1e-24
        %v4093 = vmax.f32 %v4066, 1e-24
        %v4094 = vmax.f32 %v4068, 1e-24
        %v4095 = vmax.f32 %v4070, 1e-24
        %v4096 = vmax.f32 %v4072, 1e-24
        %v4097 = vmax.f32 %v4074, 1e-24
        %v4098 = vmax.f32 %v4076, 1e-24
        %v4099 = vmax.f32 %v4078, 1e-24
        %v4100 = vmax.f32 %v4080, 1e-24
        %v4101 = vmax.f32 %v4082, 1e-24
        %v4102 = vmax.f32 %v4084, 1e-24
        %v4103 = vmax.f32 %v4086, 1e-24
        %v4104 = vmax.f32 %v4088, 1e-24
        %v4105 = vrsqrt.pop %v4089
        %v4106 = vrsqrt.pop %v4090
        %v4107 = vrsqrt.pop %v4091
        %v4108 = vrsqrt.pop %v4092
        %v4109 = vrsqrt.pop %v4093
        %v4110 = vrsqrt.pop %v4094
        %v4111 = vrsqrt.pop %v4095
        %v4112 = vrsqrt.pop %v4096
        %v4113 = vrsqrt.pop %v4097
        %v4114 = vrsqrt.pop %v4098
        %v4115 = vrsqrt.pop %v4099
        %v4116 = vrsqrt.pop %v4100
        %v4117 = vrsqrt.pop %v4101
        %v4118 = vrsqrt.pop %v4102
        %v4119 = vrsqrt.pop %v4103
        %v4120 = vrsqrt.pop %v4104
        %v4121 = vmul.f32 %v4025, %v4105
        %v4122 = vmul.f32 %v4026, %v4106
        %v4123 = vmul.f32 %v4027, %v4107
        %v4124 = vmul.f32 %v4028, %v4108
        %v4125 = vmul.f32 %v4029, %v4109
        %v4126 = vmul.f32 %v4030, %v4110
        %v4127 = vmul.f32 %v4031, %v4111
        %v4128 = vmul.f32 %v4032, %v4112
        %v4129 = vmul.f32 %v4033, %v4113
        %v4130 = vmul.f32 %v4034, %v4114
        %v4131 = vmul.f32 %v4035, %v4115
        %v4132 = vmul.f32 %v4036, %v4116
        %v4133 = vmul.f32 %v4037, %v4117
        %v4134 = vmul.f32 %v4038, %v4118
        %v4135 = vmul.f32 %v4039, %v4119
        %v4136 = vmul.f32 %v4040, %v4120
        %4137 = vst [vmem:[%s726] sm:$0xff] %v4121
        %4138 = vst [vmem:[%s726 + $0x8] sm:$0xff] %v4122
        %4139 = vst [vmem:[%s726 + $0x10] sm:$0xff] %v4123
        %4140 = vst [vmem:[%s726 + $0x18] sm:$0xff] %v4124
        %4141 = vst [vmem:[%s726 + $0x20] sm:$0xff] %v4125
        %4142 = vst [vmem:[%s726 + $0x28] sm:$0xff] %v4126
        %4143 = vst [vmem:[%s726 + $0x30] sm:$0xff] %v4127
        %4144 = vst [vmem:[%s726 + $0x38] sm:$0xff] %v4128
        %4145 = vst [vmem:[%s726 + $0x40] sm:$0xff] %v4129
        %4146 = vst [vmem:[%s726 + $0x48] sm:$0xff] %v4130
        %4147 = vst [vmem:[%s726 + $0x50] sm:$0xff] %v4131
        %4148 = vst [vmem:[%s726 + $0x58] sm:$0xff] %v4132
        %4149 = vst [vmem:[%s726 + $0x60] sm:$0xff] %v4133
        %4150 = vst [vmem:[%s726 + $0x68] sm:$0xff] %v4134
        %4151 = vst [vmem:[%s726 + $0x70] sm:$0xff] %v4135
        %4152 = vst [vmem:[%s726 + $0x78] sm:$0xff] %v4136
        %s4153 = sand.u32 %s374, 1
        %s4154 = scalar_lea.sflag [#allocation4], %s4153
        %s4155 = sand.u32 %s374, 1
        %s4156 = smul.addr %s4155, 128
        %s4157 = scalar_lea.vmem [#allocation25], %s4156
        // Predicated region
        $region137: #{tpu_custom_call.1} parent=79 // pred_check
          %p4158 = pneg %p384
        $region138: #{tpu_custom_call.1} parent=79 // pred_check_branch
          %4160 = sbr.rel (%p4158) target = $region140
        $region139: #{tpu_custom_call.1} parent=79 // pred_region
          %s4161 = smul.u32 16, %s41
          %s4163 = ssub.s32 2048, 2048
          %4164 = vsyncadd %s4154, %s4163
          %s4165 = smul.addr %s4161, 128
          %s4166 = scalar_lea.hbm %s15, %s4165
          %s4167 = sshll.u32 %s4157, 4
          %s4168 = int_to_ptr.vmem [resolvable:$true] %s4167
          %4173 = dma.vmem_to_hbm [thread:$0]  %s4168, 2048, %s4166, %s4154, 128, 128, 8
        $region140: #{tpu_custom_call.1} parent=79 // pred_fallthru
          _
      $region80: #{tpu_custom_call.1} parent=5 // pred_fallthru
        _
      %p4174 = scmp.le.s32.totalorder 2, %s36
      // Predicated region
      $region141: #{tpu_custom_call.1} parent=5 // pred_check
        %p4175 = pneg %p4174
      $region142: #{tpu_custom_call.1} parent=5 // pred_check_branch
        %4177 = sbr.rel (%p4175) target = $region144
      $region143: #{tpu_custom_call.1} parent=5 // pred_region
        %s4178 = ssub.s32 %s36, 2
        // Predicated region
        $region145: #{tpu_custom_call.1} parent=143 // pred_check
          %p4179 = pneg %p390
        $region146: #{tpu_custom_call.1} parent=143 // pred_check_branch
          %4181 = sbr.rel (%p4179) target = $region148
        $region147: #{tpu_custom_call.1} parent=143 // pred_region
          %s4182 = sand.u32 %s375, 1
          %s4183 = scalar_lea.sflag [#allocation4], %s4182
          %s4184 = sand.u32 %s375, 1
          %s4185 = smul.addr %s4184, 128
          %s4186 = scalar_lea.vmem [#allocation25], %s4185
          %4187 = dma.done %s4183, 2048
        $region148: #{tpu_custom_call.1} parent=143 // pred_fallthru
          _
      $region144: #{tpu_custom_call.1} parent=5 // pred_fallthru
        _
    $region6: #{tpu_custom_call.1} parent=1 // loop_footer
      %s40 = sadd.s32 1, %s36
    $region7: #{tpu_custom_call.1} parent=1 // loop_footer_branch
      %35 = sbr.rel target = $region3
    $region8: #{tpu_custom_call.1} parent=1 // loop_exit
      _
    %4188 = vsyncpa [#allocation3], 1
    %s4189 = scalar_lea.sflag [#allocation3], 1
    %4190 = vsyncpa %s4189, 1
    %4191 = vsyncpa [#allocation6], 1
    %s4192 = scalar_lea.sflag [#allocation6], 1
    %4193 = vsyncpa %s4192, 1
    %4194 = vsyncpa [#allocation9], 1
    %4195 = vsyncpa [#allocation12], 1
    %4196 = vsyncpa [#allocation15], 1
    %4197 = vsyncpa [#allocation18], 1
    %4198 = vsyncpa [#allocation21], 1
    %4199 = vsyncpa [#allocation24], 1
    %4200 = vsyncpa [#allocation4], 1
    %s4201 = scalar_lea.sflag [#allocation4], 1
    %4202 = vsyncpa %s4201, 1

</llo_original>
